<compile_context>
chip_gen: v7x
topology: tpu7x:2x2x1
jax: 0.10.0
libtpu: 0.0.40
codegen_flags: <defaults>
</compile_context>

<pallas_src>
import math
import functools

import jax
import jax.numpy as jnp
from jax.experimental import pallas as pl
from jax.experimental.pallas import tpu as pltpu


# ------------------------------ fused Pallas kernel ------------------------------


def _fused_encoder_kernel(enc0_ref, rest_ref, negmask_ref, npm_ref,
                          wm_ref, wr_ref, rb_ref,
                          w1_ref, b1_ref, w2_ref, b2_ref,
                          o_ref, state_ref, *, n_head, n_layers):
    """Whole forward for a block of Bb batch elements.

    enc0_ref:    (Bb, L, dm)       tanh(embedding)  (initial model half of the state)
    rest_ref:    (Bb, L, d_rest)   [tem_enc * npm | x]  (shared by both sequence halves)
    negmask_ref: (Bb, 2L, 2L)      additive mask bias (0 / -1e9)
    npm_ref:     (Bb, L, 1)        non-pad mask
    wm_ref:      (T, dm, 3*dm)     per-step fused [Wq|Wk|Wv], model-feature rows (q pre-scaled)
    wr_ref:      (d_rest, 3*T*dm)  all steps' [Wq|Wk|Wv] rest-feature rows, flattened
    rb_ref:      (1, 3*T*dm)       all steps' [bq|bk|bv] biases, flattened (bq pre-scaled)
    w1/b1/w2/b2:                   output MLP (Linear -> Swish -> Linear) epilogue
    o_ref:       (Bb, L, d_measure)
    state_ref:   (Bb, 2L, dm) VMEM persistent [enc ; cur] state of the sequential chain
    """
    Bb, L, dm = enc0_ref.shape
    S2 = 2 * L
    T = n_head * n_layers
    d3 = 3 * dm

    # ---------- prologue: everything here is OFF the sequential (head,layer) chain ----------
    npm_b = jnp.broadcast_to(npm_ref[...], (Bb, L, dm))          # hoisted broadcast
    negmask = negmask_ref[...]                                   # (Bb, 2L, 2L)

    # Loop-invariant rest projection for ALL 3*T q/k/v matrices in ONE wide matmul.
    rest = rest_ref[...].reshape(Bb * L, -1)                     # (Bb*L, d_rest)
    r_all = (jnp.dot(rest, wr_ref[...], preferred_element_type=jnp.float32)
             + rb_ref[...]).reshape(Bb, L, T * d3)
    r_all2 = jnp.concatenate([r_all, r_all], axis=1)             # both seq halves share `rest`
    r_steps = [r_all2[:, :, t * d3:(t + 1) * d3] for t in range(T)]   # (Bb, 2L, 3dm) each

    # Persistent [enc ; cur] chain state (no per-step concatenate).
    state_ref[:, :L, :] = enc0_ref[...]

    hidden_acc = None
    for h in range(n_head):
        state_ref[:, L:, :] = jnp.zeros((Bb, L, dm), jnp.float32)    # cur = 0 per head
        cur_new = None
        for l in range(n_layers):
            t = h * n_layers + l
            state2 = state_ref[...]                                  # (Bb, 2L, dm)
            # One fused QKV matmul per step: (Bb*2L, dm) @ (dm, 3dm).
            qkv = jnp.dot(state2.reshape(Bb * S2, dm), wm_ref[t],
                          preferred_element_type=jnp.float32).reshape(Bb, S2, d3)
            qkv = qkv + r_steps[t]
            q = qkv[:, :, 0:dm]                                      # pre-scaled by 1/sqrt(dm)
            k = qkv[:, :, dm:2 * dm]
            v = qkv[:, :, 2 * dm:3 * dm]
            # TODO(synk): at larger d_model / seq length cast q/k/p/v (and the weights) to
            #             bfloat16 with preferred_element_type=f32 for the bf16 MXU, and tile
            #             the key axis flash-style so the (2L, 2L) scores fit v7x VMEM.
            s = jnp.einsum('bqd,bkd->bqk', q, k,
                           preferred_element_type=jnp.float32) + negmask
            m = jnp.max(s, axis=-1, keepdims=True)
            e = jnp.exp(s - m)
            p = e / jnp.sum(e, axis=-1, keepdims=True)               # exact softmax
            out = jnp.einsum('bqk,bkd->bqd', p, v,
                             preferred_element_type=jnp.float32)     # (Bb, 2L, dm)
            cur_new = jnp.tanh(out[:, L:, :] * npm_b) + state2[:, L:, :]
            state_ref[:, :L, :] = out[:, :L, :]
            state_ref[:, L:, :] = cur_new
        # First MLP layer accumulated per head:
        #   concat(cur_heads, -1) @ W1  ==  sum_h  cur_h @ W1[h*dm:(h+1)*dm]
        part = jnp.dot(cur_new.reshape(Bb * L, dm), w1_ref[h * dm:(h + 1) * dm, :],
                       preferred_element_type=jnp.float32)
        hidden_acc = part if hidden_acc is None else hidden_acc + part

    h1 = hidden_acc + b1_ref[...]
    h1 = h1 * jax.nn.sigmoid(h1)                                     # Swish
    out_final = jnp.dot(h1, w2_ref[...], preferred_element_type=jnp.float32) + b2_ref[...]
    o_ref[...] = out_final.reshape(Bb, L, -1)


def _pick_block_b(B, L, target_rows=256):
    """Batch-block size: fill the MXU M-dim (Bb*2L rows, ~128 on v5e / ~256 on v6e/v7x),
    but keep >= 2 grid steps when possible so v7x's two TensorCores both get work."""
    bb = max(1, target_rows // (2 * L))
    bb = min(bb, B)
    if B >= 2:
        bb = min(bb, max(1, B // 2))
    while B % bb:
        bb -= 1
    return bb


def fused_encoder_pallas(enc0, rest, negmask, npm, wm, wr, rb, w1, b1, w2, b2,
                         *, n_head, n_layers, block_b=None):
    B, L, dm = enc0.shape
    d_rest = rest.shape[-1]
    S2 = negmask.shape[1]
    d_meas = w2.shape[1]
    if block_b is None:
        block_b = _pick_block_b(B, L)
    assert B % block_b == 0

    kernel = functools.partial(_fused_encoder_kernel, n_head=n_head, n_layers=n_layers)
    # TODO(synk): at large sizes single-buffer the invariant weight inputs
    #             (pipeline_mode=pl.Buffered(1)), build the mask in-kernel from a (B, L)
    #             key-pad vector + iota, and set vmem_limit_bytes for v7x's 64 MiB VMEM.
    return pl.pallas_call(
        kernel,
        out_shape=jax.ShapeDtypeStruct((B, L, d_meas), jnp.float32),
        grid=(B // block_b,),
        in_specs=[
            pl.BlockSpec((block_b, L, dm), lambda b: (b, 0, 0)),
            pl.BlockSpec((block_b, L, d_rest), lambda b: (b, 0, 0)),
            pl.BlockSpec((block_b, S2, S2), lambda b: (b, 0, 0)),
            pl.BlockSpec((block_b, L, 1), lambda b: (b, 0, 0)),
            pl.BlockSpec(wm.shape, lambda b: (0, 0, 0)),
            pl.BlockSpec(wr.shape, lambda b: (0, 0)),
            pl.BlockSpec(rb.shape, lambda b: (0, 0)),
            pl.BlockSpec(w1.shape, lambda b: (0, 0)),
            pl.BlockSpec(b1.shape, lambda b: (0, 0)),
            pl.BlockSpec(w2.shape, lambda b: (0, 0)),
            pl.BlockSpec(b2.shape, lambda b: (0, 0)),
        ],
        out_specs=pl.BlockSpec((block_b, L, d_meas), lambda b: (b, 0, 0)),
        scratch_shapes=[pltpu.VMEM((block_b, S2, dm), jnp.float32)],
        compiler_params=pltpu.CompilerParams(dimension_semantics=("parallel",)),
    )(enc0, rest, negmask, npm, wm, wr, rb, w1, b1, w2, b2)


# ------------------------------- model definition --------------------------------


class Config:
    d_model = 32
    n_layers = 2
    n_head = 2
    d_time = 8
    d_measure = 1
    num_types = 3
    pad_index = 2
    hidden_num = 64


def temporal_embedding(time, d_time):
    div_term = jnp.exp(
        jnp.arange(0, d_time, 2, dtype=jnp.float32) * (-(math.log(10000.0) / d_time)))
    arg = time[..., None] * div_term[None, None, :]
    pe = jnp.stack([jnp.sin(arg), jnp.cos(arg)], axis=-1)
    return pe.reshape(time.shape[0], time.shape[1], d_time)


def init_params(key, cfg):
    d_in = cfg.d_model + cfg.d_time + cfg.d_measure
    keys = jax.random.split(key, 8)

    emb = 0.1 * jax.random.normal(keys[0], (cfg.num_types, cfg.d_model), jnp.float32)
    emb = emb.at[cfg.pad_index].set(0.0)          # padding_idx row = 0

    heads = []
    k = keys[1]
    for _ in range(cfg.n_head):
        layers = []
        for _ in range(cfg.n_layers):
            k, k1, k2, k3, k4, k5, k6 = jax.random.split(k, 7)
            s = 1.0 / math.sqrt(d_in)
            layers.append(dict(
                wq=s * jax.random.normal(k1, (d_in, cfg.d_model), jnp.float32),
                bq=s * jax.random.normal(k2, (1, cfg.d_model), jnp.float32),
                wk=s * jax.random.normal(k3, (d_in, cfg.d_model), jnp.float32),
                bk=s * jax.random.normal(k4, (1, cfg.d_model), jnp.float32),
                wv=s * jax.random.normal(k5, (d_in, cfg.d_model), jnp.float32),
                bv=s * jax.random.normal(k6, (1, cfg.d_model), jnp.float32),
            ))
        heads.append(layers)

    f_in = cfg.d_model * cfg.n_head
    s1 = 1.0 / math.sqrt(f_in)
    s2 = 1.0 / math.sqrt(cfg.hidden_num)
    return dict(
        emb=emb,
        heads=heads,
        w1=s1 * jax.random.normal(keys[2], (f_in, cfg.hidden_num), jnp.float32),
        b1=s1 * jax.random.normal(keys[3], (1, cfg.hidden_num), jnp.float32),
        w2=s2 * jax.random.normal(keys[4], (cfg.hidden_num, cfg.d_measure), jnp.float32),
        b2=s2 * jax.random.normal(keys[5], (1, cfg.d_measure), jnp.float32),
    )


def create_pad_attn_mask(event_seq, pad_index):
    B, L = event_seq.shape
    pad_mask = (event_seq == pad_index)
    key_pad = jnp.broadcast_to(pad_mask[:, None, :], (B, L, L))
    subseq = jnp.triu(jnp.ones((L, L), dtype=bool), k=0)[None]
    attention_mask = subseq | key_pad
    return ~pad_mask, attention_mask


def prepare_fused_params(params, cfg):
    """Done ONCE at init (hoisted out of the forward path): stack per-(head,layer) q/k/v
    weights, fold the 1/sqrt(d_k) attention scale into q, split rows into the d_model part
    (evolving state, (T, dm, 3dm)) and the flattened [tem|x] part ((d_rest, 3*T*dm))."""
    dm = cfg.d_model
    scale = 1.0 / math.sqrt(dm)
    wm_l, wr_l, rb_l = [], [], []
    for head in params['heads']:
        for w in head:
            wm_l.append(jnp.concatenate(
                [w['wq'][:dm] * scale, w['wk'][:dm], w['wv'][:dm]], axis=1))   # (dm, 3dm)
            wr_l.append(jnp.concatenate(
                [w['wq'][dm:] * scale, w['wk'][dm:], w['wv'][dm:]], axis=1))   # (d_rest, 3dm)
            rb_l.append(jnp.concatenate(
                [w['bq'] * scale, w['bk'], w['bv']], axis=1))                  # (1, 3dm)
    return dict(
        emb=params['emb'],
        wm=jnp.stack(wm_l),                      # (T, dm, 3dm)
        wr=jnp.concatenate(wr_l, axis=1),        # (d_rest, 3*T*dm)
        rb=jnp.concatenate(rb_l, axis=1),        # (1, 3*T*dm)
        w1=params['w1'], b1=params['b1'], w2=params['w2'], b2=params['b2'],
    )


def _build_combined_mask(attention_mask, L):
    layer_mask = jnp.broadcast_to((~jnp.eye(L, dtype=bool))[None], attention_mask.shape)
    _combined_mask = jnp.concatenate([attention_mask, layer_mask], axis=-1)
    contextual_mask = jnp.concatenate(
        [attention_mask, jnp.ones_like(layer_mask)], axis=-1)
    return jnp.concatenate([contextual_mask, _combined_mask], axis=1).astype(jnp.float32)


def xfmrct_forward_pallas(fused, cfg, event_seqs, time_seqs, x_seqs,
                          batch_non_pad_mask, attention_mask):
    B, L = event_seqs.shape
    x_col = x_seqs[..., None]                                        # (B, L, 1)

    tem_enc = temporal_embedding(time_seqs, cfg.d_time)              # (B, L, d_time)
    npm = batch_non_pad_mask[..., None].astype(jnp.float32)
    tem_enc = tem_enc * npm

    enc0 = jnp.tanh(fused['emb'][event_seqs])                        # (B, L, d_model)
    rest = jnp.concatenate([tem_enc, x_col], axis=-1)                # (B, L, d_time+1)

    combined = _build_combined_mask(attention_mask, L)               # (B, 2L, 2L), 0/1
    negmask = jnp.where(combined > 0, jnp.float32(-1e9), jnp.float32(0.0))

    return fused_encoder_pallas(enc0, rest, negmask, npm,
                                fused['wm'], fused['wr'], fused['rb'],
                                fused['w1'], fused['b1'], fused['w2'], fused['b2'],
                                n_head=cfg.n_head, n_layers=cfg.n_layers)


# ------------------------- pure-JAX reference forward -----------------------------

_PREC = jax.lax.Precision.HIGHEST


def attn_ref(x, mask, wq, bq, wk, bk, wv, bv):
    q = jnp.dot(x, wq, precision=_PREC) + bq
    k = jnp.dot(x, wk, precision=_PREC) + bk
    v = jnp.dot(x, wv, precision=_PREC) + bv
    scores = jnp.einsum('bqd,bkd->bqk', q, k, precision=_PREC) / jnp.sqrt(
        jnp.float32(q.shape[-1]))
    scores = jnp.where(mask > 0, jnp.float32(-1e9), scores)
    p = jax.nn.softmax(scores, axis=-1)
    return jnp.einsum('bqk,bkd->bqd', p, v, precision=_PREC)


def mlp_ref(x, w1, b1, w2, b2):
    h = jnp.dot(x, w1, precision=_PREC) + b1
    h = h * jax.nn.sigmoid(h)
    return jnp.dot(h, w2, precision=_PREC) + b2


def xfmrct_forward_ref(params, cfg, event_seqs, time_seqs, x_seqs,
                       batch_non_pad_mask, attention_mask):
    B, L = event_seqs.shape
    x_seqs = x_seqs[..., None]

    tem_enc = temporal_embedding(time_seqs, cfg.d_time)
    npm = batch_non_pad_mask[..., None].astype(jnp.float32)
    tem_enc = tem_enc * npm

    enc_input = jnp.tanh(params['emb'][event_seqs])
    init_cur = jnp.zeros_like(enc_input)
    combined_mask = _build_combined_mask(attention_mask, L)
    enc_input = jnp.concatenate([enc_input, tem_enc, x_seqs], axis=-1)

    cur_layers = []
    for head_i in range(cfg.n_head):
        cur = init_cur
        for layer_i in range(cfg.n_layers):
            layer_ = jnp.concatenate([cur, tem_enc, x_seqs], axis=-1)
            combined_input = jnp.concatenate([enc_input, layer_], axis=1)
            w = params['heads'][head_i][layer_i]
            enc_output = attn_ref(combined_input, combined_mask,
                                  w['wq'], w['bq'], w['wk'], w['bk'], w['wv'], w['bv'])
            _cur = enc_output[:, L:, :] * npm
            cur = jnp.tanh(_cur) + cur
            enc_input = jnp.concatenate([enc_output[:, :L, :], tem_enc, x_seqs], axis=-1)
        cur_layers.append(cur)

    cur = jnp.concatenate(cur_layers, axis=-1)
    flat = cur.reshape(B * L, -1)
    out = mlp_ref(flat, params['w1'], params['b1'], params['w2'], params['b2'])
    return out.reshape(B, L, cfg.d_measure)


# ----------------------------------- main ------------------------------------

if __name__ == "__main__":
    cfg = Config()
    B, L = 4, 8

    key = jax.random.PRNGKey(0)
    k_param, k_time, k_x = jax.random.split(key, 3)
    params = init_params(k_param, cfg)
    fused = prepare_fused_params(params, cfg)      # hoisted: done once, not per forward

    # small deterministic inputs; pad_index=2 tokens at tail
    event_seqs = jnp.array([[0, 1, 0, 1, 0, 1, 2, 2],
                            [1, 0, 1, 0, 1, 2, 2, 2],
                            [0, 0, 1, 1, 0, 0, 1, 2],
                            [1, 1, 0, 1, 2, 2, 2, 2]], dtype=jnp.int32)
    time_seqs = jnp.cumsum(
        jax.random.uniform(k_time, (B, L), jnp.float32, 0.1, 1.0), axis=1)
    x_seqs = jax.random.normal(k_x, (B, L), jnp.float32)

    batch_non_pad_mask, attention_mask = create_pad_attn_mask(event_seqs, cfg.pad_index)

    out_pallas = jax.block_until_ready(
        xfmrct_forward_pallas(fused, cfg, event_seqs, time_seqs, x_seqs,
                              batch_non_pad_mask, attention_mask))
    out_ref = jax.block_until_ready(
        xfmrct_forward_ref(params, cfg, event_seqs, time_seqs, x_seqs,
                           batch_non_pad_mask, attention_mask))

    assert out_pallas.shape == (B, L, cfg.d_measure)
    # Exact softmax (no approx reciprocal) restores tight agreement; remaining slack only
    # covers f32-matmul accumulation-order differences across the 4 chained attention blocks.
    assert jnp.allclose(out_pallas, out_ref, atol=1e-3, rtol=1e-3), (
        "Pallas output mismatch vs pure-JAX reference")

    print("KERNEL_OK")
</pallas_src>

<mosaic_0001>
module attributes {stable_mosaic.version = 11 : i64} {
  func.func @_fused_encoder_kernel(%arg0: i32, %arg1: memref<2x8x32xf32, #tpu.memory_space<vmem>>, %arg2: memref<2x8x9xf32, #tpu.memory_space<vmem>>, %arg3: memref<2x16x16xf32, #tpu.memory_space<vmem>>, %arg4: memref<2x8x1xf32, #tpu.memory_space<vmem>>, %arg5: memref<4x32x96xf32, #tpu.memory_space<vmem>>, %arg6: memref<9x384xf32, #tpu.memory_space<vmem>>, %arg7: memref<1x384xf32, #tpu.memory_space<vmem>>, %arg8: memref<64x64xf32, #tpu.memory_space<vmem>>, %arg9: memref<1x64xf32, #tpu.memory_space<vmem>>, %arg10: memref<64x1xf32, #tpu.memory_space<vmem>>, %arg11: memref<1x1xf32, #tpu.memory_space<vmem>>, %arg12: memref<2x8x1xf32, #tpu.memory_space<vmem>>, %arg13: memref<2x16x32xf32, #tpu.memory_space<vmem>>) attributes {dimension_semantics = [#tpu.dimension_semantics<parallel>], iteration_bounds = array<i64: 2>, scalar_prefetch = 0 : i64, scratch_operands = 1 : i64, tpu.core_type = #tpu.core_type<tc>, window_params = [{transform_indices = @transform_0, window_bounds = array<i64: 2, 8, 32>}, {transform_indices = @transform_1, window_bounds = array<i64: 2, 8, 9>}, {transform_indices = @transform_2, window_bounds = array<i64: 2, 16, 16>}, {transform_indices = @transform_3, window_bounds = array<i64: 2, 8, 1>}, {pipeline_mode = #tpu.pipeline_mode<synchronous>, transform_indices = @transform_4, window_bounds = array<i64: 4, 32, 96>}, {pipeline_mode = #tpu.pipeline_mode<synchronous>, transform_indices = @transform_5, window_bounds = array<i64: 9, 384>}, {pipeline_mode = #tpu.pipeline_mode<synchronous>, transform_indices = @transform_6, window_bounds = array<i64: 1, 384>}, {pipeline_mode = #tpu.pipeline_mode<synchronous>, transform_indices = @transform_7, window_bounds = array<i64: 64, 64>}, {pipeline_mode = #tpu.pipeline_mode<synchronous>, transform_indices = @transform_8, window_bounds = array<i64: 1, 64>}, {pipeline_mode = #tpu.pipeline_mode<synchronous>, transform_indices = @transform_9, window_bounds = array<i64: 64, 1>}, {pipeline_mode = #tpu.pipeline_mode<synchronous>, transform_indices = @transform_10, window_bounds = array<i64: 1, 1>}, {transform_indices = @transform_11, window_bounds = array<i64: 2, 8, 1>}]} {
    %c0 = arith.constant 0 : index
    %c0_0 = arith.constant 0 : index
    %c0_1 = arith.constant 0 : index
    %0 = vector.load %arg4[%c0, %c0_0, %c0_1] : memref<2x8x1xf32, #tpu.memory_space<vmem>>, vector<2x8x1xf32>
    %1 = vector.shape_cast %0 : vector<2x8x1xf32> to vector<2x8x1xf32>
    %2 = vector.broadcast %1 : vector<2x8x1xf32> to vector<2x8x32xf32>
    %c0_2 = arith.constant 0 : index
    %c0_3 = arith.constant 0 : index
    %c0_4 = arith.constant 0 : index
    %3 = vector.load %arg3[%c0_2, %c0_3, %c0_4] : memref<2x16x16xf32, #tpu.memory_space<vmem>>, vector<2x16x16xf32>
    %c0_5 = arith.constant 0 : index
    %c0_6 = arith.constant 0 : index
    %c0_7 = arith.constant 0 : index
    %4 = vector.load %arg2[%c0_5, %c0_6, %c0_7] : memref<2x8x9xf32, #tpu.memory_space<vmem>>, vector<2x8x9xf32>
    %5 = vector.shape_cast %4 : vector<2x8x9xf32> to vector<16x9xf32>
    %c0_8 = arith.constant 0 : index
    %c0_9 = arith.constant 0 : index
    %6 = vector.load %arg6[%c0_8, %c0_9] : memref<9x384xf32, #tpu.memory_space<vmem>>, vector<9x384xf32>
    %cst = arith.constant dense<0.000000e+00> : vector<16x384xf32>
    %7 = tpu.matmul %5, %6, %cst {dimension_numbers = #tpu.dot_dimension_numbers<[1], [0], [0], [1], [0, 0, 1, 1], [], []>} : vector<16x9xf32>, vector<9x384xf32>, vector<16x384xf32> -> vector<16x384xf32>
    %c0_10 = arith.constant 0 : index
    %c0_11 = arith.constant 0 : index
    %8 = vector.load %arg7[%c0_10, %c0_11] : memref<1x384xf32, #tpu.memory_space<vmem>>, vector<1x384xf32>
    %9 = vector.broadcast %8 : vector<1x384xf32> to vector<16x384xf32>
    %10 = arith.addf %7, %9 : vector<16x384xf32>
    %11 = vector.shape_cast %10 : vector<16x384xf32> to vector<2x8x384xf32>
    %12 = tpu.concatenate %11, %11 in 1 : vector<2x8x384xf32>, vector<2x8x384xf32> -> vector<2x16x384xf32>
    %13 = vector.extract_strided_slice %12 {offsets = [0, 0, 0], sizes = [2, 16, 96], strides = [1, 1, 1]} : vector<2x16x384xf32> to vector<2x16x96xf32>
    %14 = vector.extract_strided_slice %12 {offsets = [0, 0, 96], sizes = [2, 16, 96], strides = [1, 1, 1]} : vector<2x16x384xf32> to vector<2x16x96xf32>
    %15 = vector.extract_strided_slice %12 {offsets = [0, 0, 192], sizes = [2, 16, 96], strides = [1, 1, 1]} : vector<2x16x384xf32> to vector<2x16x96xf32>
    %16 = vector.extract_strided_slice %12 {offsets = [0, 0, 288], sizes = [2, 16, 96], strides = [1, 1, 1]} : vector<2x16x384xf32> to vector<2x16x96xf32>
    %c0_12 = arith.constant 0 : index
    %c0_13 = arith.constant 0 : index
    %c0_14 = arith.constant 0 : index
    %17 = vector.load %arg1[%c0_12, %c0_13, %c0_14] : memref<2x8x32xf32, #tpu.memory_space<vmem>>, vector<2x8x32xf32>
    %c0_15 = arith.constant 0 : index
    %c0_16 = arith.constant 0 : index
    %c0_17 = arith.constant 0 : index
    %18 = vector.load %arg13[%c0_15, %c0_16, %c0_17] : memref<2x16x32xf32, #tpu.memory_space<vmem>>, vector<2x8x32xf32>
    tpu.vector_store %arg13[%c0_15, %c0_16, %c0_17], %17 {strides = array<i32>} : memref<2x16x32xf32, #tpu.memory_space<vmem>>, vector<2x8x32xf32>,
    %cst_18 = arith.constant 0.000000e+00 : f32
    %19 = vector.broadcast %cst_18 : f32 to vector<2x8x32xf32>
    %c0_19 = arith.constant 0 : index
    %c8 = arith.constant 8 : index
    %c0_20 = arith.constant 0 : index
    %20 = vector.load %arg13[%c0_19, %c8, %c0_20] : memref<2x16x32xf32, #tpu.memory_space<vmem>>, vector<2x8x32xf32>
    tpu.vector_store %arg13[%c0_19, %c8, %c0_20], %19 {strides = array<i32>} : memref<2x16x32xf32, #tpu.memory_space<vmem>>, vector<2x8x32xf32>,
    %c0_21 = arith.constant 0 : index
    %c0_22 = arith.constant 0 : index
    %c0_23 = arith.constant 0 : index
    %21 = vector.load %arg13[%c0_21, %c0_22, %c0_23] : memref<2x16x32xf32, #tpu.memory_space<vmem>>, vector<2x16x32xf32>
    %22 = vector.shape_cast %21 : vector<2x16x32xf32> to vector<32x32xf32>
    %c0_24 = arith.constant 0 : index
    %c0_25 = arith.constant 0 : index
    %c0_26 = arith.constant 0 : index
    %23 = vector.load %arg5[%c0_24, %c0_25, %c0_26] : memref<4x32x96xf32, #tpu.memory_space<vmem>>, vector<1x32x96xf32>
    %24 = vector.shape_cast %23 : vector<1x32x96xf32> to vector<32x96xf32>
    %cst_27 = arith.constant dense<0.000000e+00> : vector<32x96xf32>
    %25 = tpu.matmul %22, %24, %cst_27 {dimension_numbers = #tpu.dot_dimension_numbers<[1], [0], [0], [1], [0, 0, 1, 1], [], []>} : vector<32x32xf32>, vector<32x96xf32>, vector<32x96xf32> -> vector<32x96xf32>
    %26 = vector.shape_cast %25 : vector<32x96xf32> to vector<2x16x96xf32>
    %27 = arith.addf %26, %13 : vector<2x16x96xf32>
    %28 = vector.extract_strided_slice %27 {offsets = [0, 0, 0], sizes = [2, 16, 32], strides = [1, 1, 1]} : vector<2x16x96xf32> to vector<2x16x32xf32>
    %29 = vector.extract_strided_slice %27 {offsets = [0, 0, 32], sizes = [2, 16, 32], strides = [1, 1, 1]} : vector<2x16x96xf32> to vector<2x16x32xf32>
    %30 = vector.extract_strided_slice %27 {offsets = [0, 0, 64], sizes = [2, 16, 32], strides = [1, 1, 1]} : vector<2x16x96xf32> to vector<2x16x32xf32>
    "tpu.trace_start"() <{level = 10 : i32, message = "bqd,bkd->bqk"}> : () -> ()
    %cst_28 = arith.constant dense<0.000000e+00> : vector<2x16x16xf32>
    %31 = tpu.matmul %28, %29, %cst_28 {dimension_numbers = #tpu.dot_dimension_numbers<[2], [2], [1], [1], [0, 0, 0, 1, 1, 1], [0], [0]>} : vector<2x16x32xf32>, vector<2x16x32xf32>, vector<2x16x16xf32> -> vector<2x16x16xf32>
    "tpu.trace_stop"() : () -> ()
    %32 = arith.addf %31, %3 : vector<2x16x16xf32>
    %cst_29 = arith.constant dense<0xFF800000> : vector<2x16xf32>
    %33 = vector.multi_reduction <maximumf>, %32, %cst_29 [2] : vector<2x16x16xf32> to vector<2x16xf32>
    %34 = vector.shape_cast %33 : vector<2x16xf32> to vector<2x16x1xf32>
    %35 = vector.broadcast %34 : vector<2x16x1xf32> to vector<2x16x16xf32>
    %36 = arith.subf %32, %35 : vector<2x16x16xf32>
    %37 = math.exp %36 : vector<2x16x16xf32>
    %cst_30 = arith.constant dense<0.000000e+00> : vector<2x16xf32>
    %38 = vector.multi_reduction <add>, %37, %cst_30 [2] : vector<2x16x16xf32> to vector<2x16xf32>
    %39 = vector.shape_cast %38 : vector<2x16xf32> to vector<2x16x1xf32>
    %40 = vector.broadcast %39 : vector<2x16x1xf32> to vector<2x16x16xf32>
    %41 = arith.divf %37, %40 : vector<2x16x16xf32>
    "tpu.trace_start"() <{level = 10 : i32, message = "bqk,bkd->bqd"}> : () -> ()
    %cst_31 = arith.constant dense<0.000000e+00> : vector<2x16x32xf32>
    %42 = tpu.matmul %41, %30, %cst_31 {dimension_numbers = #tpu.dot_dimension_numbers<[2], [1], [1], [2], [0, 0, 0, 1, 1, 2], [0], [0]>} : vector<2x16x16xf32>, vector<2x16x32xf32>, vector<2x16x32xf32> -> vector<2x16x32xf32>
    "tpu.trace_stop"() : () -> ()
    %43 = vector.extract_strided_slice %42 {offsets = [0, 8, 0], sizes = [2, 8, 32], strides = [1, 1, 1]} : vector<2x16x32xf32> to vector<2x8x32xf32>
    %44 = arith.mulf %43, %2 : vector<2x8x32xf32>
    %45 = math.tanh %44 : vector<2x8x32xf32>
    %46 = vector.extract_strided_slice %21 {offsets = [0, 8, 0], sizes = [2, 8, 32], strides = [1, 1, 1]} : vector<2x16x32xf32> to vector<2x8x32xf32>
    %47 = arith.addf %45, %46 : vector<2x8x32xf32>
    %48 = vector.extract_strided_slice %42 {offsets = [0, 0, 0], sizes = [2, 8, 32], strides = [1, 1, 1]} : vector<2x16x32xf32> to vector<2x8x32xf32>
    %c0_32 = arith.constant 0 : index
    %c0_33 = arith.constant 0 : index
    %c0_34 = arith.constant 0 : index
    %49 = vector.load %arg13[%c0_32, %c0_33, %c0_34] : memref<2x16x32xf32, #tpu.memory_space<vmem>>, vector<2x8x32xf32>
    tpu.vector_store %arg13[%c0_32, %c0_33, %c0_34], %48 {strides = array<i32>} : memref<2x16x32xf32, #tpu.memory_space<vmem>>, vector<2x8x32xf32>,
    %c0_35 = arith.constant 0 : index
    %c8_36 = arith.constant 8 : index
    %c0_37 = arith.constant 0 : index
    %50 = vector.load %arg13[%c0_35, %c8_36, %c0_37] : memref<2x16x32xf32, #tpu.memory_space<vmem>>, vector<2x8x32xf32>
    tpu.vector_store %arg13[%c0_35, %c8_36, %c0_37], %47 {strides = array<i32>} : memref<2x16x32xf32, #tpu.memory_space<vmem>>, vector<2x8x32xf32>,
    %c0_38 = arith.constant 0 : index
    %c0_39 = arith.constant 0 : index
    %c0_40 = arith.constant 0 : index
    %51 = vector.load %arg13[%c0_38, %c0_39, %c0_40] : memref<2x16x32xf32, #tpu.memory_space<vmem>>, vector<2x16x32xf32>
    %52 = vector.shape_cast %51 : vector<2x16x32xf32> to vector<32x32xf32>
    %c1 = arith.constant 1 : index
    %c0_41 = arith.constant 0 : index
    %c0_42 = arith.constant 0 : index
    %53 = vector.load %arg5[%c1, %c0_41, %c0_42] : memref<4x32x96xf32, #tpu.memory_space<vmem>>, vector<1x32x96xf32>
    %54 = vector.shape_cast %53 : vector<1x32x96xf32> to vector<32x96xf32>
    %cst_43 = arith.constant dense<0.000000e+00> : vector<32x96xf32>
    %55 = tpu.matmul %52, %54, %cst_43 {dimension_numbers = #tpu.dot_dimension_numbers<[1], [0], [0], [1], [0, 0, 1, 1], [], []>} : vector<32x32xf32>, vector<32x96xf32>, vector<32x96xf32> -> vector<32x96xf32>
    %56 = vector.shape_cast %55 : vector<32x96xf32> to vector<2x16x96xf32>
    %57 = arith.addf %56, %14 : vector<2x16x96xf32>
    %58 = vector.extract_strided_slice %57 {offsets = [0, 0, 0], sizes = [2, 16, 32], strides = [1, 1, 1]} : vector<2x16x96xf32> to vector<2x16x32xf32>
    %59 = vector.extract_strided_slice %57 {offsets = [0, 0, 32], sizes = [2, 16, 32], strides = [1, 1, 1]} : vector<2x16x96xf32> to vector<2x16x32xf32>
    %60 = vector.extract_strided_slice %57 {offsets = [0, 0, 64], sizes = [2, 16, 32], strides = [1, 1, 1]} : vector<2x16x96xf32> to vector<2x16x32xf32>
    "tpu.trace_start"() <{level = 10 : i32, message = "bqd,bkd->bqk"}> : () -> ()
    %cst_44 = arith.constant dense<0.000000e+00> : vector<2x16x16xf32>
    %61 = tpu.matmul %58, %59, %cst_44 {dimension_numbers = #tpu.dot_dimension_numbers<[2], [2], [1], [1], [0, 0, 0, 1, 1, 1], [0], [0]>} : vector<2x16x32xf32>, vector<2x16x32xf32>, vector<2x16x16xf32> -> vector<2x16x16xf32>
    "tpu.trace_stop"() : () -> ()
    %62 = arith.addf %61, %3 : vector<2x16x16xf32>
    %cst_45 = arith.constant dense<0xFF800000> : vector<2x16xf32>
    %63 = vector.multi_reduction <maximumf>, %62, %cst_45 [2] : vector<2x16x16xf32> to vector<2x16xf32>
    %64 = vector.shape_cast %63 : vector<2x16xf32> to vector<2x16x1xf32>
    %65 = vector.broadcast %64 : vector<2x16x1xf32> to vector<2x16x16xf32>
    %66 = arith.subf %62, %65 : vector<2x16x16xf32>
    %67 = math.exp %66 : vector<2x16x16xf32>
    %cst_46 = arith.constant dense<0.000000e+00> : vector<2x16xf32>
    %68 = vector.multi_reduction <add>, %67, %cst_46 [2] : vector<2x16x16xf32> to vector<2x16xf32>
    %69 = vector.shape_cast %68 : vector<2x16xf32> to vector<2x16x1xf32>
    %70 = vector.broadcast %69 : vector<2x16x1xf32> to vector<2x16x16xf32>
    %71 = arith.divf %67, %70 : vector<2x16x16xf32>
    "tpu.trace_start"() <{level = 10 : i32, message = "bqk,bkd->bqd"}> : () -> ()
    %cst_47 = arith.constant dense<0.000000e+00> : vector<2x16x32xf32>
    %72 = tpu.matmul %71, %60, %cst_47 {dimension_numbers = #tpu.dot_dimension_numbers<[2], [1], [1], [2], [0, 0, 0, 1, 1, 2], [0], [0]>} : vector<2x16x16xf32>, vector<2x16x32xf32>, vector<2x16x32xf32> -> vector<2x16x32xf32>
    "tpu.trace_stop"() : () -> ()
    %73 = vector.extract_strided_slice %72 {offsets = [0, 8, 0], sizes = [2, 8, 32], strides = [1, 1, 1]} : vector<2x16x32xf32> to vector<2x8x32xf32>
    %74 = arith.mulf %73, %2 : vector<2x8x32xf32>
    %75 = math.tanh %74 : vector<2x8x32xf32>
    %76 = vector.extract_strided_slice %51 {offsets = [0, 8, 0], sizes = [2, 8, 32], strides = [1, 1, 1]} : vector<2x16x32xf32> to vector<2x8x32xf32>
    %77 = arith.addf %75, %76 : vector<2x8x32xf32>
    %78 = vector.extract_strided_slice %72 {offsets = [0, 0, 0], sizes = [2, 8, 32], strides = [1, 1, 1]} : vector<2x16x32xf32> to vector<2x8x32xf32>
    %c0_48 = arith.constant 0 : index
    %c0_49 = arith.constant 0 : index
    %c0_50 = arith.constant 0 : index
    %79 = vector.load %arg13[%c0_48, %c0_49, %c0_50] : memref<2x16x32xf32, #tpu.memory_space<vmem>>, vector<2x8x32xf32>
    tpu.vector_store %arg13[%c0_48, %c0_49, %c0_50], %78 {strides = array<i32>} : memref<2x16x32xf32, #tpu.memory_space<vmem>>, vector<2x8x32xf32>,
    %c0_51 = arith.constant 0 : index
    %c8_52 = arith.constant 8 : index
    %c0_53 = arith.constant 0 : index
    %80 = vector.load %arg13[%c0_51, %c8_52, %c0_53] : memref<2x16x32xf32, #tpu.memory_space<vmem>>, vector<2x8x32xf32>
    tpu.vector_store %arg13[%c0_51, %c8_52, %c0_53], %77 {strides = array<i32>} : memref<2x16x32xf32, #tpu.memory_space<vmem>>, vector<2x8x32xf32>,
    %81 = vector.shape_cast %77 : vector<2x8x32xf32> to vector<16x32xf32>
    %c0_54 = arith.constant 0 : index
    %c0_55 = arith.constant 0 : index
    %82 = vector.load %arg8[%c0_54, %c0_55] : memref<64x64xf32, #tpu.memory_space<vmem>>, vector<32x64xf32>
    %cst_56 = arith.constant dense<0.000000e+00> : vector<16x64xf32>
    %83 = tpu.matmul %81, %82, %cst_56 {dimension_numbers = #tpu.dot_dimension_numbers<[1], [0], [0], [1], [0, 0, 1, 1], [], []>} : vector<16x32xf32>, vector<32x64xf32>, vector<16x64xf32> -> vector<16x64xf32>
    %cst_57 = arith.constant 0.000000e+00 : f32
    %84 = vector.broadcast %cst_57 : f32 to vector<2x8x32xf32>
    %c0_58 = arith.constant 0 : index
    %c8_59 = arith.constant 8 : index
    %c0_60 = arith.constant 0 : index
    %85 = vector.load %arg13[%c0_58, %c8_59, %c0_60] : memref<2x16x32xf32, #tpu.memory_space<vmem>>, vector<2x8x32xf32>
    tpu.vector_store %arg13[%c0_58, %c8_59, %c0_60], %84 {strides = array<i32>} : memref<2x16x32xf32, #tpu.memory_space<vmem>>, vector<2x8x32xf32>,
    %c0_61 = arith.constant 0 : index
    %c0_62 = arith.constant 0 : index
    %c0_63 = arith.constant 0 : index
    %86 = vector.load %arg13[%c0_61, %c0_62, %c0_63] : memref<2x16x32xf32, #tpu.memory_space<vmem>>, vector<2x16x32xf32>
    %87 = vector.shape_cast %86 : vector<2x16x32xf32> to vector<32x32xf32>
    %c2 = arith.constant 2 : index
    %c0_64 = arith.constant 0 : index
    %c0_65 = arith.constant 0 : index
    %88 = vector.load %arg5[%c2, %c0_64, %c0_65] : memref<4x32x96xf32, #tpu.memory_space<vmem>>, vector<1x32x96xf32>
    %89 = vector.shape_cast %88 : vector<1x32x96xf32> to vector<32x96xf32>
    %cst_66 = arith.constant dense<0.000000e+00> : vector<32x96xf32>
    %90 = tpu.matmul %87, %89, %cst_66 {dimension_numbers = #tpu.dot_dimension_numbers<[1], [0], [0], [1], [0, 0, 1, 1], [], []>} : vector<32x32xf32>, vector<32x96xf32>, vector<32x96xf32> -> vector<32x96xf32>
    %91 = vector.shape_cast %90 : vector<32x96xf32> to vector<2x16x96xf32>
    %92 = arith.addf %91, %15 : vector<2x16x96xf32>
    %93 = vector.extract_strided_slice %92 {offsets = [0, 0, 0], sizes = [2, 16, 32], strides = [1, 1, 1]} : vector<2x16x96xf32> to vector<2x16x32xf32>
    %94 = vector.extract_strided_slice %92 {offsets = [0, 0, 32], sizes = [2, 16, 32], strides = [1, 1, 1]} : vector<2x16x96xf32> to vector<2x16x32xf32>
    %95 = vector.extract_strided_slice %92 {offsets = [0, 0, 64], sizes = [2, 16, 32], strides = [1, 1, 1]} : vector<2x16x96xf32> to vector<2x16x32xf32>
    "tpu.trace_start"() <{level = 10 : i32, message = "bqd,bkd->bqk"}> : () -> ()
    %cst_67 = arith.constant dense<0.000000e+00> : vector<2x16x16xf32>
    %96 = tpu.matmul %93, %94, %cst_67 {dimension_numbers = #tpu.dot_dimension_numbers<[2], [2], [1], [1], [0, 0, 0, 1, 1, 1], [0], [0]>} : vector<2x16x32xf32>, vector<2x16x32xf32>, vector<2x16x16xf32> -> vector<2x16x16xf32>
    "tpu.trace_stop"() : () -> ()
    %97 = arith.addf %96, %3 : vector<2x16x16xf32>
    %cst_68 = arith.constant dense<0xFF800000> : vector<2x16xf32>
    %98 = vector.multi_reduction <maximumf>, %97, %cst_68 [2] : vector<2x16x16xf32> to vector<2x16xf32>
    %99 = vector.shape_cast %98 : vector<2x16xf32> to vector<2x16x1xf32>
    %100 = vector.broadcast %99 : vector<2x16x1xf32> to vector<2x16x16xf32>
    %101 = arith.subf %97, %100 : vector<2x16x16xf32>
    %102 = math.exp %101 : vector<2x16x16xf32>
    %cst_69 = arith.constant dense<0.000000e+00> : vector<2x16xf32>
    %103 = vector.multi_reduction <add>, %102, %cst_69 [2] : vector<2x16x16xf32> to vector<2x16xf32>
    %104 = vector.shape_cast %103 : vector<2x16xf32> to vector<2x16x1xf32>
    %105 = vector.broadcast %104 : vector<2x16x1xf32> to vector<2x16x16xf32>
    %106 = arith.divf %102, %105 : vector<2x16x16xf32>
    "tpu.trace_start"() <{level = 10 : i32, message = "bqk,bkd->bqd"}> : () -> ()
    %cst_70 = arith.constant dense<0.000000e+00> : vector<2x16x32xf32>
    %107 = tpu.matmul %106, %95, %cst_70 {dimension_numbers = #tpu.dot_dimension_numbers<[2], [1], [1], [2], [0, 0, 0, 1, 1, 2], [0], [0]>} : vector<2x16x16xf32>, vector<2x16x32xf32>, vector<2x16x32xf32> -> vector<2x16x32xf32>
    "tpu.trace_stop"() : () -> ()
    %108 = vector.extract_strided_slice %107 {offsets = [0, 8, 0], sizes = [2, 8, 32], strides = [1, 1, 1]} : vector<2x16x32xf32> to vector<2x8x32xf32>
    %109 = arith.mulf %108, %2 : vector<2x8x32xf32>
    %110 = math.tanh %109 : vector<2x8x32xf32>
    %111 = vector.extract_strided_slice %86 {offsets = [0, 8, 0], sizes = [2, 8, 32], strides = [1, 1, 1]} : vector<2x16x32xf32> to vector<2x8x32xf32>
    %112 = arith.addf %110, %111 : vector<2x8x32xf32>
    %113 = vector.extract_strided_slice %107 {offsets = [0, 0, 0], sizes = [2, 8, 32], strides = [1, 1, 1]} : vector<2x16x32xf32> to vector<2x8x32xf32>
    %c0_71 = arith.constant 0 : index
    %c0_72 = arith.constant 0 : index
    %c0_73 = arith.constant 0 : index
    %114 = vector.load %arg13[%c0_71, %c0_72, %c0_73] : memref<2x16x32xf32, #tpu.memory_space<vmem>>, vector<2x8x32xf32>
    tpu.vector_store %arg13[%c0_71, %c0_72, %c0_73], %113 {strides = array<i32>} : memref<2x16x32xf32, #tpu.memory_space<vmem>>, vector<2x8x32xf32>,
    %c0_74 = arith.constant 0 : index
    %c8_75 = arith.constant 8 : index
    %c0_76 = arith.constant 0 : index
    %115 = vector.load %arg13[%c0_74, %c8_75, %c0_76] : memref<2x16x32xf32, #tpu.memory_space<vmem>>, vector<2x8x32xf32>
    tpu.vector_store %arg13[%c0_74, %c8_75, %c0_76], %112 {strides = array<i32>} : memref<2x16x32xf32, #tpu.memory_space<vmem>>, vector<2x8x32xf32>,
    %c0_77 = arith.constant 0 : index
    %c0_78 = arith.constant 0 : index
    %c0_79 = arith.constant 0 : index
    %116 = vector.load %arg13[%c0_77, %c0_78, %c0_79] : memref<2x16x32xf32, #tpu.memory_space<vmem>>, vector<2x16x32xf32>
    %117 = vector.shape_cast %116 : vector<2x16x32xf32> to vector<32x32xf32>
    %c3 = arith.constant 3 : index
    %c0_80 = arith.constant 0 : index
    %c0_81 = arith.constant 0 : index
    %118 = vector.load %arg5[%c3, %c0_80, %c0_81] : memref<4x32x96xf32, #tpu.memory_space<vmem>>, vector<1x32x96xf32>
    %119 = vector.shape_cast %118 : vector<1x32x96xf32> to vector<32x96xf32>
    %cst_82 = arith.constant dense<0.000000e+00> : vector<32x96xf32>
    %120 = tpu.matmul %117, %119, %cst_82 {dimension_numbers = #tpu.dot_dimension_numbers<[1], [0], [0], [1], [0, 0, 1, 1], [], []>} : vector<32x32xf32>, vector<32x96xf32>, vector<32x96xf32> -> vector<32x96xf32>
    %121 = vector.shape_cast %120 : vector<32x96xf32> to vector<2x16x96xf32>
    %122 = arith.addf %121, %16 : vector<2x16x96xf32>
    %123 = vector.extract_strided_slice %122 {offsets = [0, 0, 0], sizes = [2, 16, 32], strides = [1, 1, 1]} : vector<2x16x96xf32> to vector<2x16x32xf32>
    %124 = vector.extract_strided_slice %122 {offsets = [0, 0, 32], sizes = [2, 16, 32], strides = [1, 1, 1]} : vector<2x16x96xf32> to vector<2x16x32xf32>
    %125 = vector.extract_strided_slice %122 {offsets = [0, 0, 64], sizes = [2, 16, 32], strides = [1, 1, 1]} : vector<2x16x96xf32> to vector<2x16x32xf32>
    "tpu.trace_start"() <{level = 10 : i32, message = "bqd,bkd->bqk"}> : () -> ()
    %cst_83 = arith.constant dense<0.000000e+00> : vector<2x16x16xf32>
    %126 = tpu.matmul %123, %124, %cst_83 {dimension_numbers = #tpu.dot_dimension_numbers<[2], [2], [1], [1], [0, 0, 0, 1, 1, 1], [0], [0]>} : vector<2x16x32xf32>, vector<2x16x32xf32>, vector<2x16x16xf32> -> vector<2x16x16xf32>
    "tpu.trace_stop"() : () -> ()
    %127 = arith.addf %126, %3 : vector<2x16x16xf32>
    %cst_84 = arith.constant dense<0xFF800000> : vector<2x16xf32>
    %128 = vector.multi_reduction <maximumf>, %127, %cst_84 [2] : vector<2x16x16xf32> to vector<2x16xf32>
    %129 = vector.shape_cast %128 : vector<2x16xf32> to vector<2x16x1xf32>
    %130 = vector.broadcast %129 : vector<2x16x1xf32> to vector<2x16x16xf32>
    %131 = arith.subf %127, %130 : vector<2x16x16xf32>
    %132 = math.exp %131 : vector<2x16x16xf32>
    %cst_85 = arith.constant dense<0.000000e+00> : vector<2x16xf32>
    %133 = vector.multi_reduction <add>, %132, %cst_85 [2] : vector<2x16x16xf32> to vector<2x16xf32>
    %134 = vector.shape_cast %133 : vector<2x16xf32> to vector<2x16x1xf32>
    %135 = vector.broadcast %134 : vector<2x16x1xf32> to vector<2x16x16xf32>
    %136 = arith.divf %132, %135 : vector<2x16x16xf32>
    "tpu.trace_start"() <{level = 10 : i32, message = "bqk,bkd->bqd"}> : () -> ()
    %cst_86 = arith.constant dense<0.000000e+00> : vector<2x16x32xf32>
    %137 = tpu.matmul %136, %125, %cst_86 {dimension_numbers = #tpu.dot_dimension_numbers<[2], [1], [1], [2], [0, 0, 0, 1, 1, 2], [0], [0]>} : vector<2x16x16xf32>, vector<2x16x32xf32>, vector<2x16x32xf32> -> vector<2x16x32xf32>
    "tpu.trace_stop"() : () -> ()
    %138 = vector.extract_strided_slice %137 {offsets = [0, 8, 0], sizes = [2, 8, 32], strides = [1, 1, 1]} : vector<2x16x32xf32> to vector<2x8x32xf32>
    %139 = arith.mulf %138, %2 : vector<2x8x32xf32>
    %140 = math.tanh %139 : vector<2x8x32xf32>
    %141 = vector.extract_strided_slice %116 {offsets = [0, 8, 0], sizes = [2, 8, 32], strides = [1, 1, 1]} : vector<2x16x32xf32> to vector<2x8x32xf32>
    %142 = arith.addf %140, %141 : vector<2x8x32xf32>
    %143 = vector.extract_strided_slice %137 {offsets = [0, 0, 0], sizes = [2, 8, 32], strides = [1, 1, 1]} : vector<2x16x32xf32> to vector<2x8x32xf32>
    %c0_87 = arith.constant 0 : index
    %c0_88 = arith.constant 0 : index
    %c0_89 = arith.constant 0 : index
    %144 = vector.load %arg13[%c0_87, %c0_88, %c0_89] : memref<2x16x32xf32, #tpu.memory_space<vmem>>, vector<2x8x32xf32>
    tpu.vector_store %arg13[%c0_87, %c0_88, %c0_89], %143 {strides = array<i32>} : memref<2x16x32xf32, #tpu.memory_space<vmem>>, vector<2x8x32xf32>,
    %c0_90 = arith.constant 0 : index
    %c8_91 = arith.constant 8 : index
    %c0_92 = arith.constant 0 : index
    %145 = vector.load %arg13[%c0_90, %c8_91, %c0_92] : memref<2x16x32xf32, #tpu.memory_space<vmem>>, vector<2x8x32xf32>
    tpu.vector_store %arg13[%c0_90, %c8_91, %c0_92], %142 {strides = array<i32>} : memref<2x16x32xf32, #tpu.memory_space<vmem>>, vector<2x8x32xf32>,
    %146 = vector.shape_cast %142 : vector<2x8x32xf32> to vector<16x32xf32>
    %c32 = arith.constant 32 : index
    %c0_93 = arith.constant 0 : index
    %147 = vector.load %arg8[%c32, %c0_93] : memref<64x64xf32, #tpu.memory_space<vmem>>, vector<32x64xf32>
    %cst_94 = arith.constant dense<0.000000e+00> : vector<16x64xf32>
    %148 = tpu.matmul %146, %147, %cst_94 {dimension_numbers = #tpu.dot_dimension_numbers<[1], [0], [0], [1], [0, 0, 1, 1], [], []>} : vector<16x32xf32>, vector<32x64xf32>, vector<16x64xf32> -> vector<16x64xf32>
    %149 = arith.addf %83, %148 : vector<16x64xf32>
    %c0_95 = arith.constant 0 : index
    %c0_96 = arith.constant 0 : index
    %150 = vector.load %arg9[%c0_95, %c0_96] : memref<1x64xf32, #tpu.memory_space<vmem>>, vector<1x64xf32>
    %151 = vector.broadcast %150 : vector<1x64xf32> to vector<16x64xf32>
    %152 = arith.addf %149, %151 : vector<16x64xf32>
    %153 = arith.negf %152 : vector<16x64xf32>
    %154 = math.exp %153 : vector<16x64xf32>
    %cst_97 = arith.constant 1.000000e+00 : f32
    %155 = vector.broadcast %cst_97 : f32 to vector<16x64xf32>
    %156 = arith.addf %155, %154 : vector<16x64xf32>
    %157 = arith.divf %155, %156 : vector<16x64xf32>
    %158 = arith.mulf %152, %157 : vector<16x64xf32>
    %c0_98 = arith.constant 0 : index
    %c0_99 = arith.constant 0 : index
    %159 = vector.load %arg10[%c0_98, %c0_99] : memref<64x1xf32, #tpu.memory_space<vmem>>, vector<64x1xf32>
    %cst_100 = arith.constant dense<0.000000e+00> : vector<16x1xf32>
    %160 = tpu.matmul %158, %159, %cst_100 {dimension_numbers = #tpu.dot_dimension_numbers<[1], [0], [0], [1], [0, 0, 1, 1], [], []>} : vector<16x64xf32>, vector<64x1xf32>, vector<16x1xf32> -> vector<16x1xf32>
    %c0_101 = arith.constant 0 : index
    %c0_102 = arith.constant 0 : index
    %161 = vector.load %arg11[%c0_101, %c0_102] : memref<1x1xf32, #tpu.memory_space<vmem>>, vector<1x1xf32>
    %162 = vector.broadcast %161 : vector<1x1xf32> to vector<16x1xf32>
    %163 = arith.addf %160, %162 : vector<16x1xf32>
    %164 = vector.shape_cast %163 : vector<16x1xf32> to vector<2x8x1xf32>
    %c0_103 = arith.constant 0 : index
    %c0_104 = arith.constant 0 : index
    %c0_105 = arith.constant 0 : index
    %165 = vector.load %arg12[%c0_103, %c0_104, %c0_105] : memref<2x8x1xf32, #tpu.memory_space<vmem>>, vector<2x8x1xf32>
    tpu.vector_store %arg12[%c0_103, %c0_104, %c0_105], %164 {strides = array<i32>} : memref<2x8x1xf32, #tpu.memory_space<vmem>>, vector<2x8x1xf32>,
    return
  }
  func.func @transform_0(%arg0: i32) -> (i32, i32, i32) {
    %c0_i32 = arith.constant 0 : i32
    %c0_i32_0 = arith.constant 0 : i32
    %c0_i32_1 = arith.constant 0 : i32
    return %arg0, %c0_i32, %c0_i32_0 : i32, i32, i32
  }
  func.func @transform_1(%arg0: i32) -> (i32, i32, i32) {
    %c0_i32 = arith.constant 0 : i32
    %c0_i32_0 = arith.constant 0 : i32
    %c0_i32_1 = arith.constant 0 : i32
    return %arg0, %c0_i32, %c0_i32_0 : i32, i32, i32
  }
  func.func @transform_2(%arg0: i32) -> (i32, i32, i32) {
    %c0_i32 = arith.constant 0 : i32
    %c0_i32_0 = arith.constant 0 : i32
    %c0_i32_1 = arith.constant 0 : i32
    return %arg0, %c0_i32, %c0_i32_0 : i32, i32, i32
  }
  func.func @transform_3(%arg0: i32) -> (i32, i32, i32) {
    %c0_i32 = arith.constant 0 : i32
    %c0_i32_0 = arith.constant 0 : i32
    %c0_i32_1 = arith.constant 0 : i32
    return %arg0, %c0_i32, %c0_i32_0 : i32, i32, i32
  }
  func.func @transform_4(%arg0: i32) -> (i32, i32, i32) {
    %c0_i32 = arith.constant 0 : i32
    %c0_i32_0 = arith.constant 0 : i32
    %c0_i32_1 = arith.constant 0 : i32
    %c0_i32_2 = arith.constant 0 : i32
    return %c0_i32, %c0_i32_0, %c0_i32_1 : i32, i32, i32
  }
  func.func @transform_5(%arg0: i32) -> (i32, i32) {
    %c0_i32 = arith.constant 0 : i32
    %c0_i32_0 = arith.constant 0 : i32
    %c0_i32_1 = arith.constant 0 : i32
    return %c0_i32, %c0_i32_0 : i32, i32
  }
  func.func @transform_6(%arg0: i32) -> (i32, i32) {
    %c0_i32 = arith.constant 0 : i32
    %c0_i32_0 = arith.constant 0 : i32
    %c0_i32_1 = arith.constant 0 : i32
    return %c0_i32, %c0_i32_0 : i32, i32
  }
  func.func @transform_7(%arg0: i32) -> (i32, i32) {
    %c0_i32 = arith.constant 0 : i32
    %c0_i32_0 = arith.constant 0 : i32
    %c0_i32_1 = arith.constant 0 : i32
    return %c0_i32, %c0_i32_0 : i32, i32
  }
  func.func @transform_8(%arg0: i32) -> (i32, i32) {
    %c0_i32 = arith.constant 0 : i32
    %c0_i32_0 = arith.constant 0 : i32
    %c0_i32_1 = arith.constant 0 : i32
    return %c0_i32, %c0_i32_0 : i32, i32
  }
  func.func @transform_9(%arg0: i32) -> (i32, i32) {
    %c0_i32 = arith.constant 0 : i32
    %c0_i32_0 = arith.constant 0 : i32
    %c0_i32_1 = arith.constant 0 : i32
    return %c0_i32, %c0_i32_0 : i32, i32
  }
  func.func @transform_10(%arg0: i32) -> (i32, i32) {
    %c0_i32 = arith.constant 0 : i32
    %c0_i32_0 = arith.constant 0 : i32
    %c0_i32_1 = arith.constant 0 : i32
    return %c0_i32, %c0_i32_0 : i32, i32
  }
  func.func @transform_11(%arg0: i32) -> (i32, i32, i32) {
    %c0_i32 = arith.constant 0 : i32
    %c0_i32_0 = arith.constant 0 : i32
    %c0_i32_1 = arith.constant 0 : i32
    return %arg0, %c0_i32, %c0_i32_0 : i32, i32, i32
  }
}

</mosaic_0001>

<llo_original>
// kernel: tpu_custom_call.1
$region0: #{tpu_custom_call.1}
  #allocation0 [shape = 'u32[]', space=smem, size = 0x4, offset = 0x4, fixed_abs, tag = 'smem constant byte address 0x4 - core index']
  #allocation1 [shape = 'u32[144,128]{1,0:T(1,128)}', space=vmem, size = 0x12000, scoped, tag = 'internal scratch']
  #allocation2 [shape = 'f32[2,16,32]{2,1,0:T(8,128)}', space=vmem, size = 0x4000, scoped, tag = 'scratch operand']
  #allocation3 [shape = 'f32[1,1]{1,0:T(1,128)S(1)}', space=vmem, size = 0x200, scoped, tag = 'scoped memory for tpu_custom_call.1']
  %s0 = inlined_call_operand.hbm [shape: f32[4,8,32], index: 0, kind: input, shape index: {}]
  %s1 = inlined_call_operand.hbm [shape: f32[4,8,9], index: 1, kind: input, shape index: {}]
  %s2 = inlined_call_operand.vmem [shape: f32[4,16,16], index: 2, kind: input, shape index: {}]
  %s3 = inlined_call_operand.vmem [shape: f32[4,8,1], index: 3, kind: input, shape index: {}]
  %s4 = inlined_call_operand.hbm [shape: f32[4,32,96], index: 4, kind: input, shape index: {}]
  %s5 = inlined_call_operand.hbm [shape: f32[9,384], index: 5, kind: input, shape index: {}]
  %s6 = inlined_call_operand.vmem [shape: f32[1,384], index: 6, kind: input, shape index: {}]
  %s7 = inlined_call_operand.vmem [shape: f32[64,64], index: 7, kind: input, shape index: {}]
  %s8 = inlined_call_operand.vmem [shape: f32[1,64], index: 8, kind: input, shape index: {}]
  %s9 = inlined_call_operand.vmem [shape: f32[64,1], index: 9, kind: input, shape index: {}]
  %s10 = inlined_call_operand.<no memory space> [shape: f32[1,1], index: 10, kind: input, shape index: {}]
  %s11 = inlined_call_operand.vmem [shape: f32[4,8,1], index: 11, kind: output, shape index: {}]
  %s12 = sld [smem:[#allocation0]]
  $region93: #{tpu_custom_call.1} parent=0
    _
  %s14 = ssub.s32 1, %s12
  %s15 = scalar_select 0, %s14, %s12
  %v16 = vstv %s10
  %17 = vst [vmem:[#allocation3] sm:$0x1] %v16
  $region1: #{tpu_custom_call.1} parent=0
    #allocation4 [shape = 'u8[16384]{0}', space=vmem, size = 0x4000, scoped, tag = 'input window, operand 0']
    #allocation5 [shape = 's32[2]{0}', space=sflag, size = 0x8, scoped, tag = 'scoped memory for tpu_custom_call.1']
    #allocation6 [shape = 'u8[16384]{0}', space=vmem, size = 0x4000, scoped, tag = 'input window, operand 1']
    #allocation7 [shape = 's32[2]{0}', space=sflag, size = 0x8, scoped, tag = 'scoped memory for tpu_custom_call.1']
    #allocation8 [shape = 'u8[65536]{0}', space=vmem, size = 0x10000, scoped, tag = 'input window, operand 4, single buffered']
    #allocation9 [shape = 'u8[24576]{0}', space=vmem, size = 0x6000, scoped, tag = 'input window, operand 5, single buffered']
    #allocation10 [shape = 's32[1]{0}', space=sflag, size = 0x4, scoped, tag = 'scoped memory for tpu_custom_call.1']
    %18 = vsyncpa [#allocation5], 0
    %s19 = scalar_lea.sflag [#allocation5], 1
    %20 = vsyncpa %s19, 0
    %21 = vsyncpa [#allocation7], 0
    %s22 = scalar_lea.sflag [#allocation7], 1
    %23 = vsyncpa %s22, 0
    %24 = vsyncpa [#allocation10], 0
    loop: start=0, step=1, limit=4
    $region2: #{tpu_custom_call.1} parent=1 // loop_pre_header
      _
    $region3: #{tpu_custom_call.1} parent=1 // loop_header
      %s26 = sphi 0, %s30
      %p27 = scmp.ge.s32.totalorder %s26, 4
      %s36 = sphi 0, %s38
      %s39 = sphi 0, %s36
      %s40 = sphi 0, %s39
      %s56 = sphi 0, %s40
      %s62 = sphi 0, %s64
      %s65 = sphi 0, %s62
      %s66 = sphi 0, %s65
      %s82 = sphi 0, %s66
      %s88 = sphi 0, %s90
      %s91 = sphi 0, %s88
      %s92 = sphi 0, %s91
      %s108 = sphi 0, %s92
      %s114 = sphi 0, %s116
      %s117 = sphi 0, %s114
      %s118 = sphi 0, %s117
      %s134 = sphi 0, %s118
      %s138 = sphi 0, %s138
      %s140 = sphi 0, %s138
      %s141 = sphi 0, %s140
      %s155 = sphi 0, %s141
      %s159 = sphi 0, %s159
      %s161 = sphi 0, %s159
      %s162 = sphi 0, %s161
      %s176 = sphi 0, %s162
      %s180 = sphi 0, %s180
      %s182 = sphi 0, %s180
      %s183 = sphi 0, %s182
      %s197 = sphi 0, %s183
      %s201 = sphi 0, %s201
      %s203 = sphi 0, %s201
      %s204 = sphi 0, %s203
      %s218 = sphi 0, %s204
      %s222 = sphi 0, %s222
      %s224 = sphi 0, %s222
      %s225 = sphi 0, %s224
      %s239 = sphi 0, %s225
      %s243 = sphi 0, %s243
      %s245 = sphi 0, %s243
      %s246 = sphi 0, %s245
      %s260 = sphi 0, %s246
      %s264 = sphi 0, %s264
      %s266 = sphi 0, %s264
      %s267 = sphi 0, %s266
      %s281 = sphi 0, %s267
      %s287 = sphi 0, %s289
      %s290 = sphi 0, %s287
      %s291 = sphi 0, %s290
      %s307 = sphi 0, %s291
    $region4: #{tpu_custom_call.1} parent=1 // loop_header_branch
      %29 = sbr.rel (%p27) target = $region8
    $region5: #{tpu_custom_call.1} parent=1 // loop_body
      %s31 = ssub.s32 %s26, 1
      %s32 = ssub.s32 %s26, 2
      %s33 = sadd.s32 %s26, 1
      %s34 = ssub.s32 %s26, %s33
      %p35 = scmp.eq.s32.totalorder %s34, 0
      %s37 = sadd.s32 %s36, 1
      %s38 = scalar_select %p35, %s36, %s37
      %p41 = pneg %p35
      %p42 = scmp.eq.s32.totalorder %s26, 1
      %p43 = por %p41, %p42
      %p44 = scmp.ne.s32.totalorder %s36, %s39
      %p45 = scmp.eq.s32.totalorder %s26, 0
      %p46 = por %p44, %p45
      %p47 = scmp.ne.s32.totalorder %s36, %s39
      %p48 = scmp.eq.s32.totalorder %s31, 1
      %p49 = por %p47, %p48
      %p50 = scmp.ne.s32.totalorder %s39, %s40
      %p51 = scmp.eq.s32.totalorder %s31, 0
      %p52 = por %p50, %p51
      %p53 = scmp.ne.s32.totalorder %s39, %s40
      %p54 = scmp.eq.s32.totalorder %s32, 1
      %p55 = por %p53, %p54
      %p57 = scmp.ne.s32.totalorder %s40, %s56
      %p58 = scmp.eq.s32.totalorder %s32, 0
      %p59 = por %p57, %p58
      %s60 = ssub.s32 %s26, %s33
      %p61 = scmp.eq.s32.totalorder %s60, 0
      %s63 = sadd.s32 %s62, 1
      %s64 = scalar_select %p61, %s62, %s63
      %p67 = pneg %p61
      %p68 = scmp.eq.s32.totalorder %s26, 1
      %p69 = por %p67, %p68
      %p70 = scmp.ne.s32.totalorder %s62, %s65
      %p71 = scmp.eq.s32.totalorder %s26, 0
      %p72 = por %p70, %p71
      %p73 = scmp.ne.s32.totalorder %s62, %s65
      %p74 = scmp.eq.s32.totalorder %s31, 1
      %p75 = por %p73, %p74
      %p76 = scmp.ne.s32.totalorder %s65, %s66
      %p77 = scmp.eq.s32.totalorder %s31, 0
      %p78 = por %p76, %p77
      %p79 = scmp.ne.s32.totalorder %s65, %s66
      %p80 = scmp.eq.s32.totalorder %s32, 1
      %p81 = por %p79, %p80
      %p83 = scmp.ne.s32.totalorder %s66, %s82
      %p84 = scmp.eq.s32.totalorder %s32, 0
      %p85 = por %p83, %p84
      %s86 = ssub.s32 %s26, %s33
      %p87 = scmp.eq.s32.totalorder %s86, 0
      %s89 = sadd.s32 %s88, 1
      %s90 = scalar_select %p87, %s88, %s89
      %p93 = pneg %p87
      %p94 = scmp.eq.s32.totalorder %s26, 1
      %p95 = por %p93, %p94
      %p96 = scmp.ne.s32.totalorder %s88, %s91
      %p97 = scmp.eq.s32.totalorder %s26, 0
      %p98 = por %p96, %p97
      %p99 = scmp.ne.s32.totalorder %s88, %s91
      %p100 = scmp.eq.s32.totalorder %s31, 1
      %p101 = por %p99, %p100
      %p102 = scmp.ne.s32.totalorder %s91, %s92
      %p103 = scmp.eq.s32.totalorder %s31, 0
      %p104 = por %p102, %p103
      %p105 = scmp.ne.s32.totalorder %s91, %s92
      %p106 = scmp.eq.s32.totalorder %s32, 1
      %p107 = por %p105, %p106
      %p109 = scmp.ne.s32.totalorder %s92, %s108
      %p110 = scmp.eq.s32.totalorder %s32, 0
      %p111 = por %p109, %p110
      %s112 = ssub.s32 %s26, %s33
      %p113 = scmp.eq.s32.totalorder %s112, 0
      %s115 = sadd.s32 %s114, 1
      %s116 = scalar_select %p113, %s114, %s115
      %p119 = pneg %p113
      %p120 = scmp.eq.s32.totalorder %s26, 1
      %p121 = por %p119, %p120
      %p122 = scmp.ne.s32.totalorder %s114, %s117
      %p123 = scmp.eq.s32.totalorder %s26, 0
      %p124 = por %p122, %p123
      %p125 = scmp.ne.s32.totalorder %s114, %s117
      %p126 = scmp.eq.s32.totalorder %s31, 1
      %p127 = por %p125, %p126
      %p128 = scmp.ne.s32.totalorder %s117, %s118
      %p129 = scmp.eq.s32.totalorder %s31, 0
      %p130 = por %p128, %p129
      %p131 = scmp.ne.s32.totalorder %s117, %s118
      %p132 = scmp.eq.s32.totalorder %s32, 1
      %p133 = por %p131, %p132
      %p135 = scmp.ne.s32.totalorder %s118, %s134
      %p136 = scmp.eq.s32.totalorder %s32, 0
      %p137 = por %p135, %p136
      %s139 = sadd.s32 %s138, 1
      %p142 = scmp.eq.s32.totalorder %s26, 1
      %p143 = scmp.ne.s32.totalorder %s138, %s140
      %p144 = scmp.eq.s32.totalorder %s26, 0
      %p145 = por %p143, %p144
      %p146 = scmp.ne.s32.totalorder %s138, %s140
      %p147 = scmp.eq.s32.totalorder %s31, 1
      %p148 = por %p146, %p147
      %p149 = scmp.ne.s32.totalorder %s140, %s141
      %p150 = scmp.eq.s32.totalorder %s31, 0
      %p151 = por %p149, %p150
      %p152 = scmp.ne.s32.totalorder %s140, %s141
      %p153 = scmp.eq.s32.totalorder %s32, 1
      %p154 = por %p152, %p153
      %p156 = scmp.ne.s32.totalorder %s141, %s155
      %p157 = scmp.eq.s32.totalorder %s32, 0
      %p158 = por %p156, %p157
      %s160 = sadd.s32 %s159, 1
      %p163 = scmp.eq.s32.totalorder %s26, 1
      %p164 = scmp.ne.s32.totalorder %s159, %s161
      %p165 = scmp.eq.s32.totalorder %s26, 0
      %p166 = por %p164, %p165
      %p167 = scmp.ne.s32.totalorder %s159, %s161
      %p168 = scmp.eq.s32.totalorder %s31, 1
      %p169 = por %p167, %p168
      %p170 = scmp.ne.s32.totalorder %s161, %s162
      %p171 = scmp.eq.s32.totalorder %s31, 0
      %p172 = por %p170, %p171
      %p173 = scmp.ne.s32.totalorder %s161, %s162
      %p174 = scmp.eq.s32.totalorder %s32, 1
      %p175 = por %p173, %p174
      %p177 = scmp.ne.s32.totalorder %s162, %s176
      %p178 = scmp.eq.s32.totalorder %s32, 0
      %p179 = por %p177, %p178
      %s181 = sadd.s32 %s180, 1
      %p184 = scmp.eq.s32.totalorder %s26, 1
      %p185 = scmp.ne.s32.totalorder %s180, %s182
      %p186 = scmp.eq.s32.totalorder %s26, 0
      %p187 = por %p185, %p186
      %p188 = scmp.ne.s32.totalorder %s180, %s182
      %p189 = scmp.eq.s32.totalorder %s31, 1
      %p190 = por %p188, %p189
      %p191 = scmp.ne.s32.totalorder %s182, %s183
      %p192 = scmp.eq.s32.totalorder %s31, 0
      %p193 = por %p191, %p192
      %p194 = scmp.ne.s32.totalorder %s182, %s183
      %p195 = scmp.eq.s32.totalorder %s32, 1
      %p196 = por %p194, %p195
      %p198 = scmp.ne.s32.totalorder %s183, %s197
      %p199 = scmp.eq.s32.totalorder %s32, 0
      %p200 = por %p198, %p199
      %s202 = sadd.s32 %s201, 1
      %p205 = scmp.eq.s32.totalorder %s26, 1
      %p206 = scmp.ne.s32.totalorder %s201, %s203
      %p207 = scmp.eq.s32.totalorder %s26, 0
      %p208 = por %p206, %p207
      %p209 = scmp.ne.s32.totalorder %s201, %s203
      %p210 = scmp.eq.s32.totalorder %s31, 1
      %p211 = por %p209, %p210
      %p212 = scmp.ne.s32.totalorder %s203, %s204
      %p213 = scmp.eq.s32.totalorder %s31, 0
      %p214 = por %p212, %p213
      %p215 = scmp.ne.s32.totalorder %s203, %s204
      %p216 = scmp.eq.s32.totalorder %s32, 1
      %p217 = por %p215, %p216
      %p219 = scmp.ne.s32.totalorder %s204, %s218
      %p220 = scmp.eq.s32.totalorder %s32, 0
      %p221 = por %p219, %p220
      %s223 = sadd.s32 %s222, 1
      %p226 = scmp.eq.s32.totalorder %s26, 1
      %p227 = scmp.ne.s32.totalorder %s222, %s224
      %p228 = scmp.eq.s32.totalorder %s26, 0
      %p229 = por %p227, %p228
      %p230 = scmp.ne.s32.totalorder %s222, %s224
      %p231 = scmp.eq.s32.totalorder %s31, 1
      %p232 = por %p230, %p231
      %p233 = scmp.ne.s32.totalorder %s224, %s225
      %p234 = scmp.eq.s32.totalorder %s31, 0
      %p235 = por %p233, %p234
      %p236 = scmp.ne.s32.totalorder %s224, %s225
      %p237 = scmp.eq.s32.totalorder %s32, 1
      %p238 = por %p236, %p237
      %p240 = scmp.ne.s32.totalorder %s225, %s239
      %p241 = scmp.eq.s32.totalorder %s32, 0
      %p242 = por %p240, %p241
      %s244 = sadd.s32 %s243, 1
      %p247 = scmp.eq.s32.totalorder %s26, 1
      %p248 = scmp.ne.s32.totalorder %s243, %s245
      %p249 = scmp.eq.s32.totalorder %s26, 0
      %p250 = por %p248, %p249
      %p251 = scmp.ne.s32.totalorder %s243, %s245
      %p252 = scmp.eq.s32.totalorder %s31, 1
      %p253 = por %p251, %p252
      %p254 = scmp.ne.s32.totalorder %s245, %s246
      %p255 = scmp.eq.s32.totalorder %s31, 0
      %p256 = por %p254, %p255
      %p257 = scmp.ne.s32.totalorder %s245, %s246
      %p258 = scmp.eq.s32.totalorder %s32, 1
      %p259 = por %p257, %p258
      %p261 = scmp.ne.s32.totalorder %s246, %s260
      %p262 = scmp.eq.s32.totalorder %s32, 0
      %p263 = por %p261, %p262
      %s265 = sadd.s32 %s264, 1
      %p268 = scmp.eq.s32.totalorder %s26, 1
      %p269 = scmp.ne.s32.totalorder %s264, %s266
      %p270 = scmp.eq.s32.totalorder %s26, 0
      %p271 = por %p269, %p270
      %p272 = scmp.ne.s32.totalorder %s264, %s266
      %p273 = scmp.eq.s32.totalorder %s31, 1
      %p274 = por %p272, %p273
      %p275 = scmp.ne.s32.totalorder %s266, %s267
      %p276 = scmp.eq.s32.totalorder %s31, 0
      %p277 = por %p275, %p276
      %p278 = scmp.ne.s32.totalorder %s266, %s267
      %p279 = scmp.eq.s32.totalorder %s32, 1
      %p280 = por %p278, %p279
      %p282 = scmp.ne.s32.totalorder %s267, %s281
      %p283 = scmp.eq.s32.totalorder %s32, 0
      %p284 = por %p282, %p283
      %s285 = ssub.s32 %s26, %s33
      %p286 = scmp.eq.s32.totalorder %s285, 0
      %s288 = sadd.s32 %s287, 1
      %s289 = scalar_select %p286, %s287, %s288
      %p292 = pneg %p286
      %p293 = scmp.eq.s32.totalorder %s26, 1
      %p294 = por %p292, %p293
      %p295 = scmp.ne.s32.totalorder %s287, %s290
      %p296 = scmp.eq.s32.totalorder %s26, 0
      %p297 = por %p295, %p296
      %p298 = scmp.ne.s32.totalorder %s287, %s290
      %p299 = scmp.eq.s32.totalorder %s31, 1
      %p300 = por %p298, %p299
      %p301 = scmp.ne.s32.totalorder %s290, %s291
      %p302 = scmp.eq.s32.totalorder %s31, 0
      %p303 = por %p301, %p302
      %p304 = scmp.ne.s32.totalorder %s290, %s291
      %p305 = scmp.eq.s32.totalorder %s32, 1
      %p306 = por %p304, %p305
      %p308 = scmp.ne.s32.totalorder %s291, %s307
      %p309 = scmp.eq.s32.totalorder %s32, 0
      %p310 = por %p308, %p309
      %p311 = scmp.le.s32.totalorder 1, %s26
      %p312 = scmp.lt.s32.totalorder %s26, 3
      %p313 = pnand %p311, %p312
      %p314 = pneg %p313
      // Predicated region
      $region9: #{tpu_custom_call.1} parent=5 // pred_check
        _
      $region10: #{tpu_custom_call.1} parent=5 // pred_check_branch
        %316 = sbr.rel (%p313) target = $region12
      $region11: #{tpu_custom_call.1} parent=5 // pred_region
        %s317 = ssub.s32 %s26, 1
        // Predicated region
        $region13: #{tpu_custom_call.1} parent=11 // pred_check
          %p318 = pneg %p151
        $region14: #{tpu_custom_call.1} parent=11 // pred_check_branch
          %320 = sbr.rel (%p318) target = $region16
        $region15: #{tpu_custom_call.1} parent=11 // pred_region
          %s322 = ssub.s32 2048, 2048
          %323 = vsyncadd [#allocation7], %s322
          %s324 = sshll.u32 [#allocation8], 4
          %s325 = int_to_ptr.vmem [resolvable:$true] %s324
          %330 = dma.hbm_to_vmem [thread:$0]  %s4, 2048, %s325, [#allocation7], 128, 128, 8
        $region16: #{tpu_custom_call.1} parent=11 // pred_fallthru
          _
        // Predicated region
        $region17: #{tpu_custom_call.1} parent=11 // pred_check
          %p331 = pneg %p172
        $region18: #{tpu_custom_call.1} parent=11 // pred_check_branch
          %333 = sbr.rel (%p331) target = $region20
        $region19: #{tpu_custom_call.1} parent=11 // pred_region
          %s335 = ssub.s32 768, 768
          %336 = vsyncadd [#allocation10], %s335
          %s337 = sshll.u32 [#allocation9], 4
          %s338 = int_to_ptr.vmem [resolvable:$true] %s337
          %343 = dma.hbm_to_vmem [thread:$0]  %s5, 768, %s338, [#allocation10], 384, 384, 24
        $region20: #{tpu_custom_call.1} parent=11 // pred_fallthru
          _
        // Predicated region
        $region21: #{tpu_custom_call.1} parent=11 // pred_check
          %p344 = pneg %p193
        $region22: #{tpu_custom_call.1} parent=11 // pred_check_branch
          %346 = sbr.rel (%p344) target = $region24
        $region23: #{tpu_custom_call.1} parent=11 // pred_region
          _
        $region24: #{tpu_custom_call.1} parent=11 // pred_fallthru
          _
        // Predicated region
        $region25: #{tpu_custom_call.1} parent=11 // pred_check
          %p347 = pneg %p214
        $region26: #{tpu_custom_call.1} parent=11 // pred_check_branch
          %349 = sbr.rel (%p347) target = $region28
        $region27: #{tpu_custom_call.1} parent=11 // pred_region
          _
        $region28: #{tpu_custom_call.1} parent=11 // pred_fallthru
          _
        // Predicated region
        $region29: #{tpu_custom_call.1} parent=11 // pred_check
          %p350 = pneg %p235
        $region30: #{tpu_custom_call.1} parent=11 // pred_check_branch
          %352 = sbr.rel (%p350) target = $region32
        $region31: #{tpu_custom_call.1} parent=11 // pred_region
          _
        $region32: #{tpu_custom_call.1} parent=11 // pred_fallthru
          _
        // Predicated region
        $region33: #{tpu_custom_call.1} parent=11 // pred_check
          %p353 = pneg %p256
        $region34: #{tpu_custom_call.1} parent=11 // pred_check_branch
          %355 = sbr.rel (%p353) target = $region36
        $region35: #{tpu_custom_call.1} parent=11 // pred_region
          _
        $region36: #{tpu_custom_call.1} parent=11 // pred_fallthru
          _
        // Predicated region
        $region37: #{tpu_custom_call.1} parent=11 // pred_check
          %p356 = pneg %p277
        $region38: #{tpu_custom_call.1} parent=11 // pred_check_branch
          %358 = sbr.rel (%p356) target = $region40
        $region39: #{tpu_custom_call.1} parent=11 // pred_region
          _
        $region40: #{tpu_custom_call.1} parent=11 // pred_fallthru
          _
      $region12: #{tpu_custom_call.1} parent=5 // pred_fallthru
        _
      %p359 = scmp.lt.s32.totalorder %s26, 2
      // Predicated region
      $region41: #{tpu_custom_call.1} parent=5 // pred_check
        %p360 = pneg %p359
      $region42: #{tpu_custom_call.1} parent=5 // pred_check_branch
        %362 = sbr.rel (%p360) target = $region44
      $region43: #{tpu_custom_call.1} parent=5 // pred_region
        // Predicated region
        $region45: #{tpu_custom_call.1} parent=43 // pred_check
          %p363 = pneg %p46
        $region46: #{tpu_custom_call.1} parent=43 // pred_check_branch
          %365 = sbr.rel (%p363) target = $region48
        $region47: #{tpu_custom_call.1} parent=43 // pred_region
          %s366 = sand.u32 %s36, 1
          %s367 = scalar_lea.sflag [#allocation5], %s366
          %s368 = sand.u32 %s36, 1
          %s369 = smul.addr %s368, 16
          %s370 = scalar_lea.vmem [#allocation4], %s369
          %s371 = smul.u32 2, %s26
          %s373 = ssub.s32 256, 256
          %374 = vsyncadd %s367, %s373
          %s375 = smul.addr %s371, 128
          %s376 = scalar_lea.hbm %s0, %s375
          %s377 = sshll.u32 %s370, 4
          %s378 = int_to_ptr.vmem [resolvable:$true] %s377
          %383 = dma.hbm_to_vmem [thread:$0]  %s376, 256, %s378, %s367, 128, 128, 8
        $region48: #{tpu_custom_call.1} parent=43 // pred_fallthru
          _
        // Predicated region
        $region49: #{tpu_custom_call.1} parent=43 // pred_check
          %p384 = pneg %p72
        $region50: #{tpu_custom_call.1} parent=43 // pred_check_branch
          %386 = sbr.rel (%p384) target = $region52
        $region51: #{tpu_custom_call.1} parent=43 // pred_region
          %s387 = sand.u32 %s26, 1
          %s388 = scalar_lea.sflag [#allocation7], %s387
          %s389 = sand.u32 %s62, 1
          %s390 = smul.addr %s389, 16
          %s391 = scalar_lea.vmem [#allocation6], %s390
          %s392 = smul.u32 2, %s26
          %s394 = ssub.s32 256, 256
          %395 = vsyncadd %s388, %s394
          %s396 = smul.addr %s392, 128
          %s397 = scalar_lea.hbm %s1, %s396
          %s398 = sshll.u32 %s391, 4
          %s399 = int_to_ptr.vmem [resolvable:$true] %s398
          %404 = dma.hbm_to_vmem [thread:$0]  %s397, 256, %s399, %s388, 128, 128, 8
        $region52: #{tpu_custom_call.1} parent=43 // pred_fallthru
          _
        // Predicated region
        $region53: #{tpu_custom_call.1} parent=43 // pred_check
          %p405 = pneg %p98
        $region54: #{tpu_custom_call.1} parent=43 // pred_check_branch
          %407 = sbr.rel (%p405) target = $region56
        $region55: #{tpu_custom_call.1} parent=43 // pred_region
          %s408 = smul.u32 2, %s26
          %p409 = scmp.lt.s32.totalorder %s408, 3
          %s410 = scalar_select %p409, %s408, 3
          %s411 = smul.addr %s410, 2
          %s412 = smul.addr %s411, 8
          %s413 = scalar_lea.vmem %s2, %s412
          %s414 = smul.u32 2, %s26
        $region56: #{tpu_custom_call.1} parent=43 // pred_fallthru
          _
        // Predicated region
        $region57: #{tpu_custom_call.1} parent=43 // pred_check
          %p415 = pneg %p124
        $region58: #{tpu_custom_call.1} parent=43 // pred_check_branch
          %417 = sbr.rel (%p415) target = $region60
        $region59: #{tpu_custom_call.1} parent=43 // pred_region
          %s418 = smul.u32 2, %s26
          %p419 = scmp.lt.s32.totalorder %s418, 3
          %s420 = scalar_select %p419, %s418, 3
          %s421 = smul.addr %s420, 8
          %s422 = scalar_lea.vmem %s3, %s421
          %s423 = smul.u32 2, %s26
        $region60: #{tpu_custom_call.1} parent=43 // pred_fallthru
          _
      $region44: #{tpu_custom_call.1} parent=5 // pred_fallthru
        _
      %p424 = scmp.le.s32.totalorder 1, %s26
      %p425 = scmp.lt.s32.totalorder %s26, 3
      %p426 = pnand %p424, %p425
      %p427 = pneg %p426
      // Predicated region
      $region61: #{tpu_custom_call.1} parent=5 // pred_check
        _
      $region62: #{tpu_custom_call.1} parent=5 // pred_check_branch
        %429 = sbr.rel (%p426) target = $region64
      $region63: #{tpu_custom_call.1} parent=5 // pred_region
        %s430 = ssub.s32 %s26, 1
        %s431 = sand.u32 %s39, 1
        %s432 = scalar_lea.sflag [#allocation5], %s431
        %s433 = sand.u32 %s39, 1
        %s434 = smul.addr %s433, 16
        %s435 = scalar_lea.vmem [#allocation4], %s434
        // Predicated region
        $region65: #{tpu_custom_call.1} parent=63 // pred_check
          %p436 = pneg %p52
        $region66: #{tpu_custom_call.1} parent=63 // pred_check_branch
          %438 = sbr.rel (%p436) target = $region68
        $region67: #{tpu_custom_call.1} parent=63 // pred_region
          %439 = dma.done %s432, 256
        $region68: #{tpu_custom_call.1} parent=63 // pred_fallthru
          _
        %s440 = sand.u32 %s31, 1
        %s441 = scalar_lea.sflag [#allocation7], %s440
        %s442 = sand.u32 %s65, 1
        %s443 = smul.addr %s442, 16
        %s444 = scalar_lea.vmem [#allocation6], %s443
        // Predicated region
        $region69: #{tpu_custom_call.1} parent=63 // pred_check
          %p445 = pneg %p78
        $region70: #{tpu_custom_call.1} parent=63 // pred_check_branch
          %447 = sbr.rel (%p445) target = $region72
        $region71: #{tpu_custom_call.1} parent=63 // pred_region
          %448 = dma.done %s441, 256
        $region72: #{tpu_custom_call.1} parent=63 // pred_fallthru
          _
        // Predicated region
        $region73: #{tpu_custom_call.1} parent=63 // pred_check
          %p449 = pneg %p151
        $region74: #{tpu_custom_call.1} parent=63 // pred_check_branch
          %451 = sbr.rel (%p449) target = $region76
        $region75: #{tpu_custom_call.1} parent=63 // pred_region
          %452 = dma.done [#allocation7], 2048
        $region76: #{tpu_custom_call.1} parent=63 // pred_fallthru
          _
        // Predicated region
        $region77: #{tpu_custom_call.1} parent=63 // pred_check
          %p453 = pneg %p172
        $region78: #{tpu_custom_call.1} parent=63 // pred_check_branch
          %455 = sbr.rel (%p453) target = $region80
        $region79: #{tpu_custom_call.1} parent=63 // pred_region
          %456 = dma.done [#allocation10], 768
        $region80: #{tpu_custom_call.1} parent=63 // pred_fallthru
          _
        %s457 = sand.u32 %s39, 1
        %s458 = scalar_lea.sflag [#allocation5], %s457
        %s459 = sand.u32 %s39, 1
        %s460 = smul.addr %s459, 16
        %s461 = scalar_lea.vmem [#allocation4], %s460
        %p462 = pneg %p52
        %p463 = pneg %p49
        %s464 = sand.u32 %s31, 1
        %s465 = scalar_lea.sflag [#allocation7], %s464
        %s466 = sand.u32 %s65, 1
        %s467 = smul.addr %s466, 16
        %s468 = scalar_lea.vmem [#allocation6], %s467
        %p469 = pneg %p78
        %p470 = pneg %p75
        %s471 = smul.u32 2, %s31
        %p472 = scmp.lt.s32.totalorder %s471, 3
        %s473 = scalar_select %p472, %s471, 3
        %s474 = smul.addr %s473, 2
        %s475 = smul.addr %s474, 8
        %s476 = scalar_lea.vmem %s2, %s475
        %p477 = pneg %p104
        %p478 = pneg %p101
        %s479 = smul.u32 2, %s31
        %p480 = scmp.lt.s32.totalorder %s479, 3
        %s481 = scalar_select %p480, %s479, 3
        %s482 = smul.addr %s481, 8
        %s483 = scalar_lea.vmem %s3, %s482
        %p484 = pneg %p130
        %p485 = pneg %p127
        %p486 = pneg %p151
        %p487 = pneg %p148
        %p488 = pneg %p172
        %p489 = pneg %p169
        %p490 = pneg %p193
        %p491 = pneg %p190
        %p492 = pneg %p214
        %p493 = pneg %p211
        %p494 = pneg %p235
        %p495 = pneg %p232
        %p496 = pneg %p256
        %p497 = pneg %p253
        %p498 = pneg %p277
        %p499 = pneg %p274
        %p500 = pneg %p303
        %p501 = pneg %p300
        %s502 = smul.u32 2, %s31
        %p503 = scmp.lt.s32.totalorder %s502, 3
        %s504 = scalar_select %p503, %s502, 3
        %s505 = smul.addr %s504, 8
        %s506 = scalar_lea.vmem %s11, %s505
        %s507 = smul.u32 2, %s31
        %s508 = smul.u32 2, %s31
        %s509 = smul.u32 2, %s31
        %p510 = scmp.lt.s32.totalorder %s509, 3
        %s511 = scalar_select %p510, %s509, 3
        %s512 = smul.addr %s511, 2
        %s513 = smul.addr %s512, 8
        %s514 = scalar_lea.vmem %s2, %s513
        %s515 = smul.u32 2, %s31
        %s516 = smul.u32 2, %s31
        %p517 = scmp.lt.s32.totalorder %s516, 3
        %s518 = scalar_select %p517, %s516, 3
        %s519 = smul.addr %s518, 8
        %s520 = scalar_lea.vmem %s3, %s519
        %s521 = smul.u32 2, %s31
        %s522 = smul.u32 2, %s31
        %p523 = scmp.lt.s32.totalorder %s522, 3
        %s524 = scalar_select %p523, %s522, 3
        %s525 = smul.addr %s524, 8
        %s526 = scalar_lea.vmem %s11, %s525
        %s527 = smul.u32 2, %s31
        %v528 = vld [vmem:[%s520] sm:$0xff]
        %v529 = vld [vmem:[%s520 + $0x8] sm:$0xff]
        %531 = vset.pattern.permute.xlu0 0
        %532 = vperm.xlu0 %531, %v528
        %v533 = vpop.permute.xlu0 %532
        %536 = vset.pattern.permute.xlu0 0
        %537 = vperm.xlu0 %536, %v529
        %v538 = vpop.permute.xlu0 %537
        %v540 = vld [vmem:[%s514] sm:$0xff]
        %v541 = vld [vmem:[%s514 + $0x8] sm:$0xff]
        %v542 = vld [vmem:[%s514 + $0x10] sm:$0xff]
        %v543 = vld [vmem:[%s514 + $0x18] sm:$0xff]
        %v544 = vld [vmem:[%s444] sm:$0xff]
        %v545 = vld [vmem:[%s444 + $0x8] sm:$0xff]
        %v546 = vld [vmem:[#allocation9] sm:$0xff]
        %v547 = vld [vmem:[#allocation9 + $0x8] sm:$0xff]
        %v548 = vld [vmem:[#allocation9 + $0x10] sm:$0xff]
        %v549 = vld [vmem:[#allocation9 + $0x18] sm:$0x1]
        %v550 = vld [vmem:[#allocation9 + $0x20] sm:$0x1]
        %v551 = vld [vmem:[#allocation9 + $0x28] sm:$0x1]
        %v552 = vld [vmem:[%s6] sm:$0x7]
        %v554 = vlaneseq
        %v555 = vshrl.u32 %v554, 7
        %v556 = vsub.s32 0, %v555
        %v557 = vrot.slane %v552, %v556
        %v558 = vlaneseq
        %v559 = vshrl.u32 %v558, 7
        %v560 = vsub.s32 1, %v559
        %v561 = vrot.slane %v552, %v560
        %v562 = vlaneseq
        %v563 = vshrl.u32 %v562, 7
        %v564 = vsub.s32 2, %v563
        %v565 = vrot.slane %v552, %v564
        %vm569 = vcmask 72704
        %v571 = vsel %vm569, %v544, 0
        %v574 = vsel %vm569, %v545, 0
        %vm576 = vcmask 1040384
        %v578 = vsel %vm576, %v549, 0
        %v581 = vsel %vm576, %v550, 0
        %v584 = vsel %vm576, %v551, 0
        %586 = vmatprep.subr.mxu0 %v547
        %587 = vmatpush1.msra.mxu0 %v546
        %588 = vmatprep.subr.mxu0 %v581
        %589 = vmatpush1.msra.mxu0 %v578
        %590 = vmatprep.subr.mxu0 0.0
        %591 = vmatpush1.msra.mxu0 0.0
        %592 = vmatprep.subr.mxu0 0.0
        %593 = vmatpush1.msra.mxu0 0.0
        %594 = vmatprep.subr.mxu0 0.0
        %595 = vmatpush1.msra.mxu0 0.0
        %596 = vmatprep.subr.mxu0 0.0
        %597 = vmatpush1.msra.mxu0 0.0
        %598 = vmatprep.subr.mxu0 0.0
        %599 = vmatpush1.msra.mxu0 0.0
        %600 = vmatprep.subr.mxu0 0.0
        %601 = vmatpush1.msra.mxu0 0.0
        %602 = vmatprep.subr.mxu0 0.0
        %603 = vmatpush1.msra.mxu0 0.0
        %604 = vmatprep.subr.mxu0 0.0
        %605 = vmatpush1.msra.mxu0 0.0
        %606 = vmatprep.subr.mxu0 0.0
        %607 = vmatpush1.msra.mxu0 0.0
        %608 = vmatprep.subr.mxu0 0.0
        %609 = vmatpush1.msra.mxu0 0.0
        %610 = vmatprep.subr.mxu0 0.0
        %611 = vmatpush1.msra.mxu0 0.0
        %612 = vmatprep.subr.mxu0 0.0
        %613 = vmatpush1.msra.mxu0 0.0
        %614 = vmatprep.subr.mxu0 0.0
        %615 = vmatpush1.msra.mxu0 0.0
        %616 = vmatprep.subr.mxu0 0.0
        %617 = vmatpush1.msra.mxu0 0.0
        %618 = vmatprep.subr.mxu0 0.0
        %619 = vmatpush1.msra.mxu0 0.0
        %620 = vmatprep.subr.mxu0 0.0
        %621 = vmatpush1.msra.mxu0 0.0
        %622 = vmatprep.subr.mxu0 0.0
        %623 = vmatpush1.msra.mxu0 0.0
        %624 = vmatprep.subr.mxu0 0.0
        %625 = vmatpush1.msra.mxu0 0.0
        %626 = vmatprep.subr.mxu0 0.0
        %627 = vmatpush1.msra.mxu0 0.0
        %628 = vmatprep.subr.mxu0 0.0
        %629 = vmatpush1.msra.mxu0 0.0
        %630 = vmatprep.subr.mxu0 0.0
        %631 = vmatpush1.msra.mxu0 0.0
        %632 = vmatprep.subr.mxu0 0.0
        %633 = vmatpush1.msra.mxu0 0.0
        %634 = vmatprep.subr.mxu0 0.0
        %635 = vmatpush1.msra.mxu0 0.0
        %636 = vmatprep.subr.mxu0 0.0
        %637 = vmatpush1.msra.mxu0 0.0
        %638 = vmatprep.subr.mxu0 0.0
        %639 = vmatpush1.msra.mxu0 0.0
        %640 = vmatprep.subr.mxu0 0.0
        %641 = vmatpush1.msra.mxu0 0.0
        %642 = vmatprep.subr.mxu0 0.0
        %643 = vmatpush1.msra.mxu0 0.0
        %644 = vmatprep.subr.mxu0 0.0
        %645 = vmatpush1.msra.mxu0 0.0
        %646 = vmatprep.subr.mxu0 0.0
        %647 = vmatpush1.msra.mxu0 0.0
        %648 = vmatprep.subr.mxu0 0.0
        %649 = vmatpush1.msra.mxu0 0.0
        %650 = vmatprep.mubr.f32.mxu0 0.0
        %651 = vmatmul.mubr.f32.gmra.mrb[0].mxu0 %v571
        %v652 = vpop.f32.mrb[0].mxu0
        %v653 = vadd.f32 %v557, %v652
        %v654 = vpop.f32.mrb[0].mxu0
        %v655 = vadd.f32 %v561, %v654
        %656 = vmatprep.mubr.f32.mxu0 0.0
        %657 = vmatmul.mubr.f32.gmra.mrb[0].mxu0 %v574
        %v658 = vpop.f32.mrb[0].mxu0
        %v659 = vadd.f32 %v557, %v658
        %v660 = vpop.f32.mrb[0].mxu0
        %v661 = vadd.f32 %v561, %v660
        %662 = vdwg.mxu0
        %663 = vmatprep.subr.mxu0 0.0
        %664 = vmatpush1.msra.mxu0 %v548
        %665 = vmatprep.subr.mxu0 0.0
        %666 = vmatpush1.msra.mxu0 %v584
        %667 = vmatprep.subr.mxu0 0.0
        %668 = vmatpush1.msra.mxu0 0.0
        %669 = vmatprep.subr.mxu0 0.0
        %670 = vmatpush1.msra.mxu0 0.0
        %671 = vmatprep.subr.mxu0 0.0
        %672 = vmatpush1.msra.mxu0 0.0
        %673 = vmatprep.subr.mxu0 0.0
        %674 = vmatpush1.msra.mxu0 0.0
        %675 = vmatprep.subr.mxu0 0.0
        %676 = vmatpush1.msra.mxu0 0.0
        %677 = vmatprep.subr.mxu0 0.0
        %678 = vmatpush1.msra.mxu0 0.0
        %679 = vmatprep.subr.mxu0 0.0
        %680 = vmatpush1.msra.mxu0 0.0
        %681 = vmatprep.subr.mxu0 0.0
        %682 = vmatpush1.msra.mxu0 0.0
        %683 = vmatprep.subr.mxu0 0.0
        %684 = vmatpush1.msra.mxu0 0.0
        %685 = vmatprep.subr.mxu0 0.0
        %686 = vmatpush1.msra.mxu0 0.0
        %687 = vmatprep.subr.mxu0 0.0
        %688 = vmatpush1.msra.mxu0 0.0
        %689 = vmatprep.subr.mxu0 0.0
        %690 = vmatpush1.msra.mxu0 0.0
        %691 = vmatprep.subr.mxu0 0.0
        %692 = vmatpush1.msra.mxu0 0.0
        %693 = vmatprep.subr.mxu0 0.0
        %694 = vmatpush1.msra.mxu0 0.0
        %695 = vmatprep.subr.mxu0 0.0
        %696 = vmatpush1.msra.mxu0 0.0
        %697 = vmatprep.subr.mxu0 0.0
        %698 = vmatpush1.msra.mxu0 0.0
        %699 = vmatprep.subr.mxu0 0.0
        %700 = vmatpush1.msra.mxu0 0.0
        %701 = vmatprep.subr.mxu0 0.0
        %702 = vmatpush1.msra.mxu0 0.0
        %703 = vmatprep.subr.mxu0 0.0
        %704 = vmatpush1.msra.mxu0 0.0
        %705 = vmatprep.subr.mxu0 0.0
        %706 = vmatpush1.msra.mxu0 0.0
        %707 = vmatprep.subr.mxu0 0.0
        %708 = vmatpush1.msra.mxu0 0.0
        %709 = vmatprep.subr.mxu0 0.0
        %710 = vmatpush1.msra.mxu0 0.0
        %711 = vmatprep.subr.mxu0 0.0
        %712 = vmatpush1.msra.mxu0 0.0
        %713 = vmatprep.subr.mxu0 0.0
        %714 = vmatpush1.msra.mxu0 0.0
        %715 = vmatprep.subr.mxu0 0.0
        %716 = vmatpush1.msra.mxu0 0.0
        %717 = vmatprep.subr.mxu0 0.0
        %718 = vmatpush1.msra.mxu0 0.0
        %719 = vmatprep.subr.mxu0 0.0
        %720 = vmatpush1.msra.mxu0 0.0
        %721 = vmatprep.subr.mxu0 0.0
        %722 = vmatpush1.msra.mxu0 0.0
        %723 = vmatprep.subr.mxu0 0.0
        %724 = vmatpush1.msra.mxu0 0.0
        %725 = vmatprep.subr.mxu0 0.0
        %726 = vmatpush1.msra.mxu0 0.0
        %727 = vmatprep.mubr.f32.mxu0 0.0
        %728 = vmatmul.mubr.f32.gmra.mrb[0].mxu0 %v571
        %v729 = vpop.f32.mrb[0].mxu0
        %v730 = vadd.f32 %v565, %v729
        %v731 = vpop.f32.mrb[0].mxu0
        %732 = vmatprep.mubr.f32.mxu0 0.0
        %733 = vmatmul.mubr.f32.gmra.mrb[0].mxu0 %v574
        %v734 = vpop.f32.mrb[0].mxu0
        %v735 = vadd.f32 %v565, %v734
        %v736 = vpop.f32.mrb[0].mxu0
        %737 = vdwg.mxu0
        %v738 = vld [vmem:[%s435] sm:$0xff]
        %v739 = vld [vmem:[%s435 + $0x8] sm:$0xff]
        %vm740 = vcmask 261120
        %741 = vst.msk [vmem:[#allocation2] sm:$0xff] %vm740, %v738
        %742 = vst.msk [vmem:[#allocation2 + $0x10] sm:$0xff] %vm740, %v739
        %743 = vst.msk [vmem:[#allocation2 + $0x8] sm:$0xff] %vm740, 0.0
        %744 = vst.msk [vmem:[#allocation2 + $0x18] sm:$0xff] %vm740, 0.0
        %v745 = vld [vmem:[#allocation2] sm:$0xff]
        %v746 = vld [vmem:[#allocation2 + $0x8] sm:$0xff]
        %v747 = vld [vmem:[#allocation2 + $0x10] sm:$0xff]
        %v748 = vld [vmem:[#allocation2 + $0x18] sm:$0xff]
        %v749 = vld [vmem:[#allocation8] sm:$0xff]
        %v750 = vld [vmem:[#allocation8 + $0x8] sm:$0xff]
        %v751 = vld [vmem:[#allocation8 + $0x10] sm:$0xff]
        %v752 = vld [vmem:[#allocation8 + $0x18] sm:$0xff]
        %v754 = vsel %vm740, %v745, 0
        %v757 = vsel %vm740, %v746, 0
        %v760 = vsel %vm740, %v747, 0
        %v763 = vsel %vm740, %v748, 0
        %765 = vmatprep.subr.mxu0 0.0
        %766 = vmatpush1.msra.mxu0 %v749
        %767 = vmatprep.subr.mxu0 0.0
        %768 = vmatpush1.msra.mxu0 %v750
        %769 = vmatprep.subr.mxu0 0.0
        %770 = vmatpush1.msra.mxu0 %v751
        %771 = vmatprep.subr.mxu0 0.0
        %772 = vmatpush1.msra.mxu0 %v752
        %773 = vmatprep.subr.mxu0 0.0
        %774 = vmatpush1.msra.mxu0 0.0
        %775 = vmatprep.subr.mxu0 0.0
        %776 = vmatpush1.msra.mxu0 0.0
        %777 = vmatprep.subr.mxu0 0.0
        %778 = vmatpush1.msra.mxu0 0.0
        %779 = vmatprep.subr.mxu0 0.0
        %780 = vmatpush1.msra.mxu0 0.0
        %781 = vmatprep.subr.mxu0 0.0
        %782 = vmatpush1.msra.mxu0 0.0
        %783 = vmatprep.subr.mxu0 0.0
        %784 = vmatpush1.msra.mxu0 0.0
        %785 = vmatprep.subr.mxu0 0.0
        %786 = vmatpush1.msra.mxu0 0.0
        %787 = vmatprep.subr.mxu0 0.0
        %788 = vmatpush1.msra.mxu0 0.0
        %789 = vmatprep.subr.mxu0 0.0
        %790 = vmatpush1.msra.mxu0 0.0
        %791 = vmatprep.subr.mxu0 0.0
        %792 = vmatpush1.msra.mxu0 0.0
        %793 = vmatprep.subr.mxu0 0.0
        %794 = vmatpush1.msra.mxu0 0.0
        %795 = vmatprep.subr.mxu0 0.0
        %796 = vmatpush1.msra.mxu0 0.0
        %797 = vmatprep.subr.mxu0 0.0
        %798 = vmatpush1.msra.mxu0 0.0
        %799 = vmatprep.subr.mxu0 0.0
        %800 = vmatpush1.msra.mxu0 0.0
        %801 = vmatprep.subr.mxu0 0.0
        %802 = vmatpush1.msra.mxu0 0.0
        %803 = vmatprep.subr.mxu0 0.0
        %804 = vmatpush1.msra.mxu0 0.0
        %805 = vmatprep.subr.mxu0 0.0
        %806 = vmatpush1.msra.mxu0 0.0
        %807 = vmatprep.subr.mxu0 0.0
        %808 = vmatpush1.msra.mxu0 0.0
        %809 = vmatprep.subr.mxu0 0.0
        %810 = vmatpush1.msra.mxu0 0.0
        %811 = vmatprep.subr.mxu0 0.0
        %812 = vmatpush1.msra.mxu0 0.0
        %813 = vmatprep.subr.mxu0 0.0
        %814 = vmatpush1.msra.mxu0 0.0
        %815 = vmatprep.subr.mxu0 0.0
        %816 = vmatpush1.msra.mxu0 0.0
        %817 = vmatprep.subr.mxu0 0.0
        %818 = vmatpush1.msra.mxu0 0.0
        %819 = vmatprep.subr.mxu0 0.0
        %820 = vmatpush1.msra.mxu0 0.0
        %821 = vmatprep.subr.mxu0 0.0
        %822 = vmatpush1.msra.mxu0 0.0
        %823 = vmatprep.subr.mxu0 0.0
        %824 = vmatpush1.msra.mxu0 0.0
        %825 = vmatprep.subr.mxu0 0.0
        %826 = vmatpush1.msra.mxu0 0.0
        %827 = vmatprep.subr.mxu0 0.0
        %828 = vmatpush1.msra.mxu0 0.0
        %829 = vmatprep.mubr.f32.mxu0 0.0
        %830 = vmatmul.mubr.f32.gmra.mrb[0].mxu0 %v754
        %v831 = vpop.f32.mrb[0].mxu0
        %v832 = vadd.f32 0.0, %v831
        %v833 = vpop.f32.mrb[0].mxu0
        %834 = vmatprep.mubr.f32.mxu0 0.0
        %835 = vmatmul.mubr.f32.gmra.mrb[0].mxu0 %v757
        %v836 = vpop.f32.mrb[0].mxu0
        %v837 = vadd.f32 0.0, %v836
        %v838 = vpop.f32.mrb[0].mxu0
        %839 = vmatprep.mubr.f32.mxu0 0.0
        %840 = vmatmul.mubr.f32.gmra.mrb[0].mxu0 %v760
        %v841 = vpop.f32.mrb[0].mxu0
        %v842 = vadd.f32 0.0, %v841
        %v843 = vpop.f32.mrb[0].mxu0
        %844 = vmatprep.mubr.f32.mxu0 0.0
        %845 = vmatmul.mubr.f32.gmra.mrb[0].mxu0 %v763
        %v846 = vpop.f32.mrb[0].mxu0
        %v847 = vadd.f32 0.0, %v846
        %v848 = vpop.f32.mrb[0].mxu0
        %849 = vdwg.mxu0
        %v850 = vadd.f32 %v832, %v653
        %v851 = vadd.f32 %v837, %v653
        %v852 = vadd.f32 %v842, %v659
        %v853 = vadd.f32 %v847, %v659
        %856 = vrot.lane.b32.xlu0 %v850, 96
        %v857 = vpop.permute.xlu0 %856
        %858 = vrot.lane.b32.xlu0 %v851, 96
        %v859 = vpop.permute.xlu0 %858
        %v860 = vsel %vm740, %v850, 0
        %v862 = vsel %vm740, %v851, 0
        %v864 = vsel %vm740, %v857, 0
        %v866 = vsel %vm740, %v859, 0
        %868 = vmatprep.subr.mxu0 0.0
        %869 = vmatpush1.xpose.msra.mxu0 %v864
        %870 = vmatprep.subr.mxu0 0.0
        %871 = vmatpush1.xpose.msra.mxu0 %v866
        %872 = vmatprep.subr.mxu0 0.0
        %873 = vmatpush1.xpose.msra.mxu0 0.0
        %874 = vmatprep.subr.mxu0 0.0
        %875 = vmatpush1.xpose.msra.mxu0 0.0
        %876 = vmatprep.subr.mxu0 0.0
        %877 = vmatpush1.xpose.msra.mxu0 0.0
        %878 = vmatprep.subr.mxu0 0.0
        %879 = vmatpush1.xpose.msra.mxu0 0.0
        %880 = vmatprep.subr.mxu0 0.0
        %881 = vmatpush1.xpose.msra.mxu0 0.0
        %882 = vmatprep.subr.mxu0 0.0
        %883 = vmatpush1.xpose.msra.mxu0 0.0
        %884 = vmatprep.subr.mxu0 0.0
        %885 = vmatpush1.xpose.msra.mxu0 0.0
        %886 = vmatprep.subr.mxu0 0.0
        %887 = vmatpush1.xpose.msra.mxu0 0.0
        %888 = vmatprep.subr.mxu0 0.0
        %889 = vmatpush1.xpose.msra.mxu0 0.0
        %890 = vmatprep.subr.mxu0 0.0
        %891 = vmatpush1.xpose.msra.mxu0 0.0
        %892 = vmatprep.subr.mxu0 0.0
        %893 = vmatpush1.xpose.msra.mxu0 0.0
        %894 = vmatprep.subr.mxu0 0.0
        %895 = vmatpush1.xpose.msra.mxu0 0.0
        %896 = vmatprep.subr.mxu0 0.0
        %897 = vmatpush1.xpose.msra.mxu0 0.0
        %898 = vmatprep.subr.mxu0 0.0
        %899 = vmatpush1.xpose.msra.mxu0 0.0
        %900 = vmatprep.subr.mxu0 0.0
        %901 = vmatpush1.xpose.msra.mxu0 0.0
        %902 = vmatprep.subr.mxu0 0.0
        %903 = vmatpush1.xpose.msra.mxu0 0.0
        %904 = vmatprep.subr.mxu0 0.0
        %905 = vmatpush1.xpose.msra.mxu0 0.0
        %906 = vmatprep.subr.mxu0 0.0
        %907 = vmatpush1.xpose.msra.mxu0 0.0
        %908 = vmatprep.subr.mxu0 0.0
        %909 = vmatpush1.xpose.msra.mxu0 0.0
        %910 = vmatprep.subr.mxu0 0.0
        %911 = vmatpush1.xpose.msra.mxu0 0.0
        %912 = vmatprep.subr.mxu0 0.0
        %913 = vmatpush1.xpose.msra.mxu0 0.0
        %914 = vmatprep.subr.mxu0 0.0
        %915 = vmatpush1.xpose.msra.mxu0 0.0
        %916 = vmatprep.subr.mxu0 0.0
        %917 = vmatpush1.xpose.msra.mxu0 0.0
        %918 = vmatprep.subr.mxu0 0.0
        %919 = vmatpush1.xpose.msra.mxu0 0.0
        %920 = vmatprep.subr.mxu0 0.0
        %921 = vmatpush1.xpose.msra.mxu0 0.0
        %922 = vmatprep.subr.mxu0 0.0
        %923 = vmatpush1.xpose.msra.mxu0 0.0
        %924 = vmatprep.subr.mxu0 0.0
        %925 = vmatpush1.xpose.msra.mxu0 0.0
        %926 = vmatprep.subr.mxu0 0.0
        %927 = vmatpush1.xpose.msra.mxu0 0.0
        %928 = vmatprep.subr.mxu0 0.0
        %929 = vmatpush1.xpose.msra.mxu0 0.0
        %930 = vmatprep.subr.mxu0 0.0
        %931 = vmatpush1.xpose.msra.mxu0 0.0
        %932 = vmatprep.mubr.f32.mxu0 0.0
        %933 = vmatmul.mubr.f32.gmra.mrb[0].mxu0 %v860
        %v934 = vpop.f32.mrb[0].mxu0
        %v935 = vadd.f32 %v540, %v934
        %v936 = vpop.f32.mrb[0].mxu0
        %937 = vmatprep.mubr.f32.mxu0 0.0
        %938 = vmatmul.mubr.f32.gmra.mrb[0].mxu0 %v862
        %v939 = vpop.f32.mrb[0].mxu0
        %v940 = vadd.f32 %v541, %v939
        %v941 = vpop.f32.mrb[0].mxu0
        %942 = vdwg.mxu0
        %945 = vrot.lane.b32.xlu0 %v852, 96
        %v946 = vpop.permute.xlu0 %945
        %947 = vrot.lane.b32.xlu0 %v853, 96
        %v948 = vpop.permute.xlu0 %947
        %v949 = vsel %vm740, %v852, 0
        %v951 = vsel %vm740, %v853, 0
        %v953 = vsel %vm740, %v946, 0
        %v955 = vsel %vm740, %v948, 0
        %957 = vmatprep.subr.mxu0 0.0
        %958 = vmatpush1.xpose.msra.mxu0 %v953
        %959 = vmatprep.subr.mxu0 0.0
        %960 = vmatpush1.xpose.msra.mxu0 %v955
        %961 = vmatprep.subr.mxu0 0.0
        %962 = vmatpush1.xpose.msra.mxu0 0.0
        %963 = vmatprep.subr.mxu0 0.0
        %964 = vmatpush1.xpose.msra.mxu0 0.0
        %965 = vmatprep.subr.mxu0 0.0
        %966 = vmatpush1.xpose.msra.mxu0 0.0
        %967 = vmatprep.subr.mxu0 0.0
        %968 = vmatpush1.xpose.msra.mxu0 0.0
        %969 = vmatprep.subr.mxu0 0.0
        %970 = vmatpush1.xpose.msra.mxu0 0.0
        %971 = vmatprep.subr.mxu0 0.0
        %972 = vmatpush1.xpose.msra.mxu0 0.0
        %973 = vmatprep.subr.mxu0 0.0
        %974 = vmatpush1.xpose.msra.mxu0 0.0
        %975 = vmatprep.subr.mxu0 0.0
        %976 = vmatpush1.xpose.msra.mxu0 0.0
        %977 = vmatprep.subr.mxu0 0.0
        %978 = vmatpush1.xpose.msra.mxu0 0.0
        %979 = vmatprep.subr.mxu0 0.0
        %980 = vmatpush1.xpose.msra.mxu0 0.0
        %981 = vmatprep.subr.mxu0 0.0
        %982 = vmatpush1.xpose.msra.mxu0 0.0
        %983 = vmatprep.subr.mxu0 0.0
        %984 = vmatpush1.xpose.msra.mxu0 0.0
        %985 = vmatprep.subr.mxu0 0.0
        %986 = vmatpush1.xpose.msra.mxu0 0.0
        %987 = vmatprep.subr.mxu0 0.0
        %988 = vmatpush1.xpose.msra.mxu0 0.0
        %989 = vmatprep.subr.mxu0 0.0
        %990 = vmatpush1.xpose.msra.mxu0 0.0
        %991 = vmatprep.subr.mxu0 0.0
        %992 = vmatpush1.xpose.msra.mxu0 0.0
        %993 = vmatprep.subr.mxu0 0.0
        %994 = vmatpush1.xpose.msra.mxu0 0.0
        %995 = vmatprep.subr.mxu0 0.0
        %996 = vmatpush1.xpose.msra.mxu0 0.0
        %997 = vmatprep.subr.mxu0 0.0
        %998 = vmatpush1.xpose.msra.mxu0 0.0
        %999 = vmatprep.subr.mxu0 0.0
        %1000 = vmatpush1.xpose.msra.mxu0 0.0
        %1001 = vmatprep.subr.mxu0 0.0
        %1002 = vmatpush1.xpose.msra.mxu0 0.0
        %1003 = vmatprep.subr.mxu0 0.0
        %1004 = vmatpush1.xpose.msra.mxu0 0.0
        %1005 = vmatprep.subr.mxu0 0.0
        %1006 = vmatpush1.xpose.msra.mxu0 0.0
        %1007 = vmatprep.subr.mxu0 0.0
        %1008 = vmatpush1.xpose.msra.mxu0 0.0
        %1009 = vmatprep.subr.mxu0 0.0
        %1010 = vmatpush1.xpose.msra.mxu0 0.0
        %1011 = vmatprep.subr.mxu0 0.0
        %1012 = vmatpush1.xpose.msra.mxu0 0.0
        %1013 = vmatprep.subr.mxu0 0.0
        %1014 = vmatpush1.xpose.msra.mxu0 0.0
        %1015 = vmatprep.subr.mxu0 0.0
        %1016 = vmatpush1.xpose.msra.mxu0 0.0
        %1017 = vmatprep.subr.mxu0 0.0
        %1018 = vmatpush1.xpose.msra.mxu0 0.0
        %1019 = vmatprep.subr.mxu0 0.0
        %1020 = vmatpush1.xpose.msra.mxu0 0.0
        %1021 = vmatprep.mubr.f32.mxu0 0.0
        %1022 = vmatmul.mubr.f32.gmra.mrb[0].mxu0 %v949
        %v1023 = vpop.f32.mrb[0].mxu0
        %v1024 = vadd.f32 %v542, %v1023
        %v1025 = vpop.f32.mrb[0].mxu0
        %1026 = vmatprep.mubr.f32.mxu0 0.0
        %1027 = vmatmul.mubr.f32.gmra.mrb[0].mxu0 %v951
        %v1028 = vpop.f32.mrb[0].mxu0
        %v1029 = vadd.f32 %v543, %v1028
        %v1030 = vpop.f32.mrb[0].mxu0
        %1031 = vdwg.mxu0
        %vm1032 = vcmask 130048
        %v1033 = vsel %vm1032, %v935, -inf
        %1034 = vmax.xlane.f32.xlu0 %v1033
        %v1035 = vpop.xlane.xlu0 %1034
        %v1036 = vsel %vm1032, %v940, -inf
        %1037 = vmax.xlane.f32.xlu0 %v1036
        %v1038 = vpop.xlane.xlu0 %1037
        %v1039 = vsel %vm1032, %v1024, -inf
        %1040 = vmax.xlane.f32.xlu0 %v1039
        %v1041 = vpop.xlane.xlu0 %1040
        %v1042 = vsel %vm1032, %v1029, -inf
        %1043 = vmax.xlane.f32.xlu0 %v1042
        %v1044 = vpop.xlane.xlu0 %1043
        %v1045 = vsub.f32 %v935, %v1035
        %v1046 = vsub.f32 %v940, %v1038
        %v1047 = vsub.f32 %v1024, %v1041
        %v1048 = vsub.f32 %v1029, %v1044
        %v1049 = vmul.f32 %v1045, 1.442695
        %v1050 = vpow.pop %v1049
        %v1051 = vmul.f32 %v1046, 1.442695
        %v1052 = vpow.pop %v1051
        %v1053 = vmul.f32 %v1047, 1.442695
        %v1054 = vpow.pop %v1053
        %v1055 = vmul.f32 %v1048, 1.442695
        %v1056 = vpow.pop %v1055
        %v1057 = vsel %vm1032, %v1050, 0.0
        %1058 = vadd.xlane.f32.xlu0 %v1057
        %v1059 = vpop.xlane.xlu0 %1058
        %v1060 = vsel %vm1032, %v1052, 0.0
        %1061 = vadd.xlane.f32.xlu0 %v1060
        %v1062 = vpop.xlane.xlu0 %1061
        %v1063 = vsel %vm1032, %v1054, 0.0
        %1064 = vadd.xlane.f32.xlu0 %v1063
        %v1065 = vpop.xlane.xlu0 %1064
        %v1066 = vsel %vm1032, %v1056, 0.0
        %1067 = vadd.xlane.f32.xlu0 %v1066
        %v1068 = vpop.xlane.xlu0 %1067
        %v1069 = vrcp.pop %v1059
        %v1070 = vmul.f32 %v1050, %v1069
        %v1071 = vrcp.pop %v1062
        %v1072 = vmul.f32 %v1052, %v1071
        %v1073 = vrcp.pop %v1065
        %v1074 = vmul.f32 %v1054, %v1073
        %v1075 = vrcp.pop %v1068
        %v1076 = vmul.f32 %v1056, %v1075
        %1077 = vrot.lane.b32.xlu0 %v850, 64
        %v1078 = vpop.permute.xlu0 %1077
        %1079 = vrot.lane.b32.xlu0 %v851, 64
        %v1080 = vpop.permute.xlu0 %1079
        %v1084 = vsel %vm1032, %v1070, 0
        %v1087 = vsel %vm1032, %v1072, 0
        %1089 = vmatprep.subr.mxu0 0.0
        %1090 = vmatpush1.msra.mxu0 %v1078
        %1091 = vmatprep.subr.mxu0 0.0
        %1092 = vmatpush1.msra.mxu0 %v1080
        %1093 = vmatprep.subr.mxu0 0.0
        %1094 = vmatpush1.msra.mxu0 0.0
        %1095 = vmatprep.subr.mxu0 0.0
        %1096 = vmatpush1.msra.mxu0 0.0
        %1097 = vmatprep.subr.mxu0 0.0
        %1098 = vmatpush1.msra.mxu0 0.0
        %1099 = vmatprep.subr.mxu0 0.0
        %1100 = vmatpush1.msra.mxu0 0.0
        %1101 = vmatprep.subr.mxu0 0.0
        %1102 = vmatpush1.msra.mxu0 0.0
        %1103 = vmatprep.subr.mxu0 0.0
        %1104 = vmatpush1.msra.mxu0 0.0
        %1105 = vmatprep.subr.mxu0 0.0
        %1106 = vmatpush1.msra.mxu0 0.0
        %1107 = vmatprep.subr.mxu0 0.0
        %1108 = vmatpush1.msra.mxu0 0.0
        %1109 = vmatprep.subr.mxu0 0.0
        %1110 = vmatpush1.msra.mxu0 0.0
        %1111 = vmatprep.subr.mxu0 0.0
        %1112 = vmatpush1.msra.mxu0 0.0
        %1113 = vmatprep.subr.mxu0 0.0
        %1114 = vmatpush1.msra.mxu0 0.0
        %1115 = vmatprep.subr.mxu0 0.0
        %1116 = vmatpush1.msra.mxu0 0.0
        %1117 = vmatprep.subr.mxu0 0.0
        %1118 = vmatpush1.msra.mxu0 0.0
        %1119 = vmatprep.subr.mxu0 0.0
        %1120 = vmatpush1.msra.mxu0 0.0
        %1121 = vmatprep.subr.mxu0 0.0
        %1122 = vmatpush1.msra.mxu0 0.0
        %1123 = vmatprep.subr.mxu0 0.0
        %1124 = vmatpush1.msra.mxu0 0.0
        %1125 = vmatprep.subr.mxu0 0.0
        %1126 = vmatpush1.msra.mxu0 0.0
        %1127 = vmatprep.subr.mxu0 0.0
        %1128 = vmatpush1.msra.mxu0 0.0
        %1129 = vmatprep.subr.mxu0 0.0
        %1130 = vmatpush1.msra.mxu0 0.0
        %1131 = vmatprep.subr.mxu0 0.0
        %1132 = vmatpush1.msra.mxu0 0.0
        %1133 = vmatprep.subr.mxu0 0.0
        %1134 = vmatpush1.msra.mxu0 0.0
        %1135 = vmatprep.subr.mxu0 0.0
        %1136 = vmatpush1.msra.mxu0 0.0
        %1137 = vmatprep.subr.mxu0 0.0
        %1138 = vmatpush1.msra.mxu0 0.0
        %1139 = vmatprep.subr.mxu0 0.0
        %1140 = vmatpush1.msra.mxu0 0.0
        %1141 = vmatprep.subr.mxu0 0.0
        %1142 = vmatpush1.msra.mxu0 0.0
        %1143 = vmatprep.subr.mxu0 0.0
        %1144 = vmatpush1.msra.mxu0 0.0
        %1145 = vmatprep.subr.mxu0 0.0
        %1146 = vmatpush1.msra.mxu0 0.0
        %1147 = vmatprep.subr.mxu0 0.0
        %1148 = vmatpush1.msra.mxu0 0.0
        %1149 = vmatprep.subr.mxu0 0.0
        %1150 = vmatpush1.msra.mxu0 0.0
        %1151 = vmatprep.subr.mxu0 0.0
        %1152 = vmatpush1.msra.mxu0 0.0
        %1153 = vmatprep.mubr.f32.mxu0 0.0
        %1154 = vmatmul.mubr.f32.gmra.mrb[0].mxu0 %v1084
        %v1155 = vpop.f32.mrb[0].mxu0
        %v1156 = vadd.f32 0.0, %v1155
        %v1157 = vpop.f32.mrb[0].mxu0
        %1158 = vmatprep.mubr.f32.mxu0 0.0
        %1159 = vmatmul.mubr.f32.gmra.mrb[0].mxu0 %v1087
        %v1160 = vpop.f32.mrb[0].mxu0
        %v1161 = vadd.f32 0.0, %v1160
        %v1162 = vpop.f32.mrb[0].mxu0
        %1163 = vdwg.mxu0
        %1164 = vrot.lane.b32.xlu0 %v852, 64
        %v1165 = vpop.permute.xlu0 %1164
        %1166 = vrot.lane.b32.xlu0 %v853, 64
        %v1167 = vpop.permute.xlu0 %1166
        %v1171 = vsel %vm1032, %v1074, 0
        %v1174 = vsel %vm1032, %v1076, 0
        %1176 = vmatprep.subr.mxu0 0.0
        %1177 = vmatpush1.msra.mxu0 %v1165
        %1178 = vmatprep.subr.mxu0 0.0
        %1179 = vmatpush1.msra.mxu0 %v1167
        %1180 = vmatprep.subr.mxu0 0.0
        %1181 = vmatpush1.msra.mxu0 0.0
        %1182 = vmatprep.subr.mxu0 0.0
        %1183 = vmatpush1.msra.mxu0 0.0
        %1184 = vmatprep.subr.mxu0 0.0
        %1185 = vmatpush1.msra.mxu0 0.0
        %1186 = vmatprep.subr.mxu0 0.0
        %1187 = vmatpush1.msra.mxu0 0.0
        %1188 = vmatprep.subr.mxu0 0.0
        %1189 = vmatpush1.msra.mxu0 0.0
        %1190 = vmatprep.subr.mxu0 0.0
        %1191 = vmatpush1.msra.mxu0 0.0
        %1192 = vmatprep.subr.mxu0 0.0
        %1193 = vmatpush1.msra.mxu0 0.0
        %1194 = vmatprep.subr.mxu0 0.0
        %1195 = vmatpush1.msra.mxu0 0.0
        %1196 = vmatprep.subr.mxu0 0.0
        %1197 = vmatpush1.msra.mxu0 0.0
        %1198 = vmatprep.subr.mxu0 0.0
        %1199 = vmatpush1.msra.mxu0 0.0
        %1200 = vmatprep.subr.mxu0 0.0
        %1201 = vmatpush1.msra.mxu0 0.0
        %1202 = vmatprep.subr.mxu0 0.0
        %1203 = vmatpush1.msra.mxu0 0.0
        %1204 = vmatprep.subr.mxu0 0.0
        %1205 = vmatpush1.msra.mxu0 0.0
        %1206 = vmatprep.subr.mxu0 0.0
        %1207 = vmatpush1.msra.mxu0 0.0
        %1208 = vmatprep.subr.mxu0 0.0
        %1209 = vmatpush1.msra.mxu0 0.0
        %1210 = vmatprep.subr.mxu0 0.0
        %1211 = vmatpush1.msra.mxu0 0.0
        %1212 = vmatprep.subr.mxu0 0.0
        %1213 = vmatpush1.msra.mxu0 0.0
        %1214 = vmatprep.subr.mxu0 0.0
        %1215 = vmatpush1.msra.mxu0 0.0
        %1216 = vmatprep.subr.mxu0 0.0
        %1217 = vmatpush1.msra.mxu0 0.0
        %1218 = vmatprep.subr.mxu0 0.0
        %1219 = vmatpush1.msra.mxu0 0.0
        %1220 = vmatprep.subr.mxu0 0.0
        %1221 = vmatpush1.msra.mxu0 0.0
        %1222 = vmatprep.subr.mxu0 0.0
        %1223 = vmatpush1.msra.mxu0 0.0
        %1224 = vmatprep.subr.mxu0 0.0
        %1225 = vmatpush1.msra.mxu0 0.0
        %1226 = vmatprep.subr.mxu0 0.0
        %1227 = vmatpush1.msra.mxu0 0.0
        %1228 = vmatprep.subr.mxu0 0.0
        %1229 = vmatpush1.msra.mxu0 0.0
        %1230 = vmatprep.subr.mxu0 0.0
        %1231 = vmatpush1.msra.mxu0 0.0
        %1232 = vmatprep.subr.mxu0 0.0
        %1233 = vmatpush1.msra.mxu0 0.0
        %1234 = vmatprep.subr.mxu0 0.0
        %1235 = vmatpush1.msra.mxu0 0.0
        %1236 = vmatprep.subr.mxu0 0.0
        %1237 = vmatpush1.msra.mxu0 0.0
        %1238 = vmatprep.subr.mxu0 0.0
        %1239 = vmatpush1.msra.mxu0 0.0
        %1240 = vmatprep.mubr.f32.mxu0 0.0
        %1241 = vmatmul.mubr.f32.gmra.mrb[0].mxu0 %v1171
        %v1242 = vpop.f32.mrb[0].mxu0
        %v1243 = vadd.f32 0.0, %v1242
        %v1244 = vpop.f32.mrb[0].mxu0
        %1245 = vmatprep.mubr.f32.mxu0 0.0
        %1246 = vmatmul.mubr.f32.gmra.mrb[0].mxu0 %v1174
        %v1247 = vpop.f32.mrb[0].mxu0
        %v1248 = vadd.f32 0.0, %v1247
        %v1249 = vpop.f32.mrb[0].mxu0
        %1250 = vdwg.mxu0
        %v1251 = vmul.f32 %v1161, %v533
        %v1252 = vmul.f32 %v1248, %v538
        %v1253 = vtanh.pop %v1251
        %v1254 = vtanh.pop %v1252
        %v1255 = vadd.f32 %v1253, %v746
        %v1256 = vadd.f32 %v1254, %v748
        %1257 = vst.msk [vmem:[#allocation2] sm:$0xff] %vm740, %v1156
        %1258 = vst.msk [vmem:[#allocation2 + $0x10] sm:$0xff] %vm740, %v1243
        %1259 = vst.msk [vmem:[#allocation2 + $0x8] sm:$0xff] %vm740, %v1255
        %1260 = vst.msk [vmem:[#allocation2 + $0x18] sm:$0xff] %vm740, %v1256
        %v1261 = vld [vmem:[#allocation2] sm:$0xff]
        %v1262 = vld [vmem:[#allocation2 + $0x8] sm:$0xff]
        %v1263 = vld [vmem:[#allocation2 + $0x10] sm:$0xff]
        %v1264 = vld [vmem:[#allocation2 + $0x18] sm:$0xff]
        %s1265 = scalar_lea.vmem [#allocation8], 32
        %v1266 = vld [vmem:[%s1265] sm:$0xff]
        %v1267 = vld [vmem:[%s1265 + $0x8] sm:$0xff]
        %v1268 = vld [vmem:[%s1265 + $0x10] sm:$0xff]
        %v1269 = vld [vmem:[%s1265 + $0x18] sm:$0xff]
        %v1271 = vsel %vm740, %v1261, 0
        %v1274 = vsel %vm740, %v1262, 0
        %v1277 = vsel %vm740, %v1263, 0
        %v1280 = vsel %vm740, %v1264, 0
        %1282 = vmatprep.subr.mxu0 0.0
        %1283 = vmatpush1.msra.mxu0 %v1266
        %1284 = vmatprep.subr.mxu0 0.0
        %1285 = vmatpush1.msra.mxu0 %v1267
        %1286 = vmatprep.subr.mxu0 0.0
        %1287 = vmatpush1.msra.mxu0 %v1268
        %1288 = vmatprep.subr.mxu0 0.0
        %1289 = vmatpush1.msra.mxu0 %v1269
        %1290 = vmatprep.subr.mxu0 0.0
        %1291 = vmatpush1.msra.mxu0 0.0
        %1292 = vmatprep.subr.mxu0 0.0
        %1293 = vmatpush1.msra.mxu0 0.0
        %1294 = vmatprep.subr.mxu0 0.0
        %1295 = vmatpush1.msra.mxu0 0.0
        %1296 = vmatprep.subr.mxu0 0.0
        %1297 = vmatpush1.msra.mxu0 0.0
        %1298 = vmatprep.subr.mxu0 0.0
        %1299 = vmatpush1.msra.mxu0 0.0
        %1300 = vmatprep.subr.mxu0 0.0
        %1301 = vmatpush1.msra.mxu0 0.0
        %1302 = vmatprep.subr.mxu0 0.0
        %1303 = vmatpush1.msra.mxu0 0.0
        %1304 = vmatprep.subr.mxu0 0.0
        %1305 = vmatpush1.msra.mxu0 0.0
        %1306 = vmatprep.subr.mxu0 0.0
        %1307 = vmatpush1.msra.mxu0 0.0
        %1308 = vmatprep.subr.mxu0 0.0
        %1309 = vmatpush1.msra.mxu0 0.0
        %1310 = vmatprep.subr.mxu0 0.0
        %1311 = vmatpush1.msra.mxu0 0.0
        %1312 = vmatprep.subr.mxu0 0.0
        %1313 = vmatpush1.msra.mxu0 0.0
        %1314 = vmatprep.subr.mxu0 0.0
        %1315 = vmatpush1.msra.mxu0 0.0
        %1316 = vmatprep.subr.mxu0 0.0
        %1317 = vmatpush1.msra.mxu0 0.0
        %1318 = vmatprep.subr.mxu0 0.0
        %1319 = vmatpush1.msra.mxu0 0.0
        %1320 = vmatprep.subr.mxu0 0.0
        %1321 = vmatpush1.msra.mxu0 0.0
        %1322 = vmatprep.subr.mxu0 0.0
        %1323 = vmatpush1.msra.mxu0 0.0
        %1324 = vmatprep.subr.mxu0 0.0
        %1325 = vmatpush1.msra.mxu0 0.0
        %1326 = vmatprep.subr.mxu0 0.0
        %1327 = vmatpush1.msra.mxu0 0.0
        %1328 = vmatprep.subr.mxu0 0.0
        %1329 = vmatpush1.msra.mxu0 0.0
        %1330 = vmatprep.subr.mxu0 0.0
        %1331 = vmatpush1.msra.mxu0 0.0
        %1332 = vmatprep.subr.mxu0 0.0
        %1333 = vmatpush1.msra.mxu0 0.0
        %1334 = vmatprep.subr.mxu0 0.0
        %1335 = vmatpush1.msra.mxu0 0.0
        %1336 = vmatprep.subr.mxu0 0.0
        %1337 = vmatpush1.msra.mxu0 0.0
        %1338 = vmatprep.subr.mxu0 0.0
        %1339 = vmatpush1.msra.mxu0 0.0
        %1340 = vmatprep.subr.mxu0 0.0
        %1341 = vmatpush1.msra.mxu0 0.0
        %1342 = vmatprep.subr.mxu0 0.0
        %1343 = vmatpush1.msra.mxu0 0.0
        %1344 = vmatprep.subr.mxu0 0.0
        %1345 = vmatpush1.msra.mxu0 0.0
        %1346 = vmatprep.mubr.f32.mxu0 0.0
        %1347 = vmatmul.mubr.f32.gmra.mrb[0].mxu0 %v1271
        %v1348 = vpop.f32.mrb[0].mxu0
        %v1349 = vadd.f32 0.0, %v1348
        %v1350 = vpop.f32.mrb[0].mxu0
        %1351 = vmatprep.mubr.f32.mxu0 0.0
        %1352 = vmatmul.mubr.f32.gmra.mrb[0].mxu0 %v1274
        %v1353 = vpop.f32.mrb[0].mxu0
        %v1354 = vadd.f32 0.0, %v1353
        %v1355 = vpop.f32.mrb[0].mxu0
        %1356 = vmatprep.mubr.f32.mxu0 0.0
        %1357 = vmatmul.mubr.f32.gmra.mrb[0].mxu0 %v1277
        %v1358 = vpop.f32.mrb[0].mxu0
        %v1359 = vadd.f32 0.0, %v1358
        %v1360 = vpop.f32.mrb[0].mxu0
        %1361 = vmatprep.mubr.f32.mxu0 0.0
        %1362 = vmatmul.mubr.f32.gmra.mrb[0].mxu0 %v1280
        %v1363 = vpop.f32.mrb[0].mxu0
        %v1364 = vadd.f32 0.0, %v1363
        %v1365 = vpop.f32.mrb[0].mxu0
        %1366 = vdwg.mxu0
        %1371 = vrot.lane.b32.xlu0 %v653, 32
        %v1372 = vpop.permute.xlu0 %1371
        %1373 = vrot.lane.b32.xlu0 %v655, 32
        %v1374 = vpop.permute.xlu0 %1373
        %1375 = vrot.lane.b32.xlu0 %v659, 32
        %v1376 = vpop.permute.xlu0 %1375
        %1377 = vrot.lane.b32.xlu0 %v661, 32
        %v1378 = vpop.permute.xlu0 %1377
        %v1379 = vsel %vm740, %v1372, %v1374
        %v1380 = vsel %vm740, %v1376, %v1378
        %v1383 = vadd.f32 %v1349, %v1379
        %v1384 = vadd.f32 %v1354, %v1379
        %v1385 = vadd.f32 %v1359, %v1380
        %v1386 = vadd.f32 %v1364, %v1380
        %1389 = vrot.lane.b32.xlu0 %v1383, 96
        %v1390 = vpop.permute.xlu0 %1389
        %1391 = vrot.lane.b32.xlu0 %v1384, 96
        %v1392 = vpop.permute.xlu0 %1391
        %v1393 = vsel %vm740, %v1383, 0
        %v1395 = vsel %vm740, %v1384, 0
        %v1397 = vsel %vm740, %v1390, 0
        %v1399 = vsel %vm740, %v1392, 0
        %1401 = vmatprep.subr.mxu0 0.0
        %1402 = vmatpush1.xpose.msra.mxu0 %v1397
        %1403 = vmatprep.subr.mxu0 0.0
        %1404 = vmatpush1.xpose.msra.mxu0 %v1399
        %1405 = vmatprep.subr.mxu0 0.0
        %1406 = vmatpush1.xpose.msra.mxu0 0.0
        %1407 = vmatprep.subr.mxu0 0.0
        %1408 = vmatpush1.xpose.msra.mxu0 0.0
        %1409 = vmatprep.subr.mxu0 0.0
        %1410 = vmatpush1.xpose.msra.mxu0 0.0
        %1411 = vmatprep.subr.mxu0 0.0
        %1412 = vmatpush1.xpose.msra.mxu0 0.0
        %1413 = vmatprep.subr.mxu0 0.0
        %1414 = vmatpush1.xpose.msra.mxu0 0.0
        %1415 = vmatprep.subr.mxu0 0.0
        %1416 = vmatpush1.xpose.msra.mxu0 0.0
        %1417 = vmatprep.subr.mxu0 0.0
        %1418 = vmatpush1.xpose.msra.mxu0 0.0
        %1419 = vmatprep.subr.mxu0 0.0
        %1420 = vmatpush1.xpose.msra.mxu0 0.0
        %1421 = vmatprep.subr.mxu0 0.0
        %1422 = vmatpush1.xpose.msra.mxu0 0.0
        %1423 = vmatprep.subr.mxu0 0.0
        %1424 = vmatpush1.xpose.msra.mxu0 0.0
        %1425 = vmatprep.subr.mxu0 0.0
        %1426 = vmatpush1.xpose.msra.mxu0 0.0
        %1427 = vmatprep.subr.mxu0 0.0
        %1428 = vmatpush1.xpose.msra.mxu0 0.0
        %1429 = vmatprep.subr.mxu0 0.0
        %1430 = vmatpush1.xpose.msra.mxu0 0.0
        %1431 = vmatprep.subr.mxu0 0.0
        %1432 = vmatpush1.xpose.msra.mxu0 0.0
        %1433 = vmatprep.subr.mxu0 0.0
        %1434 = vmatpush1.xpose.msra.mxu0 0.0
        %1435 = vmatprep.subr.mxu0 0.0
        %1436 = vmatpush1.xpose.msra.mxu0 0.0
        %1437 = vmatprep.subr.mxu0 0.0
        %1438 = vmatpush1.xpose.msra.mxu0 0.0
        %1439 = vmatprep.subr.mxu0 0.0
        %1440 = vmatpush1.xpose.msra.mxu0 0.0
        %1441 = vmatprep.subr.mxu0 0.0
        %1442 = vmatpush1.xpose.msra.mxu0 0.0
        %1443 = vmatprep.subr.mxu0 0.0
        %1444 = vmatpush1.xpose.msra.mxu0 0.0
        %1445 = vmatprep.subr.mxu0 0.0
        %1446 = vmatpush1.xpose.msra.mxu0 0.0
        %1447 = vmatprep.subr.mxu0 0.0
        %1448 = vmatpush1.xpose.msra.mxu0 0.0
        %1449 = vmatprep.subr.mxu0 0.0
        %1450 = vmatpush1.xpose.msra.mxu0 0.0
        %1451 = vmatprep.subr.mxu0 0.0
        %1452 = vmatpush1.xpose.msra.mxu0 0.0
        %1453 = vmatprep.subr.mxu0 0.0
        %1454 = vmatpush1.xpose.msra.mxu0 0.0
        %1455 = vmatprep.subr.mxu0 0.0
        %1456 = vmatpush1.xpose.msra.mxu0 0.0
        %1457 = vmatprep.subr.mxu0 0.0
        %1458 = vmatpush1.xpose.msra.mxu0 0.0
        %1459 = vmatprep.subr.mxu0 0.0
        %1460 = vmatpush1.xpose.msra.mxu0 0.0
        %1461 = vmatprep.subr.mxu0 0.0
        %1462 = vmatpush1.xpose.msra.mxu0 0.0
        %1463 = vmatprep.subr.mxu0 0.0
        %1464 = vmatpush1.xpose.msra.mxu0 0.0
        %1465 = vmatprep.mubr.f32.mxu0 0.0
        %1466 = vmatmul.mubr.f32.gmra.mrb[0].mxu0 %v1393
        %v1467 = vpop.f32.mrb[0].mxu0
        %v1468 = vadd.f32 %v540, %v1467
        %v1469 = vpop.f32.mrb[0].mxu0
        %1470 = vmatprep.mubr.f32.mxu0 0.0
        %1471 = vmatmul.mubr.f32.gmra.mrb[0].mxu0 %v1395
        %v1472 = vpop.f32.mrb[0].mxu0
        %v1473 = vadd.f32 %v541, %v1472
        %v1474 = vpop.f32.mrb[0].mxu0
        %1475 = vdwg.mxu0
        %1478 = vrot.lane.b32.xlu0 %v1385, 96
        %v1479 = vpop.permute.xlu0 %1478
        %1480 = vrot.lane.b32.xlu0 %v1386, 96
        %v1481 = vpop.permute.xlu0 %1480
        %v1482 = vsel %vm740, %v1385, 0
        %v1484 = vsel %vm740, %v1386, 0
        %v1486 = vsel %vm740, %v1479, 0
        %v1488 = vsel %vm740, %v1481, 0
        %1490 = vmatprep.subr.mxu0 0.0
        %1491 = vmatpush1.xpose.msra.mxu0 %v1486
        %1492 = vmatprep.subr.mxu0 0.0
        %1493 = vmatpush1.xpose.msra.mxu0 %v1488
        %1494 = vmatprep.subr.mxu0 0.0
        %1495 = vmatpush1.xpose.msra.mxu0 0.0
        %1496 = vmatprep.subr.mxu0 0.0
        %1497 = vmatpush1.xpose.msra.mxu0 0.0
        %1498 = vmatprep.subr.mxu0 0.0
        %1499 = vmatpush1.xpose.msra.mxu0 0.0
        %1500 = vmatprep.subr.mxu0 0.0
        %1501 = vmatpush1.xpose.msra.mxu0 0.0
        %1502 = vmatprep.subr.mxu0 0.0
        %1503 = vmatpush1.xpose.msra.mxu0 0.0
        %1504 = vmatprep.subr.mxu0 0.0
        %1505 = vmatpush1.xpose.msra.mxu0 0.0
        %1506 = vmatprep.subr.mxu0 0.0
        %1507 = vmatpush1.xpose.msra.mxu0 0.0
        %1508 = vmatprep.subr.mxu0 0.0
        %1509 = vmatpush1.xpose.msra.mxu0 0.0
        %1510 = vmatprep.subr.mxu0 0.0
        %1511 = vmatpush1.xpose.msra.mxu0 0.0
        %1512 = vmatprep.subr.mxu0 0.0
        %1513 = vmatpush1.xpose.msra.mxu0 0.0
        %1514 = vmatprep.subr.mxu0 0.0
        %1515 = vmatpush1.xpose.msra.mxu0 0.0
        %1516 = vmatprep.subr.mxu0 0.0
        %1517 = vmatpush1.xpose.msra.mxu0 0.0
        %1518 = vmatprep.subr.mxu0 0.0
        %1519 = vmatpush1.xpose.msra.mxu0 0.0
        %1520 = vmatprep.subr.mxu0 0.0
        %1521 = vmatpush1.xpose.msra.mxu0 0.0
        %1522 = vmatprep.subr.mxu0 0.0
        %1523 = vmatpush1.xpose.msra.mxu0 0.0
        %1524 = vmatprep.subr.mxu0 0.0
        %1525 = vmatpush1.xpose.msra.mxu0 0.0
        %1526 = vmatprep.subr.mxu0 0.0
        %1527 = vmatpush1.xpose.msra.mxu0 0.0
        %1528 = vmatprep.subr.mxu0 0.0
        %1529 = vmatpush1.xpose.msra.mxu0 0.0
        %1530 = vmatprep.subr.mxu0 0.0
        %1531 = vmatpush1.xpose.msra.mxu0 0.0
        %1532 = vmatprep.subr.mxu0 0.0
        %1533 = vmatpush1.xpose.msra.mxu0 0.0
        %1534 = vmatprep.subr.mxu0 0.0
        %1535 = vmatpush1.xpose.msra.mxu0 0.0
        %1536 = vmatprep.subr.mxu0 0.0
        %1537 = vmatpush1.xpose.msra.mxu0 0.0
        %1538 = vmatprep.subr.mxu0 0.0
        %1539 = vmatpush1.xpose.msra.mxu0 0.0
        %1540 = vmatprep.subr.mxu0 0.0
        %1541 = vmatpush1.xpose.msra.mxu0 0.0
        %1542 = vmatprep.subr.mxu0 0.0
        %1543 = vmatpush1.xpose.msra.mxu0 0.0
        %1544 = vmatprep.subr.mxu0 0.0
        %1545 = vmatpush1.xpose.msra.mxu0 0.0
        %1546 = vmatprep.subr.mxu0 0.0
        %1547 = vmatpush1.xpose.msra.mxu0 0.0
        %1548 = vmatprep.subr.mxu0 0.0
        %1549 = vmatpush1.xpose.msra.mxu0 0.0
        %1550 = vmatprep.subr.mxu0 0.0
        %1551 = vmatpush1.xpose.msra.mxu0 0.0
        %1552 = vmatprep.subr.mxu0 0.0
        %1553 = vmatpush1.xpose.msra.mxu0 0.0
        %1554 = vmatprep.mubr.f32.mxu0 0.0
        %1555 = vmatmul.mubr.f32.gmra.mrb[0].mxu0 %v1482
        %v1556 = vpop.f32.mrb[0].mxu0
        %v1557 = vadd.f32 %v542, %v1556
        %v1558 = vpop.f32.mrb[0].mxu0
        %1559 = vmatprep.mubr.f32.mxu0 0.0
        %1560 = vmatmul.mubr.f32.gmra.mrb[0].mxu0 %v1484
        %v1561 = vpop.f32.mrb[0].mxu0
        %v1562 = vadd.f32 %v543, %v1561
        %v1563 = vpop.f32.mrb[0].mxu0
        %1564 = vdwg.mxu0
        %v1565 = vsel %vm1032, %v1468, -inf
        %1566 = vmax.xlane.f32.xlu0 %v1565
        %v1567 = vpop.xlane.xlu0 %1566
        %v1568 = vsel %vm1032, %v1473, -inf
        %1569 = vmax.xlane.f32.xlu0 %v1568
        %v1570 = vpop.xlane.xlu0 %1569
        %v1571 = vsel %vm1032, %v1557, -inf
        %1572 = vmax.xlane.f32.xlu0 %v1571
        %v1573 = vpop.xlane.xlu0 %1572
        %v1574 = vsel %vm1032, %v1562, -inf
        %1575 = vmax.xlane.f32.xlu0 %v1574
        %v1576 = vpop.xlane.xlu0 %1575
        %v1577 = vsub.f32 %v1468, %v1567
        %v1578 = vsub.f32 %v1473, %v1570
        %v1579 = vsub.f32 %v1557, %v1573
        %v1580 = vsub.f32 %v1562, %v1576
        %v1581 = vmul.f32 %v1577, 1.442695
        %v1582 = vpow.pop %v1581
        %v1583 = vmul.f32 %v1578, 1.442695
        %v1584 = vpow.pop %v1583
        %v1585 = vmul.f32 %v1579, 1.442695
        %v1586 = vpow.pop %v1585
        %v1587 = vmul.f32 %v1580, 1.442695
        %v1588 = vpow.pop %v1587
        %v1589 = vsel %vm1032, %v1582, 0.0
        %1590 = vadd.xlane.f32.xlu0 %v1589
        %v1591 = vpop.xlane.xlu0 %1590
        %v1592 = vsel %vm1032, %v1584, 0.0
        %1593 = vadd.xlane.f32.xlu0 %v1592
        %v1594 = vpop.xlane.xlu0 %1593
        %v1595 = vsel %vm1032, %v1586, 0.0
        %1596 = vadd.xlane.f32.xlu0 %v1595
        %v1597 = vpop.xlane.xlu0 %1596
        %v1598 = vsel %vm1032, %v1588, 0.0
        %1599 = vadd.xlane.f32.xlu0 %v1598
        %v1600 = vpop.xlane.xlu0 %1599
        %v1601 = vrcp.pop %v1591
        %v1602 = vmul.f32 %v1582, %v1601
        %v1603 = vrcp.pop %v1594
        %v1604 = vmul.f32 %v1584, %v1603
        %v1605 = vrcp.pop %v1597
        %v1606 = vmul.f32 %v1586, %v1605
        %v1607 = vrcp.pop %v1600
        %v1608 = vmul.f32 %v1588, %v1607
        %1609 = vrot.lane.b32.xlu0 %v1383, 64
        %v1610 = vpop.permute.xlu0 %1609
        %1611 = vrot.lane.b32.xlu0 %v1384, 64
        %v1612 = vpop.permute.xlu0 %1611
        %v1616 = vsel %vm1032, %v1602, 0
        %v1619 = vsel %vm1032, %v1604, 0
        %1621 = vmatprep.subr.mxu0 0.0
        %1622 = vmatpush1.msra.mxu0 %v1610
        %1623 = vmatprep.subr.mxu0 0.0
        %1624 = vmatpush1.msra.mxu0 %v1612
        %1625 = vmatprep.subr.mxu0 0.0
        %1626 = vmatpush1.msra.mxu0 0.0
        %1627 = vmatprep.subr.mxu0 0.0
        %1628 = vmatpush1.msra.mxu0 0.0
        %1629 = vmatprep.subr.mxu0 0.0
        %1630 = vmatpush1.msra.mxu0 0.0
        %1631 = vmatprep.subr.mxu0 0.0
        %1632 = vmatpush1.msra.mxu0 0.0
        %1633 = vmatprep.subr.mxu0 0.0
        %1634 = vmatpush1.msra.mxu0 0.0
        %1635 = vmatprep.subr.mxu0 0.0
        %1636 = vmatpush1.msra.mxu0 0.0
        %1637 = vmatprep.subr.mxu0 0.0
        %1638 = vmatpush1.msra.mxu0 0.0
        %1639 = vmatprep.subr.mxu0 0.0
        %1640 = vmatpush1.msra.mxu0 0.0
        %1641 = vmatprep.subr.mxu0 0.0
        %1642 = vmatpush1.msra.mxu0 0.0
        %1643 = vmatprep.subr.mxu0 0.0
        %1644 = vmatpush1.msra.mxu0 0.0
        %1645 = vmatprep.subr.mxu0 0.0
        %1646 = vmatpush1.msra.mxu0 0.0
        %1647 = vmatprep.subr.mxu0 0.0
        %1648 = vmatpush1.msra.mxu0 0.0
        %1649 = vmatprep.subr.mxu0 0.0
        %1650 = vmatpush1.msra.mxu0 0.0
        %1651 = vmatprep.subr.mxu0 0.0
        %1652 = vmatpush1.msra.mxu0 0.0
        %1653 = vmatprep.subr.mxu0 0.0
        %1654 = vmatpush1.msra.mxu0 0.0
        %1655 = vmatprep.subr.mxu0 0.0
        %1656 = vmatpush1.msra.mxu0 0.0
        %1657 = vmatprep.subr.mxu0 0.0
        %1658 = vmatpush1.msra.mxu0 0.0
        %1659 = vmatprep.subr.mxu0 0.0
        %1660 = vmatpush1.msra.mxu0 0.0
        %1661 = vmatprep.subr.mxu0 0.0
        %1662 = vmatpush1.msra.mxu0 0.0
        %1663 = vmatprep.subr.mxu0 0.0
        %1664 = vmatpush1.msra.mxu0 0.0
        %1665 = vmatprep.subr.mxu0 0.0
        %1666 = vmatpush1.msra.mxu0 0.0
        %1667 = vmatprep.subr.mxu0 0.0
        %1668 = vmatpush1.msra.mxu0 0.0
        %1669 = vmatprep.subr.mxu0 0.0
        %1670 = vmatpush1.msra.mxu0 0.0
        %1671 = vmatprep.subr.mxu0 0.0
        %1672 = vmatpush1.msra.mxu0 0.0
        %1673 = vmatprep.subr.mxu0 0.0
        %1674 = vmatpush1.msra.mxu0 0.0
        %1675 = vmatprep.subr.mxu0 0.0
        %1676 = vmatpush1.msra.mxu0 0.0
        %1677 = vmatprep.subr.mxu0 0.0
        %1678 = vmatpush1.msra.mxu0 0.0
        %1679 = vmatprep.subr.mxu0 0.0
        %1680 = vmatpush1.msra.mxu0 0.0
        %1681 = vmatprep.subr.mxu0 0.0
        %1682 = vmatpush1.msra.mxu0 0.0
        %1683 = vmatprep.subr.mxu0 0.0
        %1684 = vmatpush1.msra.mxu0 0.0
        %1685 = vmatprep.mubr.f32.mxu0 0.0
        %1686 = vmatmul.mubr.f32.gmra.mrb[0].mxu0 %v1616
        %v1687 = vpop.f32.mrb[0].mxu0
        %v1688 = vadd.f32 0.0, %v1687
        %v1689 = vpop.f32.mrb[0].mxu0
        %1690 = vmatprep.mubr.f32.mxu0 0.0
        %1691 = vmatmul.mubr.f32.gmra.mrb[0].mxu0 %v1619
        %v1692 = vpop.f32.mrb[0].mxu0
        %v1693 = vadd.f32 0.0, %v1692
        %v1694 = vpop.f32.mrb[0].mxu0
        %1695 = vdwg.mxu0
        %1696 = vrot.lane.b32.xlu0 %v1385, 64
        %v1697 = vpop.permute.xlu0 %1696
        %1698 = vrot.lane.b32.xlu0 %v1386, 64
        %v1699 = vpop.permute.xlu0 %1698
        %v1703 = vsel %vm1032, %v1606, 0
        %v1706 = vsel %vm1032, %v1608, 0
        %1708 = vmatprep.subr.mxu0 0.0
        %1709 = vmatpush1.msra.mxu0 %v1697
        %1710 = vmatprep.subr.mxu0 0.0
        %1711 = vmatpush1.msra.mxu0 %v1699
        %1712 = vmatprep.subr.mxu0 0.0
        %1713 = vmatpush1.msra.mxu0 0.0
        %1714 = vmatprep.subr.mxu0 0.0
        %1715 = vmatpush1.msra.mxu0 0.0
        %1716 = vmatprep.subr.mxu0 0.0
        %1717 = vmatpush1.msra.mxu0 0.0
        %1718 = vmatprep.subr.mxu0 0.0
        %1719 = vmatpush1.msra.mxu0 0.0
        %1720 = vmatprep.subr.mxu0 0.0
        %1721 = vmatpush1.msra.mxu0 0.0
        %1722 = vmatprep.subr.mxu0 0.0
        %1723 = vmatpush1.msra.mxu0 0.0
        %1724 = vmatprep.subr.mxu0 0.0
        %1725 = vmatpush1.msra.mxu0 0.0
        %1726 = vmatprep.subr.mxu0 0.0
        %1727 = vmatpush1.msra.mxu0 0.0
        %1728 = vmatprep.subr.mxu0 0.0
        %1729 = vmatpush1.msra.mxu0 0.0
        %1730 = vmatprep.subr.mxu0 0.0
        %1731 = vmatpush1.msra.mxu0 0.0
        %1732 = vmatprep.subr.mxu0 0.0
        %1733 = vmatpush1.msra.mxu0 0.0
        %1734 = vmatprep.subr.mxu0 0.0
        %1735 = vmatpush1.msra.mxu0 0.0
        %1736 = vmatprep.subr.mxu0 0.0
        %1737 = vmatpush1.msra.mxu0 0.0
        %1738 = vmatprep.subr.mxu0 0.0
        %1739 = vmatpush1.msra.mxu0 0.0
        %1740 = vmatprep.subr.mxu0 0.0
        %1741 = vmatpush1.msra.mxu0 0.0
        %1742 = vmatprep.subr.mxu0 0.0
        %1743 = vmatpush1.msra.mxu0 0.0
        %1744 = vmatprep.subr.mxu0 0.0
        %1745 = vmatpush1.msra.mxu0 0.0
        %1746 = vmatprep.subr.mxu0 0.0
        %1747 = vmatpush1.msra.mxu0 0.0
        %1748 = vmatprep.subr.mxu0 0.0
        %1749 = vmatpush1.msra.mxu0 0.0
        %1750 = vmatprep.subr.mxu0 0.0
        %1751 = vmatpush1.msra.mxu0 0.0
        %1752 = vmatprep.subr.mxu0 0.0
        %1753 = vmatpush1.msra.mxu0 0.0
        %1754 = vmatprep.subr.mxu0 0.0
        %1755 = vmatpush1.msra.mxu0 0.0
        %1756 = vmatprep.subr.mxu0 0.0
        %1757 = vmatpush1.msra.mxu0 0.0
        %1758 = vmatprep.subr.mxu0 0.0
        %1759 = vmatpush1.msra.mxu0 0.0
        %1760 = vmatprep.subr.mxu0 0.0
        %1761 = vmatpush1.msra.mxu0 0.0
        %1762 = vmatprep.subr.mxu0 0.0
        %1763 = vmatpush1.msra.mxu0 0.0
        %1764 = vmatprep.subr.mxu0 0.0
        %1765 = vmatpush1.msra.mxu0 0.0
        %1766 = vmatprep.subr.mxu0 0.0
        %1767 = vmatpush1.msra.mxu0 0.0
        %1768 = vmatprep.subr.mxu0 0.0
        %1769 = vmatpush1.msra.mxu0 0.0
        %1770 = vmatprep.subr.mxu0 0.0
        %1771 = vmatpush1.msra.mxu0 0.0
        %1772 = vmatprep.mubr.f32.mxu0 0.0
        %1773 = vmatmul.mubr.f32.gmra.mrb[0].mxu0 %v1703
        %v1774 = vpop.f32.mrb[0].mxu0
        %v1775 = vadd.f32 0.0, %v1774
        %v1776 = vpop.f32.mrb[0].mxu0
        %1777 = vmatprep.mubr.f32.mxu0 0.0
        %1778 = vmatmul.mubr.f32.gmra.mrb[0].mxu0 %v1706
        %v1779 = vpop.f32.mrb[0].mxu0
        %v1780 = vadd.f32 0.0, %v1779
        %v1781 = vpop.f32.mrb[0].mxu0
        %1782 = vdwg.mxu0
        %v1783 = vmul.f32 %v1693, %v533
        %v1784 = vmul.f32 %v1780, %v538
        %v1785 = vtanh.pop %v1783
        %v1786 = vtanh.pop %v1784
        %v1787 = vadd.f32 %v1785, %v1262
        %v1788 = vadd.f32 %v1786, %v1264
        %1789 = vst.msk [vmem:[#allocation2] sm:$0xff] %vm740, %v1688
        %1790 = vst.msk [vmem:[#allocation2 + $0x10] sm:$0xff] %vm740, %v1775
        %1791 = vst.msk [vmem:[#allocation2 + $0x8] sm:$0xff] %vm740, %v1787
        %1792 = vst.msk [vmem:[#allocation2 + $0x18] sm:$0xff] %vm740, %v1788
        %v1793 = vld [vmem:[%s7] sm:$0xff]
        %v1794 = vld [vmem:[%s7 + $0x8] sm:$0xff]
        %v1795 = vld [vmem:[%s7 + $0x10] sm:$0xff]
        %v1796 = vld [vmem:[%s7 + $0x18] sm:$0xff]
        %1797 = vst.msk [vmem:[#allocation2 + $0x8] sm:$0xff] %vm740, 0.0
        %1798 = vst.msk [vmem:[#allocation2 + $0x18] sm:$0xff] %vm740, 0.0
        %v1799 = vld [vmem:[#allocation2] sm:$0xff]
        %v1800 = vld [vmem:[#allocation2 + $0x8] sm:$0xff]
        %v1801 = vld [vmem:[#allocation2 + $0x10] sm:$0xff]
        %v1802 = vld [vmem:[#allocation2 + $0x18] sm:$0xff]
        %s1803 = scalar_lea.vmem [#allocation8], 64
        %v1804 = vld [vmem:[%s1803] sm:$0xff]
        %v1805 = vld [vmem:[%s1803 + $0x8] sm:$0xff]
        %v1806 = vld [vmem:[%s1803 + $0x10] sm:$0xff]
        %v1807 = vld [vmem:[%s1803 + $0x18] sm:$0xff]
        %v1809 = vsel %vm740, %v1799, 0
        %v1812 = vsel %vm740, %v1800, 0
        %v1815 = vsel %vm740, %v1801, 0
        %v1818 = vsel %vm740, %v1802, 0
        %1820 = vmatprep.subr.mxu0 0.0
        %1821 = vmatpush1.msra.mxu0 %v1804
        %1822 = vmatprep.subr.mxu0 0.0
        %1823 = vmatpush1.msra.mxu0 %v1805
        %1824 = vmatprep.subr.mxu0 0.0
        %1825 = vmatpush1.msra.mxu0 %v1806
        %1826 = vmatprep.subr.mxu0 0.0
        %1827 = vmatpush1.msra.mxu0 %v1807
        %1828 = vmatprep.subr.mxu0 0.0
        %1829 = vmatpush1.msra.mxu0 0.0
        %1830 = vmatprep.subr.mxu0 0.0
        %1831 = vmatpush1.msra.mxu0 0.0
        %1832 = vmatprep.subr.mxu0 0.0
        %1833 = vmatpush1.msra.mxu0 0.0
        %1834 = vmatprep.subr.mxu0 0.0
        %1835 = vmatpush1.msra.mxu0 0.0
        %1836 = vmatprep.subr.mxu0 0.0
        %1837 = vmatpush1.msra.mxu0 0.0
        %1838 = vmatprep.subr.mxu0 0.0
        %1839 = vmatpush1.msra.mxu0 0.0
        %1840 = vmatprep.subr.mxu0 0.0
        %1841 = vmatpush1.msra.mxu0 0.0
        %1842 = vmatprep.subr.mxu0 0.0
        %1843 = vmatpush1.msra.mxu0 0.0
        %1844 = vmatprep.subr.mxu0 0.0
        %1845 = vmatpush1.msra.mxu0 0.0
        %1846 = vmatprep.subr.mxu0 0.0
        %1847 = vmatpush1.msra.mxu0 0.0
        %1848 = vmatprep.subr.mxu0 0.0
        %1849 = vmatpush1.msra.mxu0 0.0
        %1850 = vmatprep.subr.mxu0 0.0
        %1851 = vmatpush1.msra.mxu0 0.0
        %1852 = vmatprep.subr.mxu0 0.0
        %1853 = vmatpush1.msra.mxu0 0.0
        %1854 = vmatprep.subr.mxu0 0.0
        %1855 = vmatpush1.msra.mxu0 0.0
        %1856 = vmatprep.subr.mxu0 0.0
        %1857 = vmatpush1.msra.mxu0 0.0
        %1858 = vmatprep.subr.mxu0 0.0
        %1859 = vmatpush1.msra.mxu0 0.0
        %1860 = vmatprep.subr.mxu0 0.0
        %1861 = vmatpush1.msra.mxu0 0.0
        %1862 = vmatprep.subr.mxu0 0.0
        %1863 = vmatpush1.msra.mxu0 0.0
        %1864 = vmatprep.subr.mxu0 0.0
        %1865 = vmatpush1.msra.mxu0 0.0
        %1866 = vmatprep.subr.mxu0 0.0
        %1867 = vmatpush1.msra.mxu0 0.0
        %1868 = vmatprep.subr.mxu0 0.0
        %1869 = vmatpush1.msra.mxu0 0.0
        %1870 = vmatprep.subr.mxu0 0.0
        %1871 = vmatpush1.msra.mxu0 0.0
        %1872 = vmatprep.subr.mxu0 0.0
        %1873 = vmatpush1.msra.mxu0 0.0
        %1874 = vmatprep.subr.mxu0 0.0
        %1875 = vmatpush1.msra.mxu0 0.0
        %1876 = vmatprep.subr.mxu0 0.0
        %1877 = vmatpush1.msra.mxu0 0.0
        %1878 = vmatprep.subr.mxu0 0.0
        %1879 = vmatpush1.msra.mxu0 0.0
        %1880 = vmatprep.subr.mxu0 0.0
        %1881 = vmatpush1.msra.mxu0 0.0
        %1882 = vmatprep.subr.mxu0 0.0
        %1883 = vmatpush1.msra.mxu0 0.0
        %1884 = vmatprep.mubr.f32.mxu0 0.0
        %1885 = vmatmul.mubr.f32.gmra.mrb[0].mxu0 %v1809
        %v1886 = vpop.f32.mrb[0].mxu0
        %v1887 = vadd.f32 0.0, %v1886
        %v1888 = vpop.f32.mrb[0].mxu0
        %1889 = vmatprep.mubr.f32.mxu0 0.0
        %1890 = vmatmul.mubr.f32.gmra.mrb[0].mxu0 %v1812
        %v1891 = vpop.f32.mrb[0].mxu0
        %v1892 = vadd.f32 0.0, %v1891
        %v1893 = vpop.f32.mrb[0].mxu0
        %1894 = vmatprep.mubr.f32.mxu0 0.0
        %1895 = vmatmul.mubr.f32.gmra.mrb[0].mxu0 %v1815
        %v1896 = vpop.f32.mrb[0].mxu0
        %v1897 = vadd.f32 0.0, %v1896
        %v1898 = vpop.f32.mrb[0].mxu0
        %1899 = vmatprep.mubr.f32.mxu0 0.0
        %1900 = vmatmul.mubr.f32.gmra.mrb[0].mxu0 %v1818
        %v1901 = vpop.f32.mrb[0].mxu0
        %v1902 = vadd.f32 0.0, %v1901
        %v1903 = vpop.f32.mrb[0].mxu0
        %1904 = vdwg.mxu0
        %1907 = vrot.lane.b32.xlu0 %v655, 64
        %v1908 = vpop.permute.xlu0 %1907
        %1909 = vrot.lane.b32.xlu0 %v730, 64
        %v1910 = vpop.permute.xlu0 %1909
        %1911 = vrot.lane.b32.xlu0 %v661, 64
        %v1912 = vpop.permute.xlu0 %1911
        %1913 = vrot.lane.b32.xlu0 %v735, 64
        %v1914 = vpop.permute.xlu0 %1913
        %vm1915 = vcmask 523264
        %v1916 = vsel %vm1915, %v1908, %v1910
        %v1917 = vsel %vm1915, %v1912, %v1914
        %v1920 = vadd.f32 %v1887, %v1916
        %v1921 = vadd.f32 %v1892, %v1916
        %v1922 = vadd.f32 %v1897, %v1917
        %v1923 = vadd.f32 %v1902, %v1917
        %1926 = vrot.lane.b32.xlu0 %v1920, 96
        %v1927 = vpop.permute.xlu0 %1926
        %1928 = vrot.lane.b32.xlu0 %v1921, 96
        %v1929 = vpop.permute.xlu0 %1928
        %v1930 = vsel %vm740, %v1920, 0
        %v1932 = vsel %vm740, %v1921, 0
        %v1934 = vsel %vm740, %v1927, 0
        %v1936 = vsel %vm740, %v1929, 0
        %1938 = vmatprep.subr.mxu0 0.0
        %1939 = vmatpush1.xpose.msra.mxu0 %v1934
        %1940 = vmatprep.subr.mxu0 0.0
        %1941 = vmatpush1.xpose.msra.mxu0 %v1936
        %1942 = vmatprep.subr.mxu0 0.0
        %1943 = vmatpush1.xpose.msra.mxu0 0.0
        %1944 = vmatprep.subr.mxu0 0.0
        %1945 = vmatpush1.xpose.msra.mxu0 0.0
        %1946 = vmatprep.subr.mxu0 0.0
        %1947 = vmatpush1.xpose.msra.mxu0 0.0
        %1948 = vmatprep.subr.mxu0 0.0
        %1949 = vmatpush1.xpose.msra.mxu0 0.0
        %1950 = vmatprep.subr.mxu0 0.0
        %1951 = vmatpush1.xpose.msra.mxu0 0.0
        %1952 = vmatprep.subr.mxu0 0.0
        %1953 = vmatpush1.xpose.msra.mxu0 0.0
        %1954 = vmatprep.subr.mxu0 0.0
        %1955 = vmatpush1.xpose.msra.mxu0 0.0
        %1956 = vmatprep.subr.mxu0 0.0
        %1957 = vmatpush1.xpose.msra.mxu0 0.0
        %1958 = vmatprep.subr.mxu0 0.0
        %1959 = vmatpush1.xpose.msra.mxu0 0.0
        %1960 = vmatprep.subr.mxu0 0.0
        %1961 = vmatpush1.xpose.msra.mxu0 0.0
        %1962 = vmatprep.subr.mxu0 0.0
        %1963 = vmatpush1.xpose.msra.mxu0 0.0
        %1964 = vmatprep.subr.mxu0 0.0
        %1965 = vmatpush1.xpose.msra.mxu0 0.0
        %1966 = vmatprep.subr.mxu0 0.0
        %1967 = vmatpush1.xpose.msra.mxu0 0.0
        %1968 = vmatprep.subr.mxu0 0.0
        %1969 = vmatpush1.xpose.msra.mxu0 0.0
        %1970 = vmatprep.subr.mxu0 0.0
        %1971 = vmatpush1.xpose.msra.mxu0 0.0
        %1972 = vmatprep.subr.mxu0 0.0
        %1973 = vmatpush1.xpose.msra.mxu0 0.0
        %1974 = vmatprep.subr.mxu0 0.0
        %1975 = vmatpush1.xpose.msra.mxu0 0.0
        %1976 = vmatprep.subr.mxu0 0.0
        %1977 = vmatpush1.xpose.msra.mxu0 0.0
        %1978 = vmatprep.subr.mxu0 0.0
        %1979 = vmatpush1.xpose.msra.mxu0 0.0
        %1980 = vmatprep.subr.mxu0 0.0
        %1981 = vmatpush1.xpose.msra.mxu0 0.0
        %1982 = vmatprep.subr.mxu0 0.0
        %1983 = vmatpush1.xpose.msra.mxu0 0.0
        %1984 = vmatprep.subr.mxu0 0.0
        %1985 = vmatpush1.xpose.msra.mxu0 0.0
        %1986 = vmatprep.subr.mxu0 0.0
        %1987 = vmatpush1.xpose.msra.mxu0 0.0
        %1988 = vmatprep.subr.mxu0 0.0
        %1989 = vmatpush1.xpose.msra.mxu0 0.0
        %1990 = vmatprep.subr.mxu0 0.0
        %1991 = vmatpush1.xpose.msra.mxu0 0.0
        %1992 = vmatprep.subr.mxu0 0.0
        %1993 = vmatpush1.xpose.msra.mxu0 0.0
        %1994 = vmatprep.subr.mxu0 0.0
        %1995 = vmatpush1.xpose.msra.mxu0 0.0
        %1996 = vmatprep.subr.mxu0 0.0
        %1997 = vmatpush1.xpose.msra.mxu0 0.0
        %1998 = vmatprep.subr.mxu0 0.0
        %1999 = vmatpush1.xpose.msra.mxu0 0.0
        %2000 = vmatprep.subr.mxu0 0.0
        %2001 = vmatpush1.xpose.msra.mxu0 0.0
        %2002 = vmatprep.mubr.f32.mxu0 0.0
        %2003 = vmatmul.mubr.f32.gmra.mrb[0].mxu0 %v1930
        %v2004 = vpop.f32.mrb[0].mxu0
        %v2005 = vadd.f32 %v540, %v2004
        %v2006 = vpop.f32.mrb[0].mxu0
        %2007 = vmatprep.mubr.f32.mxu0 0.0
        %2008 = vmatmul.mubr.f32.gmra.mrb[0].mxu0 %v1932
        %v2009 = vpop.f32.mrb[0].mxu0
        %v2010 = vadd.f32 %v541, %v2009
        %v2011 = vpop.f32.mrb[0].mxu0
        %2012 = vdwg.mxu0
        %2015 = vrot.lane.b32.xlu0 %v1922, 96
        %v2016 = vpop.permute.xlu0 %2015
        %2017 = vrot.lane.b32.xlu0 %v1923, 96
        %v2018 = vpop.permute.xlu0 %2017
        %v2019 = vsel %vm740, %v1922, 0
        %v2021 = vsel %vm740, %v1923, 0
        %v2023 = vsel %vm740, %v2016, 0
        %v2025 = vsel %vm740, %v2018, 0
        %2027 = vmatprep.subr.mxu0 0.0
        %2028 = vmatpush1.xpose.msra.mxu0 %v2023
        %2029 = vmatprep.subr.mxu0 0.0
        %2030 = vmatpush1.xpose.msra.mxu0 %v2025
        %2031 = vmatprep.subr.mxu0 0.0
        %2032 = vmatpush1.xpose.msra.mxu0 0.0
        %2033 = vmatprep.subr.mxu0 0.0
        %2034 = vmatpush1.xpose.msra.mxu0 0.0
        %2035 = vmatprep.subr.mxu0 0.0
        %2036 = vmatpush1.xpose.msra.mxu0 0.0
        %2037 = vmatprep.subr.mxu0 0.0
        %2038 = vmatpush1.xpose.msra.mxu0 0.0
        %2039 = vmatprep.subr.mxu0 0.0
        %2040 = vmatpush1.xpose.msra.mxu0 0.0
        %2041 = vmatprep.subr.mxu0 0.0
        %2042 = vmatpush1.xpose.msra.mxu0 0.0
        %2043 = vmatprep.subr.mxu0 0.0
        %2044 = vmatpush1.xpose.msra.mxu0 0.0
        %2045 = vmatprep.subr.mxu0 0.0
        %2046 = vmatpush1.xpose.msra.mxu0 0.0
        %2047 = vmatprep.subr.mxu0 0.0
        %2048 = vmatpush1.xpose.msra.mxu0 0.0
        %2049 = vmatprep.subr.mxu0 0.0
        %2050 = vmatpush1.xpose.msra.mxu0 0.0
        %2051 = vmatprep.subr.mxu0 0.0
        %2052 = vmatpush1.xpose.msra.mxu0 0.0
        %2053 = vmatprep.subr.mxu0 0.0
        %2054 = vmatpush1.xpose.msra.mxu0 0.0
        %2055 = vmatprep.subr.mxu0 0.0
        %2056 = vmatpush1.xpose.msra.mxu0 0.0
        %2057 = vmatprep.subr.mxu0 0.0
        %2058 = vmatpush1.xpose.msra.mxu0 0.0
        %2059 = vmatprep.subr.mxu0 0.0
        %2060 = vmatpush1.xpose.msra.mxu0 0.0
        %2061 = vmatprep.subr.mxu0 0.0
        %2062 = vmatpush1.xpose.msra.mxu0 0.0
        %2063 = vmatprep.subr.mxu0 0.0
        %2064 = vmatpush1.xpose.msra.mxu0 0.0
        %2065 = vmatprep.subr.mxu0 0.0
        %2066 = vmatpush1.xpose.msra.mxu0 0.0
        %2067 = vmatprep.subr.mxu0 0.0
        %2068 = vmatpush1.xpose.msra.mxu0 0.0
        %2069 = vmatprep.subr.mxu0 0.0
        %2070 = vmatpush1.xpose.msra.mxu0 0.0
        %2071 = vmatprep.subr.mxu0 0.0
        %2072 = vmatpush1.xpose.msra.mxu0 0.0
        %2073 = vmatprep.subr.mxu0 0.0
        %2074 = vmatpush1.xpose.msra.mxu0 0.0
        %2075 = vmatprep.subr.mxu0 0.0
        %2076 = vmatpush1.xpose.msra.mxu0 0.0
        %2077 = vmatprep.subr.mxu0 0.0
        %2078 = vmatpush1.xpose.msra.mxu0 0.0
        %2079 = vmatprep.subr.mxu0 0.0
        %2080 = vmatpush1.xpose.msra.mxu0 0.0
        %2081 = vmatprep.subr.mxu0 0.0
        %2082 = vmatpush1.xpose.msra.mxu0 0.0
        %2083 = vmatprep.subr.mxu0 0.0
        %2084 = vmatpush1.xpose.msra.mxu0 0.0
        %2085 = vmatprep.subr.mxu0 0.0
        %2086 = vmatpush1.xpose.msra.mxu0 0.0
        %2087 = vmatprep.subr.mxu0 0.0
        %2088 = vmatpush1.xpose.msra.mxu0 0.0
        %2089 = vmatprep.subr.mxu0 0.0
        %2090 = vmatpush1.xpose.msra.mxu0 0.0
        %2091 = vmatprep.mubr.f32.mxu0 0.0
        %2092 = vmatmul.mubr.f32.gmra.mrb[0].mxu0 %v2019
        %v2093 = vpop.f32.mrb[0].mxu0
        %v2094 = vadd.f32 %v542, %v2093
        %v2095 = vpop.f32.mrb[0].mxu0
        %2096 = vmatprep.mubr.f32.mxu0 0.0
        %2097 = vmatmul.mubr.f32.gmra.mrb[0].mxu0 %v2021
        %v2098 = vpop.f32.mrb[0].mxu0
        %v2099 = vadd.f32 %v543, %v2098
        %v2100 = vpop.f32.mrb[0].mxu0
        %2101 = vdwg.mxu0
        %v2102 = vsel %vm1032, %v2005, -inf
        %2103 = vmax.xlane.f32.xlu0 %v2102
        %v2104 = vpop.xlane.xlu0 %2103
        %v2105 = vsel %vm1032, %v2010, -inf
        %2106 = vmax.xlane.f32.xlu0 %v2105
        %v2107 = vpop.xlane.xlu0 %2106
        %v2108 = vsel %vm1032, %v2094, -inf
        %2109 = vmax.xlane.f32.xlu0 %v2108
        %v2110 = vpop.xlane.xlu0 %2109
        %v2111 = vsel %vm1032, %v2099, -inf
        %2112 = vmax.xlane.f32.xlu0 %v2111
        %v2113 = vpop.xlane.xlu0 %2112
        %v2114 = vsub.f32 %v2005, %v2104
        %v2115 = vsub.f32 %v2010, %v2107
        %v2116 = vsub.f32 %v2094, %v2110
        %v2117 = vsub.f32 %v2099, %v2113
        %v2118 = vmul.f32 %v2114, 1.442695
        %v2119 = vpow.pop %v2118
        %v2120 = vmul.f32 %v2115, 1.442695
        %v2121 = vpow.pop %v2120
        %v2122 = vmul.f32 %v2116, 1.442695
        %v2123 = vpow.pop %v2122
        %v2124 = vmul.f32 %v2117, 1.442695
        %v2125 = vpow.pop %v2124
        %v2126 = vsel %vm1032, %v2119, 0.0
        %2127 = vadd.xlane.f32.xlu0 %v2126
        %v2128 = vpop.xlane.xlu0 %2127
        %v2129 = vsel %vm1032, %v2121, 0.0
        %2130 = vadd.xlane.f32.xlu0 %v2129
        %v2131 = vpop.xlane.xlu0 %2130
        %v2132 = vsel %vm1032, %v2123, 0.0
        %2133 = vadd.xlane.f32.xlu0 %v2132
        %v2134 = vpop.xlane.xlu0 %2133
        %v2135 = vsel %vm1032, %v2125, 0.0
        %2136 = vadd.xlane.f32.xlu0 %v2135
        %v2137 = vpop.xlane.xlu0 %2136
        %v2138 = vrcp.pop %v2128
        %v2139 = vmul.f32 %v2119, %v2138
        %v2140 = vrcp.pop %v2131
        %v2141 = vmul.f32 %v2121, %v2140
        %v2142 = vrcp.pop %v2134
        %v2143 = vmul.f32 %v2123, %v2142
        %v2144 = vrcp.pop %v2137
        %v2145 = vmul.f32 %v2125, %v2144
        %2146 = vrot.lane.b32.xlu0 %v1920, 64
        %v2147 = vpop.permute.xlu0 %2146
        %2148 = vrot.lane.b32.xlu0 %v1921, 64
        %v2149 = vpop.permute.xlu0 %2148
        %v2153 = vsel %vm1032, %v2139, 0
        %v2156 = vsel %vm1032, %v2141, 0
        %2158 = vmatprep.subr.mxu0 0.0
        %2159 = vmatpush1.msra.mxu0 %v2147
        %2160 = vmatprep.subr.mxu0 0.0
        %2161 = vmatpush1.msra.mxu0 %v2149
        %2162 = vmatprep.subr.mxu0 0.0
        %2163 = vmatpush1.msra.mxu0 0.0
        %2164 = vmatprep.subr.mxu0 0.0
        %2165 = vmatpush1.msra.mxu0 0.0
        %2166 = vmatprep.subr.mxu0 0.0
        %2167 = vmatpush1.msra.mxu0 0.0
        %2168 = vmatprep.subr.mxu0 0.0
        %2169 = vmatpush1.msra.mxu0 0.0
        %2170 = vmatprep.subr.mxu0 0.0
        %2171 = vmatpush1.msra.mxu0 0.0
        %2172 = vmatprep.subr.mxu0 0.0
        %2173 = vmatpush1.msra.mxu0 0.0
        %2174 = vmatprep.subr.mxu0 0.0
        %2175 = vmatpush1.msra.mxu0 0.0
        %2176 = vmatprep.subr.mxu0 0.0
        %2177 = vmatpush1.msra.mxu0 0.0
        %2178 = vmatprep.subr.mxu0 0.0
        %2179 = vmatpush1.msra.mxu0 0.0
        %2180 = vmatprep.subr.mxu0 0.0
        %2181 = vmatpush1.msra.mxu0 0.0
        %2182 = vmatprep.subr.mxu0 0.0
        %2183 = vmatpush1.msra.mxu0 0.0
        %2184 = vmatprep.subr.mxu0 0.0
        %2185 = vmatpush1.msra.mxu0 0.0
        %2186 = vmatprep.subr.mxu0 0.0
        %2187 = vmatpush1.msra.mxu0 0.0
        %2188 = vmatprep.subr.mxu0 0.0
        %2189 = vmatpush1.msra.mxu0 0.0
        %2190 = vmatprep.subr.mxu0 0.0
        %2191 = vmatpush1.msra.mxu0 0.0
        %2192 = vmatprep.subr.mxu0 0.0
        %2193 = vmatpush1.msra.mxu0 0.0
        %2194 = vmatprep.subr.mxu0 0.0
        %2195 = vmatpush1.msra.mxu0 0.0
        %2196 = vmatprep.subr.mxu0 0.0
        %2197 = vmatpush1.msra.mxu0 0.0
        %2198 = vmatprep.subr.mxu0 0.0
        %2199 = vmatpush1.msra.mxu0 0.0
        %2200 = vmatprep.subr.mxu0 0.0
        %2201 = vmatpush1.msra.mxu0 0.0
        %2202 = vmatprep.subr.mxu0 0.0
        %2203 = vmatpush1.msra.mxu0 0.0
        %2204 = vmatprep.subr.mxu0 0.0
        %2205 = vmatpush1.msra.mxu0 0.0
        %2206 = vmatprep.subr.mxu0 0.0
        %2207 = vmatpush1.msra.mxu0 0.0
        %2208 = vmatprep.subr.mxu0 0.0
        %2209 = vmatpush1.msra.mxu0 0.0
        %2210 = vmatprep.subr.mxu0 0.0
        %2211 = vmatpush1.msra.mxu0 0.0
        %2212 = vmatprep.subr.mxu0 0.0
        %2213 = vmatpush1.msra.mxu0 0.0
        %2214 = vmatprep.subr.mxu0 0.0
        %2215 = vmatpush1.msra.mxu0 0.0
        %2216 = vmatprep.subr.mxu0 0.0
        %2217 = vmatpush1.msra.mxu0 0.0
        %2218 = vmatprep.subr.mxu0 0.0
        %2219 = vmatpush1.msra.mxu0 0.0
        %2220 = vmatprep.subr.mxu0 0.0
        %2221 = vmatpush1.msra.mxu0 0.0
        %2222 = vmatprep.mubr.f32.mxu0 0.0
        %2223 = vmatmul.mubr.f32.gmra.mrb[0].mxu0 %v2153
        %v2224 = vpop.f32.mrb[0].mxu0
        %v2225 = vadd.f32 0.0, %v2224
        %v2226 = vpop.f32.mrb[0].mxu0
        %2227 = vmatprep.mubr.f32.mxu0 0.0
        %2228 = vmatmul.mubr.f32.gmra.mrb[0].mxu0 %v2156
        %v2229 = vpop.f32.mrb[0].mxu0
        %v2230 = vadd.f32 0.0, %v2229
        %v2231 = vpop.f32.mrb[0].mxu0
        %2232 = vdwg.mxu0
        %2233 = vrot.lane.b32.xlu0 %v1922, 64
        %v2234 = vpop.permute.xlu0 %2233
        %2235 = vrot.lane.b32.xlu0 %v1923, 64
        %v2236 = vpop.permute.xlu0 %2235
        %v2240 = vsel %vm1032, %v2143, 0
        %v2243 = vsel %vm1032, %v2145, 0
        %2245 = vmatprep.subr.mxu0 0.0
        %2246 = vmatpush1.msra.mxu0 %v2234
        %2247 = vmatprep.subr.mxu0 0.0
        %2248 = vmatpush1.msra.mxu0 %v2236
        %2249 = vmatprep.subr.mxu0 0.0
        %2250 = vmatpush1.msra.mxu0 0.0
        %2251 = vmatprep.subr.mxu0 0.0
        %2252 = vmatpush1.msra.mxu0 0.0
        %2253 = vmatprep.subr.mxu0 0.0
        %2254 = vmatpush1.msra.mxu0 0.0
        %2255 = vmatprep.subr.mxu0 0.0
        %2256 = vmatpush1.msra.mxu0 0.0
        %2257 = vmatprep.subr.mxu0 0.0
        %2258 = vmatpush1.msra.mxu0 0.0
        %2259 = vmatprep.subr.mxu0 0.0
        %2260 = vmatpush1.msra.mxu0 0.0
        %2261 = vmatprep.subr.mxu0 0.0
        %2262 = vmatpush1.msra.mxu0 0.0
        %2263 = vmatprep.subr.mxu0 0.0
        %2264 = vmatpush1.msra.mxu0 0.0
        %2265 = vmatprep.subr.mxu0 0.0
        %2266 = vmatpush1.msra.mxu0 0.0
        %2267 = vmatprep.subr.mxu0 0.0
        %2268 = vmatpush1.msra.mxu0 0.0
        %2269 = vmatprep.subr.mxu0 0.0
        %2270 = vmatpush1.msra.mxu0 0.0
        %2271 = vmatprep.subr.mxu0 0.0
        %2272 = vmatpush1.msra.mxu0 0.0
        %2273 = vmatprep.subr.mxu0 0.0
        %2274 = vmatpush1.msra.mxu0 0.0
        %2275 = vmatprep.subr.mxu0 0.0
        %2276 = vmatpush1.msra.mxu0 0.0
        %2277 = vmatprep.subr.mxu0 0.0
        %2278 = vmatpush1.msra.mxu0 0.0
        %2279 = vmatprep.subr.mxu0 0.0
        %2280 = vmatpush1.msra.mxu0 0.0
        %2281 = vmatprep.subr.mxu0 0.0
        %2282 = vmatpush1.msra.mxu0 0.0
        %2283 = vmatprep.subr.mxu0 0.0
        %2284 = vmatpush1.msra.mxu0 0.0
        %2285 = vmatprep.subr.mxu0 0.0
        %2286 = vmatpush1.msra.mxu0 0.0
        %2287 = vmatprep.subr.mxu0 0.0
        %2288 = vmatpush1.msra.mxu0 0.0
        %2289 = vmatprep.subr.mxu0 0.0
        %2290 = vmatpush1.msra.mxu0 0.0
        %2291 = vmatprep.subr.mxu0 0.0
        %2292 = vmatpush1.msra.mxu0 0.0
        %2293 = vmatprep.subr.mxu0 0.0
        %2294 = vmatpush1.msra.mxu0 0.0
        %2295 = vmatprep.subr.mxu0 0.0
        %2296 = vmatpush1.msra.mxu0 0.0
        %2297 = vmatprep.subr.mxu0 0.0
        %2298 = vmatpush1.msra.mxu0 0.0
        %2299 = vmatprep.subr.mxu0 0.0
        %2300 = vmatpush1.msra.mxu0 0.0
        %2301 = vmatprep.subr.mxu0 0.0
        %2302 = vmatpush1.msra.mxu0 0.0
        %2303 = vmatprep.subr.mxu0 0.0
        %2304 = vmatpush1.msra.mxu0 0.0
        %2305 = vmatprep.subr.mxu0 0.0
        %2306 = vmatpush1.msra.mxu0 0.0
        %2307 = vmatprep.subr.mxu0 0.0
        %2308 = vmatpush1.msra.mxu0 0.0
        %2309 = vmatprep.mubr.f32.mxu0 0.0
        %2310 = vmatmul.mubr.f32.gmra.mrb[0].mxu0 %v2240
        %v2311 = vpop.f32.mrb[0].mxu0
        %v2312 = vadd.f32 0.0, %v2311
        %v2313 = vpop.f32.mrb[0].mxu0
        %2314 = vmatprep.mubr.f32.mxu0 0.0
        %2315 = vmatmul.mubr.f32.gmra.mrb[0].mxu0 %v2243
        %v2316 = vpop.f32.mrb[0].mxu0
        %v2317 = vadd.f32 0.0, %v2316
        %v2318 = vpop.f32.mrb[0].mxu0
        %2319 = vdwg.mxu0
        %v2320 = vmul.f32 %v2230, %v533
        %v2321 = vmul.f32 %v2317, %v538
        %v2322 = vtanh.pop %v2320
        %v2323 = vtanh.pop %v2321
        %v2324 = vadd.f32 %v2322, %v1800
        %v2325 = vadd.f32 %v2323, %v1802
        %2326 = vst.msk [vmem:[#allocation2] sm:$0xff] %vm740, %v2225
        %2327 = vst.msk [vmem:[#allocation2 + $0x10] sm:$0xff] %vm740, %v2312
        %2328 = vst.msk [vmem:[#allocation2 + $0x8] sm:$0xff] %vm740, %v2324
        %2329 = vst.msk [vmem:[#allocation2 + $0x18] sm:$0xff] %vm740, %v2325
        %v2330 = vld [vmem:[#allocation2] sm:$0xff]
        %v2331 = vld [vmem:[#allocation2 + $0x8] sm:$0xff]
        %v2332 = vld [vmem:[#allocation2 + $0x10] sm:$0xff]
        %v2333 = vld [vmem:[#allocation2 + $0x18] sm:$0xff]
        %s2334 = scalar_lea.vmem [#allocation8], 96
        %v2335 = vld [vmem:[%s2334] sm:$0xff]
        %v2336 = vld [vmem:[%s2334 + $0x8] sm:$0xff]
        %v2337 = vld [vmem:[%s2334 + $0x10] sm:$0xff]
        %v2338 = vld [vmem:[%s2334 + $0x18] sm:$0xff]
        %v2340 = vsel %vm740, %v2330, 0
        %v2343 = vsel %vm740, %v2331, 0
        %v2346 = vsel %vm740, %v2332, 0
        %v2349 = vsel %vm740, %v2333, 0
        %2351 = vmatprep.subr.mxu0 0.0
        %2352 = vmatpush1.msra.mxu0 %v2335
        %2353 = vmatprep.subr.mxu0 0.0
        %2354 = vmatpush1.msra.mxu0 %v2336
        %2355 = vmatprep.subr.mxu0 0.0
        %2356 = vmatpush1.msra.mxu0 %v2337
        %2357 = vmatprep.subr.mxu0 0.0
        %2358 = vmatpush1.msra.mxu0 %v2338
        %2359 = vmatprep.subr.mxu0 0.0
        %2360 = vmatpush1.msra.mxu0 0.0
        %2361 = vmatprep.subr.mxu0 0.0
        %2362 = vmatpush1.msra.mxu0 0.0
        %2363 = vmatprep.subr.mxu0 0.0
        %2364 = vmatpush1.msra.mxu0 0.0
        %2365 = vmatprep.subr.mxu0 0.0
        %2366 = vmatpush1.msra.mxu0 0.0
        %2367 = vmatprep.subr.mxu0 0.0
        %2368 = vmatpush1.msra.mxu0 0.0
        %2369 = vmatprep.subr.mxu0 0.0
        %2370 = vmatpush1.msra.mxu0 0.0
        %2371 = vmatprep.subr.mxu0 0.0
        %2372 = vmatpush1.msra.mxu0 0.0
        %2373 = vmatprep.subr.mxu0 0.0
        %2374 = vmatpush1.msra.mxu0 0.0
        %2375 = vmatprep.subr.mxu0 0.0
        %2376 = vmatpush1.msra.mxu0 0.0
        %2377 = vmatprep.subr.mxu0 0.0
        %2378 = vmatpush1.msra.mxu0 0.0
        %2379 = vmatprep.subr.mxu0 0.0
        %2380 = vmatpush1.msra.mxu0 0.0
        %2381 = vmatprep.subr.mxu0 0.0
        %2382 = vmatpush1.msra.mxu0 0.0
        %2383 = vmatprep.subr.mxu0 0.0
        %2384 = vmatpush1.msra.mxu0 0.0
        %2385 = vmatprep.subr.mxu0 0.0
        %2386 = vmatpush1.msra.mxu0 0.0
        %2387 = vmatprep.subr.mxu0 0.0
        %2388 = vmatpush1.msra.mxu0 0.0
        %2389 = vmatprep.subr.mxu0 0.0
        %2390 = vmatpush1.msra.mxu0 0.0
        %2391 = vmatprep.subr.mxu0 0.0
        %2392 = vmatpush1.msra.mxu0 0.0
        %2393 = vmatprep.subr.mxu0 0.0
        %2394 = vmatpush1.msra.mxu0 0.0
        %2395 = vmatprep.subr.mxu0 0.0
        %2396 = vmatpush1.msra.mxu0 0.0
        %2397 = vmatprep.subr.mxu0 0.0
        %2398 = vmatpush1.msra.mxu0 0.0
        %2399 = vmatprep.subr.mxu0 0.0
        %2400 = vmatpush1.msra.mxu0 0.0
        %2401 = vmatprep.subr.mxu0 0.0
        %2402 = vmatpush1.msra.mxu0 0.0
        %2403 = vmatprep.subr.mxu0 0.0
        %2404 = vmatpush1.msra.mxu0 0.0
        %2405 = vmatprep.subr.mxu0 0.0
        %2406 = vmatpush1.msra.mxu0 0.0
        %2407 = vmatprep.subr.mxu0 0.0
        %2408 = vmatpush1.msra.mxu0 0.0
        %2409 = vmatprep.subr.mxu0 0.0
        %2410 = vmatpush1.msra.mxu0 0.0
        %2411 = vmatprep.subr.mxu0 0.0
        %2412 = vmatpush1.msra.mxu0 0.0
        %2413 = vmatprep.subr.mxu0 0.0
        %2414 = vmatpush1.msra.mxu0 0.0
        %2415 = vmatprep.mubr.f32.mxu0 0.0
        %2416 = vmatmul.mubr.f32.gmra.mrb[0].mxu0 %v2340
        %v2417 = vpop.f32.mrb[0].mxu0
        %v2418 = vadd.f32 0.0, %v2417
        %v2419 = vpop.f32.mrb[0].mxu0
        %2420 = vmatprep.mubr.f32.mxu0 0.0
        %2421 = vmatmul.mubr.f32.gmra.mrb[0].mxu0 %v2343
        %v2422 = vpop.f32.mrb[0].mxu0
        %v2423 = vadd.f32 0.0, %v2422
        %v2424 = vpop.f32.mrb[0].mxu0
        %2425 = vmatprep.mubr.f32.mxu0 0.0
        %2426 = vmatmul.mubr.f32.gmra.mrb[0].mxu0 %v2346
        %v2427 = vpop.f32.mrb[0].mxu0
        %v2428 = vadd.f32 0.0, %v2427
        %v2429 = vpop.f32.mrb[0].mxu0
        %2430 = vmatprep.mubr.f32.mxu0 0.0
        %2431 = vmatmul.mubr.f32.gmra.mrb[0].mxu0 %v2349
        %v2432 = vpop.f32.mrb[0].mxu0
        %v2433 = vadd.f32 0.0, %v2432
        %v2434 = vpop.f32.mrb[0].mxu0
        %2435 = vdwg.mxu0
        %2436 = vrot.lane.b32.xlu0 %v730, 96
        %v2437 = vpop.permute.xlu0 %2436
        %2438 = vrot.lane.b32.xlu0 %v735, 96
        %v2439 = vpop.permute.xlu0 %2438
        %v2442 = vadd.f32 %v2418, %v2437
        %v2443 = vadd.f32 %v2423, %v2437
        %v2444 = vadd.f32 %v2428, %v2439
        %v2445 = vadd.f32 %v2433, %v2439
        %2448 = vrot.lane.b32.xlu0 %v2442, 96
        %v2449 = vpop.permute.xlu0 %2448
        %2450 = vrot.lane.b32.xlu0 %v2443, 96
        %v2451 = vpop.permute.xlu0 %2450
        %v2452 = vsel %vm740, %v2442, 0
        %v2454 = vsel %vm740, %v2443, 0
        %v2456 = vsel %vm740, %v2449, 0
        %v2458 = vsel %vm740, %v2451, 0
        %2460 = vmatprep.subr.mxu0 0.0
        %2461 = vmatpush1.xpose.msra.mxu0 %v2456
        %2462 = vmatprep.subr.mxu0 0.0
        %2463 = vmatpush1.xpose.msra.mxu0 %v2458
        %2464 = vmatprep.subr.mxu0 0.0
        %2465 = vmatpush1.xpose.msra.mxu0 0.0
        %2466 = vmatprep.subr.mxu0 0.0
        %2467 = vmatpush1.xpose.msra.mxu0 0.0
        %2468 = vmatprep.subr.mxu0 0.0
        %2469 = vmatpush1.xpose.msra.mxu0 0.0
        %2470 = vmatprep.subr.mxu0 0.0
        %2471 = vmatpush1.xpose.msra.mxu0 0.0
        %2472 = vmatprep.subr.mxu0 0.0
        %2473 = vmatpush1.xpose.msra.mxu0 0.0
        %2474 = vmatprep.subr.mxu0 0.0
        %2475 = vmatpush1.xpose.msra.mxu0 0.0
        %2476 = vmatprep.subr.mxu0 0.0
        %2477 = vmatpush1.xpose.msra.mxu0 0.0
        %2478 = vmatprep.subr.mxu0 0.0
        %2479 = vmatpush1.xpose.msra.mxu0 0.0
        %2480 = vmatprep.subr.mxu0 0.0
        %2481 = vmatpush1.xpose.msra.mxu0 0.0
        %2482 = vmatprep.subr.mxu0 0.0
        %2483 = vmatpush1.xpose.msra.mxu0 0.0
        %2484 = vmatprep.subr.mxu0 0.0
        %2485 = vmatpush1.xpose.msra.mxu0 0.0
        %2486 = vmatprep.subr.mxu0 0.0
        %2487 = vmatpush1.xpose.msra.mxu0 0.0
        %2488 = vmatprep.subr.mxu0 0.0
        %2489 = vmatpush1.xpose.msra.mxu0 0.0
        %2490 = vmatprep.subr.mxu0 0.0
        %2491 = vmatpush1.xpose.msra.mxu0 0.0
        %2492 = vmatprep.subr.mxu0 0.0
        %2493 = vmatpush1.xpose.msra.mxu0 0.0
        %2494 = vmatprep.subr.mxu0 0.0
        %2495 = vmatpush1.xpose.msra.mxu0 0.0
        %2496 = vmatprep.subr.mxu0 0.0
        %2497 = vmatpush1.xpose.msra.mxu0 0.0
        %2498 = vmatprep.subr.mxu0 0.0
        %2499 = vmatpush1.xpose.msra.mxu0 0.0
        %2500 = vmatprep.subr.mxu0 0.0
        %2501 = vmatpush1.xpose.msra.mxu0 0.0
        %2502 = vmatprep.subr.mxu0 0.0
        %2503 = vmatpush1.xpose.msra.mxu0 0.0
        %2504 = vmatprep.subr.mxu0 0.0
        %2505 = vmatpush1.xpose.msra.mxu0 0.0
        %2506 = vmatprep.subr.mxu0 0.0
        %2507 = vmatpush1.xpose.msra.mxu0 0.0
        %2508 = vmatprep.subr.mxu0 0.0
        %2509 = vmatpush1.xpose.msra.mxu0 0.0
        %2510 = vmatprep.subr.mxu0 0.0
        %2511 = vmatpush1.xpose.msra.mxu0 0.0
        %2512 = vmatprep.subr.mxu0 0.0
        %2513 = vmatpush1.xpose.msra.mxu0 0.0
        %2514 = vmatprep.subr.mxu0 0.0
        %2515 = vmatpush1.xpose.msra.mxu0 0.0
        %2516 = vmatprep.subr.mxu0 0.0
        %2517 = vmatpush1.xpose.msra.mxu0 0.0
        %2518 = vmatprep.subr.mxu0 0.0
        %2519 = vmatpush1.xpose.msra.mxu0 0.0
        %2520 = vmatprep.subr.mxu0 0.0
        %2521 = vmatpush1.xpose.msra.mxu0 0.0
        %2522 = vmatprep.subr.mxu0 0.0
        %2523 = vmatpush1.xpose.msra.mxu0 0.0
        %2524 = vmatprep.mubr.f32.mxu0 0.0
        %2525 = vmatmul.mubr.f32.gmra.mrb[0].mxu0 %v2452
        %v2526 = vpop.f32.mrb[0].mxu0
        %v2527 = vadd.f32 %v540, %v2526
        %v2528 = vpop.f32.mrb[0].mxu0
        %2529 = vmatprep.mubr.f32.mxu0 0.0
        %2530 = vmatmul.mubr.f32.gmra.mrb[0].mxu0 %v2454
        %v2531 = vpop.f32.mrb[0].mxu0
        %v2532 = vadd.f32 %v541, %v2531
        %v2533 = vpop.f32.mrb[0].mxu0
        %2534 = vdwg.mxu0
        %2537 = vrot.lane.b32.xlu0 %v2444, 96
        %v2538 = vpop.permute.xlu0 %2537
        %2539 = vrot.lane.b32.xlu0 %v2445, 96
        %v2540 = vpop.permute.xlu0 %2539
        %v2541 = vsel %vm740, %v2444, 0
        %v2543 = vsel %vm740, %v2445, 0
        %v2545 = vsel %vm740, %v2538, 0
        %v2547 = vsel %vm740, %v2540, 0
        %2549 = vmatprep.subr.mxu0 0.0
        %2550 = vmatpush1.xpose.msra.mxu0 %v2545
        %2551 = vmatprep.subr.mxu0 0.0
        %2552 = vmatpush1.xpose.msra.mxu0 %v2547
        %2553 = vmatprep.subr.mxu0 0.0
        %2554 = vmatpush1.xpose.msra.mxu0 0.0
        %2555 = vmatprep.subr.mxu0 0.0
        %2556 = vmatpush1.xpose.msra.mxu0 0.0
        %2557 = vmatprep.subr.mxu0 0.0
        %2558 = vmatpush1.xpose.msra.mxu0 0.0
        %2559 = vmatprep.subr.mxu0 0.0
        %2560 = vmatpush1.xpose.msra.mxu0 0.0
        %2561 = vmatprep.subr.mxu0 0.0
        %2562 = vmatpush1.xpose.msra.mxu0 0.0
        %2563 = vmatprep.subr.mxu0 0.0
        %2564 = vmatpush1.xpose.msra.mxu0 0.0
        %2565 = vmatprep.subr.mxu0 0.0
        %2566 = vmatpush1.xpose.msra.mxu0 0.0
        %2567 = vmatprep.subr.mxu0 0.0
        %2568 = vmatpush1.xpose.msra.mxu0 0.0
        %2569 = vmatprep.subr.mxu0 0.0
        %2570 = vmatpush1.xpose.msra.mxu0 0.0
        %2571 = vmatprep.subr.mxu0 0.0
        %2572 = vmatpush1.xpose.msra.mxu0 0.0
        %2573 = vmatprep.subr.mxu0 0.0
        %2574 = vmatpush1.xpose.msra.mxu0 0.0
        %2575 = vmatprep.subr.mxu0 0.0
        %2576 = vmatpush1.xpose.msra.mxu0 0.0
        %2577 = vmatprep.subr.mxu0 0.0
        %2578 = vmatpush1.xpose.msra.mxu0 0.0
        %2579 = vmatprep.subr.mxu0 0.0
        %2580 = vmatpush1.xpose.msra.mxu0 0.0
        %2581 = vmatprep.subr.mxu0 0.0
        %2582 = vmatpush1.xpose.msra.mxu0 0.0
        %2583 = vmatprep.subr.mxu0 0.0
        %2584 = vmatpush1.xpose.msra.mxu0 0.0
        %2585 = vmatprep.subr.mxu0 0.0
        %2586 = vmatpush1.xpose.msra.mxu0 0.0
        %2587 = vmatprep.subr.mxu0 0.0
        %2588 = vmatpush1.xpose.msra.mxu0 0.0
        %2589 = vmatprep.subr.mxu0 0.0
        %2590 = vmatpush1.xpose.msra.mxu0 0.0
        %2591 = vmatprep.subr.mxu0 0.0
        %2592 = vmatpush1.xpose.msra.mxu0 0.0
        %2593 = vmatprep.subr.mxu0 0.0
        %2594 = vmatpush1.xpose.msra.mxu0 0.0
        %2595 = vmatprep.subr.mxu0 0.0
        %2596 = vmatpush1.xpose.msra.mxu0 0.0
        %2597 = vmatprep.subr.mxu0 0.0
        %2598 = vmatpush1.xpose.msra.mxu0 0.0
        %2599 = vmatprep.subr.mxu0 0.0
        %2600 = vmatpush1.xpose.msra.mxu0 0.0
        %2601 = vmatprep.subr.mxu0 0.0
        %2602 = vmatpush1.xpose.msra.mxu0 0.0
        %2603 = vmatprep.subr.mxu0 0.0
        %2604 = vmatpush1.xpose.msra.mxu0 0.0
        %2605 = vmatprep.subr.mxu0 0.0
        %2606 = vmatpush1.xpose.msra.mxu0 0.0
        %2607 = vmatprep.subr.mxu0 0.0
        %2608 = vmatpush1.xpose.msra.mxu0 0.0
        %2609 = vmatprep.subr.mxu0 0.0
        %2610 = vmatpush1.xpose.msra.mxu0 0.0
        %2611 = vmatprep.subr.mxu0 0.0
        %2612 = vmatpush1.xpose.msra.mxu0 0.0
        %2613 = vmatprep.mubr.f32.mxu0 0.0
        %2614 = vmatmul.mubr.f32.gmra.mrb[0].mxu0 %v2541
        %v2615 = vpop.f32.mrb[0].mxu0
        %v2616 = vadd.f32 %v542, %v2615
        %v2617 = vpop.f32.mrb[0].mxu0
        %2618 = vmatprep.mubr.f32.mxu0 0.0
        %2619 = vmatmul.mubr.f32.gmra.mrb[0].mxu0 %v2543
        %v2620 = vpop.f32.mrb[0].mxu0
        %v2621 = vadd.f32 %v543, %v2620
        %v2622 = vpop.f32.mrb[0].mxu0
        %2623 = vdwg.mxu0
        %v2624 = vsel %vm1032, %v2527, -inf
        %2625 = vmax.xlane.f32.xlu0 %v2624
        %v2626 = vpop.xlane.xlu0 %2625
        %v2627 = vsel %vm1032, %v2532, -inf
        %2628 = vmax.xlane.f32.xlu0 %v2627
        %v2629 = vpop.xlane.xlu0 %2628
        %v2630 = vsel %vm1032, %v2616, -inf
        %2631 = vmax.xlane.f32.xlu0 %v2630
        %v2632 = vpop.xlane.xlu0 %2631
        %v2633 = vsel %vm1032, %v2621, -inf
        %2634 = vmax.xlane.f32.xlu0 %v2633
        %v2635 = vpop.xlane.xlu0 %2634
        %v2636 = vsub.f32 %v2527, %v2626
        %v2637 = vsub.f32 %v2532, %v2629
        %v2638 = vsub.f32 %v2616, %v2632
        %v2639 = vsub.f32 %v2621, %v2635
        %v2640 = vmul.f32 %v2636, 1.442695
        %v2641 = vpow.pop %v2640
        %v2642 = vmul.f32 %v2637, 1.442695
        %v2643 = vpow.pop %v2642
        %v2644 = vmul.f32 %v2638, 1.442695
        %v2645 = vpow.pop %v2644
        %v2646 = vmul.f32 %v2639, 1.442695
        %v2647 = vpow.pop %v2646
        %v2648 = vsel %vm1032, %v2641, 0.0
        %2649 = vadd.xlane.f32.xlu0 %v2648
        %v2650 = vpop.xlane.xlu0 %2649
        %v2651 = vsel %vm1032, %v2643, 0.0
        %2652 = vadd.xlane.f32.xlu0 %v2651
        %v2653 = vpop.xlane.xlu0 %2652
        %v2654 = vsel %vm1032, %v2645, 0.0
        %2655 = vadd.xlane.f32.xlu0 %v2654
        %v2656 = vpop.xlane.xlu0 %2655
        %v2657 = vsel %vm1032, %v2647, 0.0
        %2658 = vadd.xlane.f32.xlu0 %v2657
        %v2659 = vpop.xlane.xlu0 %2658
        %v2660 = vrcp.pop %v2650
        %v2661 = vmul.f32 %v2641, %v2660
        %v2662 = vrcp.pop %v2653
        %v2663 = vmul.f32 %v2643, %v2662
        %v2664 = vrcp.pop %v2656
        %v2665 = vmul.f32 %v2645, %v2664
        %v2666 = vrcp.pop %v2659
        %v2667 = vmul.f32 %v2647, %v2666
        %2668 = vrot.lane.b32.xlu0 %v2442, 64
        %v2669 = vpop.permute.xlu0 %2668
        %2670 = vrot.lane.b32.xlu0 %v2443, 64
        %v2671 = vpop.permute.xlu0 %2670
        %v2675 = vsel %vm1032, %v2661, 0
        %v2678 = vsel %vm1032, %v2663, 0
        %2680 = vmatprep.subr.mxu0 0.0
        %2681 = vmatpush1.msra.mxu0 %v2669
        %2682 = vmatprep.subr.mxu0 0.0
        %2683 = vmatpush1.msra.mxu0 %v2671
        %2684 = vmatprep.subr.mxu0 0.0
        %2685 = vmatpush1.msra.mxu0 0.0
        %2686 = vmatprep.subr.mxu0 0.0
        %2687 = vmatpush1.msra.mxu0 0.0
        %2688 = vmatprep.subr.mxu0 0.0
        %2689 = vmatpush1.msra.mxu0 0.0
        %2690 = vmatprep.subr.mxu0 0.0
        %2691 = vmatpush1.msra.mxu0 0.0
        %2692 = vmatprep.subr.mxu0 0.0
        %2693 = vmatpush1.msra.mxu0 0.0
        %2694 = vmatprep.subr.mxu0 0.0
        %2695 = vmatpush1.msra.mxu0 0.0
        %2696 = vmatprep.subr.mxu0 0.0
        %2697 = vmatpush1.msra.mxu0 0.0
        %2698 = vmatprep.subr.mxu0 0.0
        %2699 = vmatpush1.msra.mxu0 0.0
        %2700 = vmatprep.subr.mxu0 0.0
        %2701 = vmatpush1.msra.mxu0 0.0
        %2702 = vmatprep.subr.mxu0 0.0
        %2703 = vmatpush1.msra.mxu0 0.0
        %2704 = vmatprep.subr.mxu0 0.0
        %2705 = vmatpush1.msra.mxu0 0.0
        %2706 = vmatprep.subr.mxu0 0.0
        %2707 = vmatpush1.msra.mxu0 0.0
        %2708 = vmatprep.subr.mxu0 0.0
        %2709 = vmatpush1.msra.mxu0 0.0
        %2710 = vmatprep.subr.mxu0 0.0
        %2711 = vmatpush1.msra.mxu0 0.0
        %2712 = vmatprep.subr.mxu0 0.0
        %2713 = vmatpush1.msra.mxu0 0.0
        %2714 = vmatprep.subr.mxu0 0.0
        %2715 = vmatpush1.msra.mxu0 0.0
        %2716 = vmatprep.subr.mxu0 0.0
        %2717 = vmatpush1.msra.mxu0 0.0
        %2718 = vmatprep.subr.mxu0 0.0
        %2719 = vmatpush1.msra.mxu0 0.0
        %2720 = vmatprep.subr.mxu0 0.0
        %2721 = vmatpush1.msra.mxu0 0.0
        %2722 = vmatprep.subr.mxu0 0.0
        %2723 = vmatpush1.msra.mxu0 0.0
        %2724 = vmatprep.subr.mxu0 0.0
        %2725 = vmatpush1.msra.mxu0 0.0
        %2726 = vmatprep.subr.mxu0 0.0
        %2727 = vmatpush1.msra.mxu0 0.0
        %2728 = vmatprep.subr.mxu0 0.0
        %2729 = vmatpush1.msra.mxu0 0.0
        %2730 = vmatprep.subr.mxu0 0.0
        %2731 = vmatpush1.msra.mxu0 0.0
        %2732 = vmatprep.subr.mxu0 0.0
        %2733 = vmatpush1.msra.mxu0 0.0
        %2734 = vmatprep.subr.mxu0 0.0
        %2735 = vmatpush1.msra.mxu0 0.0
        %2736 = vmatprep.subr.mxu0 0.0
        %2737 = vmatpush1.msra.mxu0 0.0
        %2738 = vmatprep.subr.mxu0 0.0
        %2739 = vmatpush1.msra.mxu0 0.0
        %2740 = vmatprep.subr.mxu0 0.0
        %2741 = vmatpush1.msra.mxu0 0.0
        %2742 = vmatprep.subr.mxu0 0.0
        %2743 = vmatpush1.msra.mxu0 0.0
        %2744 = vmatprep.mubr.f32.mxu0 0.0
        %2745 = vmatmul.mubr.f32.gmra.mrb[0].mxu0 %v2675
        %v2746 = vpop.f32.mrb[0].mxu0
        %v2747 = vadd.f32 0.0, %v2746
        %v2748 = vpop.f32.mrb[0].mxu0
        %2749 = vmatprep.mubr.f32.mxu0 0.0
        %2750 = vmatmul.mubr.f32.gmra.mrb[0].mxu0 %v2678
        %v2751 = vpop.f32.mrb[0].mxu0
        %v2752 = vadd.f32 0.0, %v2751
        %v2753 = vpop.f32.mrb[0].mxu0
        %2754 = vdwg.mxu0
        %2755 = vrot.lane.b32.xlu0 %v2444, 64
        %v2756 = vpop.permute.xlu0 %2755
        %2757 = vrot.lane.b32.xlu0 %v2445, 64
        %v2758 = vpop.permute.xlu0 %2757
        %v2762 = vsel %vm1032, %v2665, 0
        %v2765 = vsel %vm1032, %v2667, 0
        %2767 = vmatprep.subr.mxu0 0.0
        %2768 = vmatpush1.msra.mxu0 %v2756
        %2769 = vmatprep.subr.mxu0 0.0
        %2770 = vmatpush1.msra.mxu0 %v2758
        %2771 = vmatprep.subr.mxu0 0.0
        %2772 = vmatpush1.msra.mxu0 0.0
        %2773 = vmatprep.subr.mxu0 0.0
        %2774 = vmatpush1.msra.mxu0 0.0
        %2775 = vmatprep.subr.mxu0 0.0
        %2776 = vmatpush1.msra.mxu0 0.0
        %2777 = vmatprep.subr.mxu0 0.0
        %2778 = vmatpush1.msra.mxu0 0.0
        %2779 = vmatprep.subr.mxu0 0.0
        %2780 = vmatpush1.msra.mxu0 0.0
        %2781 = vmatprep.subr.mxu0 0.0
        %2782 = vmatpush1.msra.mxu0 0.0
        %2783 = vmatprep.subr.mxu0 0.0
        %2784 = vmatpush1.msra.mxu0 0.0
        %2785 = vmatprep.subr.mxu0 0.0
        %2786 = vmatpush1.msra.mxu0 0.0
        %2787 = vmatprep.subr.mxu0 0.0
        %2788 = vmatpush1.msra.mxu0 0.0
        %2789 = vmatprep.subr.mxu0 0.0
        %2790 = vmatpush1.msra.mxu0 0.0
        %2791 = vmatprep.subr.mxu0 0.0
        %2792 = vmatpush1.msra.mxu0 0.0
        %2793 = vmatprep.subr.mxu0 0.0
        %2794 = vmatpush1.msra.mxu0 0.0
        %2795 = vmatprep.subr.mxu0 0.0
        %2796 = vmatpush1.msra.mxu0 0.0
        %2797 = vmatprep.subr.mxu0 0.0
        %2798 = vmatpush1.msra.mxu0 0.0
        %2799 = vmatprep.subr.mxu0 0.0
        %2800 = vmatpush1.msra.mxu0 0.0
        %2801 = vmatprep.subr.mxu0 0.0
        %2802 = vmatpush1.msra.mxu0 0.0
        %2803 = vmatprep.subr.mxu0 0.0
        %2804 = vmatpush1.msra.mxu0 0.0
        %2805 = vmatprep.subr.mxu0 0.0
        %2806 = vmatpush1.msra.mxu0 0.0
        %2807 = vmatprep.subr.mxu0 0.0
        %2808 = vmatpush1.msra.mxu0 0.0
        %2809 = vmatprep.subr.mxu0 0.0
        %2810 = vmatpush1.msra.mxu0 0.0
        %2811 = vmatprep.subr.mxu0 0.0
        %2812 = vmatpush1.msra.mxu0 0.0
        %2813 = vmatprep.subr.mxu0 0.0
        %2814 = vmatpush1.msra.mxu0 0.0
        %2815 = vmatprep.subr.mxu0 0.0
        %2816 = vmatpush1.msra.mxu0 0.0
        %2817 = vmatprep.subr.mxu0 0.0
        %2818 = vmatpush1.msra.mxu0 0.0
        %2819 = vmatprep.subr.mxu0 0.0
        %2820 = vmatpush1.msra.mxu0 0.0
        %2821 = vmatprep.subr.mxu0 0.0
        %2822 = vmatpush1.msra.mxu0 0.0
        %2823 = vmatprep.subr.mxu0 0.0
        %2824 = vmatpush1.msra.mxu0 0.0
        %2825 = vmatprep.subr.mxu0 0.0
        %2826 = vmatpush1.msra.mxu0 0.0
        %2827 = vmatprep.subr.mxu0 0.0
        %2828 = vmatpush1.msra.mxu0 0.0
        %2829 = vmatprep.subr.mxu0 0.0
        %2830 = vmatpush1.msra.mxu0 0.0
        %2831 = vmatprep.mubr.f32.mxu0 0.0
        %2832 = vmatmul.mubr.f32.gmra.mrb[0].mxu0 %v2762
        %v2833 = vpop.f32.mrb[0].mxu0
        %v2834 = vadd.f32 0.0, %v2833
        %v2835 = vpop.f32.mrb[0].mxu0
        %2836 = vmatprep.mubr.f32.mxu0 0.0
        %2837 = vmatmul.mubr.f32.gmra.mrb[0].mxu0 %v2765
        %v2838 = vpop.f32.mrb[0].mxu0
        %v2839 = vadd.f32 0.0, %v2838
        %v2840 = vpop.f32.mrb[0].mxu0
        %2841 = vdwg.mxu0
        %v2842 = vmul.f32 %v2752, %v533
        %v2843 = vmul.f32 %v2839, %v538
        %v2844 = vtanh.pop %v2842
        %v2845 = vtanh.pop %v2843
        %v2846 = vadd.f32 %v2844, %v2331
        %v2847 = vadd.f32 %v2845, %v2333
        %2848 = vst.msk [vmem:[#allocation2] sm:$0xff] %vm740, %v2747
        %2849 = vst.msk [vmem:[#allocation2 + $0x10] sm:$0xff] %vm740, %v2834
        %2850 = vst.msk [vmem:[#allocation2 + $0x8] sm:$0xff] %vm740, %v2846
        %2851 = vst.msk [vmem:[#allocation2 + $0x18] sm:$0xff] %vm740, %v2847
        %v2852 = vld [vmem:[%s7 + $0x20] sm:$0xff]
        %v2853 = vld [vmem:[%s7 + $0x28] sm:$0xff]
        %v2854 = vld [vmem:[%s7 + $0x30] sm:$0xff]
        %v2855 = vld [vmem:[%s7 + $0x38] sm:$0xff]
        %v2857 = vsel %vm740, %v2846, 0
        %v2860 = vsel %vm740, %v2847, 0
        %2862 = vmatprep.subr.mxu0 0.0
        %2863 = vmatpush1.msra.mxu0 %v2852
        %2864 = vmatprep.subr.mxu0 0.0
        %2865 = vmatpush1.msra.mxu0 %v2853
        %2866 = vmatprep.subr.mxu0 0.0
        %2867 = vmatpush1.msra.mxu0 %v2854
        %2868 = vmatprep.subr.mxu0 0.0
        %2869 = vmatpush1.msra.mxu0 %v2855
        %2870 = vmatprep.subr.mxu0 0.0
        %2871 = vmatpush1.msra.mxu0 0.0
        %2872 = vmatprep.subr.mxu0 0.0
        %2873 = vmatpush1.msra.mxu0 0.0
        %2874 = vmatprep.subr.mxu0 0.0
        %2875 = vmatpush1.msra.mxu0 0.0
        %2876 = vmatprep.subr.mxu0 0.0
        %2877 = vmatpush1.msra.mxu0 0.0
        %2878 = vmatprep.subr.mxu0 0.0
        %2879 = vmatpush1.msra.mxu0 0.0
        %2880 = vmatprep.subr.mxu0 0.0
        %2881 = vmatpush1.msra.mxu0 0.0
        %2882 = vmatprep.subr.mxu0 0.0
        %2883 = vmatpush1.msra.mxu0 0.0
        %2884 = vmatprep.subr.mxu0 0.0
        %2885 = vmatpush1.msra.mxu0 0.0
        %2886 = vmatprep.subr.mxu0 0.0
        %2887 = vmatpush1.msra.mxu0 0.0
        %2888 = vmatprep.subr.mxu0 0.0
        %2889 = vmatpush1.msra.mxu0 0.0
        %2890 = vmatprep.subr.mxu0 0.0
        %2891 = vmatpush1.msra.mxu0 0.0
        %2892 = vmatprep.subr.mxu0 0.0
        %2893 = vmatpush1.msra.mxu0 0.0
        %2894 = vmatprep.subr.mxu0 0.0
        %2895 = vmatpush1.msra.mxu0 0.0
        %2896 = vmatprep.subr.mxu0 0.0
        %2897 = vmatpush1.msra.mxu0 0.0
        %2898 = vmatprep.subr.mxu0 0.0
        %2899 = vmatpush1.msra.mxu0 0.0
        %2900 = vmatprep.subr.mxu0 0.0
        %2901 = vmatpush1.msra.mxu0 0.0
        %2902 = vmatprep.subr.mxu0 0.0
        %2903 = vmatpush1.msra.mxu0 0.0
        %2904 = vmatprep.subr.mxu0 0.0
        %2905 = vmatpush1.msra.mxu0 0.0
        %2906 = vmatprep.subr.mxu0 0.0
        %2907 = vmatpush1.msra.mxu0 0.0
        %2908 = vmatprep.subr.mxu0 0.0
        %2909 = vmatpush1.msra.mxu0 0.0
        %2910 = vmatprep.subr.mxu0 0.0
        %2911 = vmatpush1.msra.mxu0 0.0
        %2912 = vmatprep.subr.mxu0 0.0
        %2913 = vmatpush1.msra.mxu0 0.0
        %2914 = vmatprep.subr.mxu0 0.0
        %2915 = vmatpush1.msra.mxu0 0.0
        %2916 = vmatprep.subr.mxu0 0.0
        %2917 = vmatpush1.msra.mxu0 0.0
        %2918 = vmatprep.subr.mxu0 0.0
        %2919 = vmatpush1.msra.mxu0 0.0
        %2920 = vmatprep.subr.mxu0 0.0
        %2921 = vmatpush1.msra.mxu0 0.0
        %2922 = vmatprep.subr.mxu0 0.0
        %2923 = vmatpush1.msra.mxu0 0.0
        %2924 = vmatprep.subr.mxu0 0.0
        %2925 = vmatpush1.msra.mxu0 0.0
        %2926 = vmatprep.mubr.f32.mxu0 0.0
        %2927 = vmatmul.mubr.f32.gmra.mrb[0].mxu0 %v2857
        %v2928 = vpop.f32.mrb[0].mxu0
        %v2929 = vadd.f32 0.0, %v2928
        %v2930 = vpop.f32.mrb[0].mxu0
        %2931 = vmatprep.mubr.f32.mxu0 0.0
        %2932 = vmatmul.mubr.f32.gmra.mrb[0].mxu0 %v2860
        %v2933 = vpop.f32.mrb[0].mxu0
        %v2934 = vadd.f32 0.0, %v2933
        %v2935 = vpop.f32.mrb[0].mxu0
        %2936 = vdwg.mxu0
        %v2938 = vsel %vm740, %v1787, 0
        %v2941 = vsel %vm740, %v1788, 0
        %2943 = vmatprep.subr.mxu0 0.0
        %2944 = vmatpush1.msra.mxu0 %v1793
        %2945 = vmatprep.subr.mxu0 0.0
        %2946 = vmatpush1.msra.mxu0 %v1794
        %2947 = vmatprep.subr.mxu0 0.0
        %2948 = vmatpush1.msra.mxu0 %v1795
        %2949 = vmatprep.subr.mxu0 0.0
        %2950 = vmatpush1.msra.mxu0 %v1796
        %2951 = vmatprep.subr.mxu0 0.0
        %2952 = vmatpush1.msra.mxu0 0.0
        %2953 = vmatprep.subr.mxu0 0.0
        %2954 = vmatpush1.msra.mxu0 0.0
        %2955 = vmatprep.subr.mxu0 0.0
        %2956 = vmatpush1.msra.mxu0 0.0
        %2957 = vmatprep.subr.mxu0 0.0
        %2958 = vmatpush1.msra.mxu0 0.0
        %2959 = vmatprep.subr.mxu0 0.0
        %2960 = vmatpush1.msra.mxu0 0.0
        %2961 = vmatprep.subr.mxu0 0.0
        %2962 = vmatpush1.msra.mxu0 0.0
        %2963 = vmatprep.subr.mxu0 0.0
        %2964 = vmatpush1.msra.mxu0 0.0
        %2965 = vmatprep.subr.mxu0 0.0
        %2966 = vmatpush1.msra.mxu0 0.0
        %2967 = vmatprep.subr.mxu0 0.0
        %2968 = vmatpush1.msra.mxu0 0.0
        %2969 = vmatprep.subr.mxu0 0.0
        %2970 = vmatpush1.msra.mxu0 0.0
        %2971 = vmatprep.subr.mxu0 0.0
        %2972 = vmatpush1.msra.mxu0 0.0
        %2973 = vmatprep.subr.mxu0 0.0
        %2974 = vmatpush1.msra.mxu0 0.0
        %2975 = vmatprep.subr.mxu0 0.0
        %2976 = vmatpush1.msra.mxu0 0.0
        %2977 = vmatprep.subr.mxu0 0.0
        %2978 = vmatpush1.msra.mxu0 0.0
        %2979 = vmatprep.subr.mxu0 0.0
        %2980 = vmatpush1.msra.mxu0 0.0
        %2981 = vmatprep.subr.mxu0 0.0
        %2982 = vmatpush1.msra.mxu0 0.0
        %2983 = vmatprep.subr.mxu0 0.0
        %2984 = vmatpush1.msra.mxu0 0.0
        %2985 = vmatprep.subr.mxu0 0.0
        %2986 = vmatpush1.msra.mxu0 0.0
        %2987 = vmatprep.subr.mxu0 0.0
        %2988 = vmatpush1.msra.mxu0 0.0
        %2989 = vmatprep.subr.mxu0 0.0
        %2990 = vmatpush1.msra.mxu0 0.0
        %2991 = vmatprep.subr.mxu0 0.0
        %2992 = vmatpush1.msra.mxu0 0.0
        %2993 = vmatprep.subr.mxu0 0.0
        %2994 = vmatpush1.msra.mxu0 0.0
        %2995 = vmatprep.subr.mxu0 0.0
        %2996 = vmatpush1.msra.mxu0 0.0
        %2997 = vmatprep.subr.mxu0 0.0
        %2998 = vmatpush1.msra.mxu0 0.0
        %2999 = vmatprep.subr.mxu0 0.0
        %3000 = vmatpush1.msra.mxu0 0.0
        %3001 = vmatprep.subr.mxu0 0.0
        %3002 = vmatpush1.msra.mxu0 0.0
        %3003 = vmatprep.subr.mxu0 0.0
        %3004 = vmatpush1.msra.mxu0 0.0
        %3005 = vmatprep.subr.mxu0 0.0
        %3006 = vmatpush1.msra.mxu0 0.0
        %3007 = vmatprep.mubr.f32.mxu0 0.0
        %3008 = vmatmul.mubr.f32.gmra.mrb[0].mxu0 %v2938
        %v3009 = vpop.f32.mrb[0].mxu0
        %v3010 = vadd.f32 %v2929, %v3009
        %v3011 = vpop.f32.mrb[0].mxu0
        %3012 = vmatprep.mubr.f32.mxu0 0.0
        %3013 = vmatmul.mubr.f32.gmra.mrb[0].mxu0 %v2941
        %v3014 = vpop.f32.mrb[0].mxu0
        %v3015 = vadd.f32 %v2934, %v3014
        %v3016 = vpop.f32.mrb[0].mxu0
        %3017 = vdwg.mxu0
        %v3018 = vld [vmem:[%s8] sm:$0x1]
        %v3020 = vlaneseq
        %v3021 = vshrl.u32 %v3020, 7
        %v3022 = vsub.s32 0, %v3021
        %v3023 = vrot.slane %v3018, %v3022
        %v3025 = vadd.f32 %v3010, %v3023
        %v3026 = vadd.f32 %v3015, %v3023
        %v3027 = vxor.u32 %v3025, 2147483648
        %v3028 = vxor.u32 %v3026, 2147483648
        %v3029 = vmul.f32 %v3027, 1.442695
        %v3030 = vpow.pop %v3029
        %v3031 = vmul.f32 %v3028, 1.442695
        %v3032 = vpow.pop %v3031
        %v3033 = vadd.f32 %v3030, 1.0
        %v3034 = vadd.f32 %v3032, 1.0
        %v3035 = vrcp.pop %v3033
        %v3036 = vmul.f32 1.0, %v3035
        %v3037 = vrcp.pop %v3034
        %v3038 = vmul.f32 1.0, %v3037
        %v3039 = vmul.f32 %v3025, %v3036
        %v3040 = vmul.f32 %v3026, %v3038
        %v3041 = vld [vmem:[%s9] sm:$0xff]
        %v3042 = vld [vmem:[%s9 + $0x8] sm:$0xff]
        %v3043 = vld [vmem:[%s9 + $0x10] sm:$0xff]
        %v3044 = vld [vmem:[%s9 + $0x18] sm:$0xff]
        %v3045 = vld [vmem:[%s9 + $0x20] sm:$0xff]
        %v3046 = vld [vmem:[%s9 + $0x28] sm:$0xff]
        %v3047 = vld [vmem:[%s9 + $0x30] sm:$0xff]
        %v3048 = vld [vmem:[%s9 + $0x38] sm:$0xff]
        %v3049 = vld [vmem:[#allocation3] sm:$0x1]
        %v3051 = vlaneseq
        %v3052 = vshrl.u32 %v3051, 7
        %v3053 = vsub.s32 0, %v3052
        %v3054 = vrot.slane %v3049, %v3053
        %v3057 = vsel %vm1915, %v3039, 0
        %v3060 = vsel %vm1915, %v3040, 0
        %3062 = vmatprep.subr.mxu0 0.0
        %3063 = vmatpush1.msra.mxu0 %v3041
        %3064 = vmatprep.subr.mxu0 0.0
        %3065 = vmatpush1.msra.mxu0 %v3042
        %3066 = vmatprep.subr.mxu0 0.0
        %3067 = vmatpush1.msra.mxu0 %v3043
        %3068 = vmatprep.subr.mxu0 0.0
        %3069 = vmatpush1.msra.mxu0 %v3044
        %3070 = vmatprep.subr.mxu0 0.0
        %3071 = vmatpush1.msra.mxu0 %v3045
        %3072 = vmatprep.subr.mxu0 0.0
        %3073 = vmatpush1.msra.mxu0 %v3046
        %3074 = vmatprep.subr.mxu0 0.0
        %3075 = vmatpush1.msra.mxu0 %v3047
        %3076 = vmatprep.subr.mxu0 0.0
        %3077 = vmatpush1.msra.mxu0 %v3048
        %3078 = vmatprep.subr.mxu0 0.0
        %3079 = vmatpush1.msra.mxu0 0.0
        %3080 = vmatprep.subr.mxu0 0.0
        %3081 = vmatpush1.msra.mxu0 0.0
        %3082 = vmatprep.subr.mxu0 0.0
        %3083 = vmatpush1.msra.mxu0 0.0
        %3084 = vmatprep.subr.mxu0 0.0
        %3085 = vmatpush1.msra.mxu0 0.0
        %3086 = vmatprep.subr.mxu0 0.0
        %3087 = vmatpush1.msra.mxu0 0.0
        %3088 = vmatprep.subr.mxu0 0.0
        %3089 = vmatpush1.msra.mxu0 0.0
        %3090 = vmatprep.subr.mxu0 0.0
        %3091 = vmatpush1.msra.mxu0 0.0
        %3092 = vmatprep.subr.mxu0 0.0
        %3093 = vmatpush1.msra.mxu0 0.0
        %3094 = vmatprep.subr.mxu0 0.0
        %3095 = vmatpush1.msra.mxu0 0.0
        %3096 = vmatprep.subr.mxu0 0.0
        %3097 = vmatpush1.msra.mxu0 0.0
        %3098 = vmatprep.subr.mxu0 0.0
        %3099 = vmatpush1.msra.mxu0 0.0
        %3100 = vmatprep.subr.mxu0 0.0
        %3101 = vmatpush1.msra.mxu0 0.0
        %3102 = vmatprep.subr.mxu0 0.0
        %3103 = vmatpush1.msra.mxu0 0.0
        %3104 = vmatprep.subr.mxu0 0.0
        %3105 = vmatpush1.msra.mxu0 0.0
        %3106 = vmatprep.subr.mxu0 0.0
        %3107 = vmatpush1.msra.mxu0 0.0
        %3108 = vmatprep.subr.mxu0 0.0
        %3109 = vmatpush1.msra.mxu0 0.0
        %3110 = vmatprep.subr.mxu0 0.0
        %3111 = vmatpush1.msra.mxu0 0.0
        %3112 = vmatprep.subr.mxu0 0.0
        %3113 = vmatpush1.msra.mxu0 0.0
        %3114 = vmatprep.subr.mxu0 0.0
        %3115 = vmatpush1.msra.mxu0 0.0
        %3116 = vmatprep.subr.mxu0 0.0
        %3117 = vmatpush1.msra.mxu0 0.0
        %3118 = vmatprep.subr.mxu0 0.0
        %3119 = vmatpush1.msra.mxu0 0.0
        %3120 = vmatprep.subr.mxu0 0.0
        %3121 = vmatpush1.msra.mxu0 0.0
        %3122 = vmatprep.subr.mxu0 0.0
        %3123 = vmatpush1.msra.mxu0 0.0
        %3124 = vmatprep.subr.mxu0 0.0
        %3125 = vmatpush1.msra.mxu0 0.0
        %3126 = vmatprep.mubr.f32.mxu0 0.0
        %3127 = vmatmul.mubr.f32.gmra.mrb[0].mxu0 %v3057
        %v3128 = vpop.f32.mrb[0].mxu0
        %v3129 = vadd.f32 %v3054, %v3128
        %v3130 = vpop.f32.mrb[0].mxu0
        %3131 = vmatprep.mubr.f32.mxu0 0.0
        %3132 = vmatmul.mubr.f32.gmra.mrb[0].mxu0 %v3060
        %v3133 = vpop.f32.mrb[0].mxu0
        %v3134 = vadd.f32 %v3054, %v3133
        %v3135 = vpop.f32.mrb[0].mxu0
        %3136 = vdwg.mxu0
        %vm3137 = vcmask 7168
        %3138 = vst.msk [vmem:[%s526] sm:$0xff] %vm3137, %v3129
        %3139 = vst.msk [vmem:[%s526 + $0x8] sm:$0xff] %vm3137, %v3134
        %s3140 = smul.u32 2, %s31
        %p3141 = scmp.lt.s32.totalorder %s3140, 3
        %s3142 = scalar_select %p3141, %s3140, 3
        %s3143 = smul.addr %s3142, 8
        %s3144 = scalar_lea.vmem %s11, %s3143
        // Predicated region
        $region81: #{tpu_custom_call.1} parent=63 // pred_check
          %p3145 = pneg %p300
        $region82: #{tpu_custom_call.1} parent=63 // pred_check_branch
          %3147 = sbr.rel (%p3145) target = $region84
        $region83: #{tpu_custom_call.1} parent=63 // pred_region
          %s3148 = smul.u32 2, %s31
        $region84: #{tpu_custom_call.1} parent=63 // pred_fallthru
          _
      $region64: #{tpu_custom_call.1} parent=5 // pred_fallthru
        _
      %p3149 = scmp.le.s32.totalorder 2, %s26
      // Predicated region
      $region85: #{tpu_custom_call.1} parent=5 // pred_check
        %p3150 = pneg %p3149
      $region86: #{tpu_custom_call.1} parent=5 // pred_check_branch
        %3152 = sbr.rel (%p3150) target = $region88
      $region87: #{tpu_custom_call.1} parent=5 // pred_region
        %s3153 = ssub.s32 %s26, 2
        // Predicated region
        $region89: #{tpu_custom_call.1} parent=87 // pred_check
          %p3154 = pneg %p306
        $region90: #{tpu_custom_call.1} parent=87 // pred_check_branch
          %3156 = sbr.rel (%p3154) target = $region92
        $region91: #{tpu_custom_call.1} parent=87 // pred_region
          %s3157 = smul.u32 2, %s32
          %p3158 = scmp.lt.s32.totalorder %s3157, 3
          %s3159 = scalar_select %p3158, %s3157, 3
          %s3160 = smul.addr %s3159, 8
          %s3161 = scalar_lea.vmem %s11, %s3160
        $region92: #{tpu_custom_call.1} parent=87 // pred_fallthru
          _
      $region88: #{tpu_custom_call.1} parent=5 // pred_fallthru
        _
    $region6: #{tpu_custom_call.1} parent=1 // loop_footer
      %s30 = sadd.s32 1, %s26
    $region7: #{tpu_custom_call.1} parent=1 // loop_footer_branch
      %25 = sbr.rel target = $region3
    $region8: #{tpu_custom_call.1} parent=1 // loop_exit
      _
    %3162 = vsyncpa [#allocation5], 1
    %s3163 = scalar_lea.sflag [#allocation5], 1
    %3164 = vsyncpa %s3163, 1
    %3165 = vsyncpa [#allocation7], 1
    %s3166 = scalar_lea.sflag [#allocation7], 1
    %3167 = vsyncpa %s3166, 1
    %3168 = vsyncpa [#allocation10], 1

</llo_original>
